<compile_context>
chip_gen: v7x
topology: tpu7x:2x2x1
jax: 0.10.0
libtpu: 0.0.40
codegen_flags: <defaults>
</compile_context>

<pallas_src>
import functools

import jax
import jax.numpy as jnp
from jax import lax
from jax.experimental import pallas as pl
from jax.experimental.pallas import tpu as pltpu


def mha_kernel(x_ref, y_ref, l1_ref, l2_ref, t1_ref, t2_ref, bl_ref, ob_ref,
               o_ref, r_cache, t_cache, *, num_heads, head_dim, fuse_out_proj):
    # One grid step == one (batch, N-tile). Softmax axis (M) is kept whole per step.
    cdt = x_ref.dtype  # native compute dtype for MXU operands (bf16 in production)

    # --- x-side projections: compute once per batch (first N-tile) and cache in VMEM ---
    @pl.when(pl.program_id(1) == 0)
    def _():
        x = x_ref[0]                                                           # [M, P]
        # scale_dot_att and bias_lambda are already folded into l1/bl host-side.
        r_all = jnp.dot(x, l1_ref[...], preferred_element_type=jnp.float32) + bl_ref[...]
        t_all = jnp.dot(x, t1_ref[...], preferred_element_type=jnp.float32)
        r_cache[...] = r_all.astype(cdt)
        t_cache[...] = t_all.astype(cdt)

    y = y_ref[0]                                                               # [Nt, P]
    # s_all[n, k*D+d] = sum_q y[n,q] lambda2[k,q,d]   (cast back to native dtype for MXU)
    s_all = jnp.dot(y, l2_ref[...], preferred_element_type=jnp.float32).astype(cdt)  # [Nt, KD]
    r_all = r_cache[...]                                                       # [M, KD]
    t_all = t_cache[...]                                                       # [M, KD]

    nt, p = y.shape
    acc = jnp.zeros((nt, p), jnp.float32)
    r2_parts = []
    for k in range(num_heads):
        lo = k * head_dim
        hi = lo + head_dim
        r_k = r_all[:, lo:hi]                      # [M, D]  native dtype
        s_k = s_all[:, lo:hi]                      # [Nt, D]
        t_k = t_all[:, lo:hi]                      # [M, D]

        # logits[m, n] = sum_d r_k[m, d] * s_k[n, d]   (transpose-free, f32 accumulation)
        logits = lax.dot_general(r_k, s_k, (((1,), (1,)), ((), ())),
                                 preferred_element_type=jnp.float32)           # [M, Nt]

        # softmax over the M axis (torch dim=-2 of [K,B,M,N]); math in f32.
        logits = logits - jnp.max(logits, axis=0, keepdims=True)
        e = jnp.exp(logits)
        att = e * pl.reciprocal(jnp.sum(e, axis=0, keepdims=True), approx=True)
        att = att.astype(cdt)                      # flash-style cast before the next matmul

        # r2_k[n, d] = sum_m att[m, n] * t_k[m, d]
        r2_k = lax.dot_general(att, t_k, (((0,), (0,)), ((), ())),
                               preferred_element_type=jnp.float32)             # [Nt, D]

        if fuse_out_proj:
            r2_parts.append(r2_k.astype(cdt))
        else:
            # out[n, q] += sum_d r2_k[n, d] * theta2[k, q, d]   (t2 pre-flattened to [KD, P])
            acc = acc + jnp.dot(r2_k.astype(cdt), t2_ref[lo:hi, :],
                                preferred_element_type=jnp.float32)            # [Nt, P]

    if fuse_out_proj:
        # Single full-depth [Nt, KD] @ [KD, P] contraction (only when D % 128 == 0 so the
        # lane concatenation is alignment-clean).
        r2_cat = jnp.concatenate(r2_parts, axis=1)                             # [Nt, KD]
        acc = jnp.dot(r2_cat, t2_ref[...], preferred_element_type=jnp.float32)

    # bias_theta folded through theta2 into a single [1, P] bias, added once.
    acc = acc + ob_ref[...]
    o_ref[0] = acc.astype(o_ref.dtype)             # single lane-dense store


def _pick_n_block(n, target):
    """Largest divisor of n that is <= target and a multiple of 8; else full n."""
    if n <= target:
        return n
    for nb in range(target, 7, -1):
        if n % nb == 0 and nb % 8 == 0:
            return nb
    return n


def multi_head_attention(x, y, lambda1, lambda2, theta1, theta2,
                         bias_lambda, bias_theta, *,
                         scale_dot_att=False, n_block_target=256):
    B, M, P = x.shape
    _, N, _ = y.shape
    K, _, D = lambda1.shape
    KD = K * D

    # ---- host-side weight prep (one-time layout plumbing, not per-step compute) ----
    # l[k, p, d] -> L[p, k*D + d]
    L1 = jnp.transpose(lambda1, (1, 0, 2)).reshape(P, KD)
    L2 = jnp.transpose(lambda2, (1, 0, 2)).reshape(P, KD)
    T1 = jnp.transpose(theta1, (1, 0, 2)).reshape(P, KD)
    # theta2[k, q, d] -> T2F[k*D + d, q]   (kernel never transposes it)
    T2F = jnp.transpose(theta2, (0, 2, 1)).reshape(KD, P)
    BL = bias_lambda.reshape(1, KD).astype(jnp.float32)
    # bias_theta is linear through the theta2 projection -> one [1, P] output bias.
    OB = jnp.einsum('kd,kqd->q', bias_theta.astype(jnp.float32),
                    theta2.astype(jnp.float32)).reshape(1, P)
    if scale_dot_att:
        s = float(D) ** -0.5
        L1 = L1 * s
        BL = BL * s

    n_block = _pick_n_block(N, n_block_target)
    n_tiles = N // n_block

    fuse_out_proj = (D % 128 == 0)
    kernel = functools.partial(mha_kernel, num_heads=K, head_dim=D,
                               fuse_out_proj=fuse_out_proj)

    in_it = jnp.dtype(x.dtype).itemsize
    w_it = jnp.dtype(lambda1.dtype).itemsize
    flops = int(B * (4 * M * P * KD + 2 * N * P * KD + 4 * M * N * KD + 2 * N * KD * P))
    cost = pl.CostEstimate(
        flops=flops,
        transcendentals=int(B * K * M * N),
        bytes_accessed=int((x.size + y.size + B * N * P) * in_it
                           + (4 * P * KD + KD + P) * w_it),
    )

    def build(buffered):
        buffered = buffered and hasattr(pl, "Buffered")

        def const_spec(shape):
            idx = lambda b, n: (0, 0)
            if buffered:
                try:
                    # Constant-index weights: no point double-buffering them.
                    return pl.BlockSpec(shape, idx, pipeline_mode=pl.Buffered(1))
                except TypeError:
                    pass
            return pl.BlockSpec(shape, idx)

        weight_bufs = 1 if buffered else 2
        footprint = (
            2 * M * P * in_it                      # x block (double-buffered)
            + 4 * n_block * P * in_it              # y block + out block
            + weight_bufs * (4 * P * KD * w_it + (KD + P) * 4)
            + 2 * M * KD * in_it                   # r/t caches (scratch)
            + 4 * (M * KD + n_block * KD + 2 * M * n_block + 2 * n_block * P)  # f32 temps
        )
        vmem_limit = int(min(max(footprint * 3 // 2 + (2 << 20), 16 << 20), 64 << 20))

        return pl.pallas_call(
            kernel,
            out_shape=jax.ShapeDtypeStruct((B, N, P), x.dtype),
            grid_spec=pltpu.PrefetchScalarGridSpec(
                num_scalar_prefetch=0,
                grid=(B, n_tiles),
                in_specs=[
                    pl.BlockSpec((1, M, P), lambda b, n: (b, 0, 0)),        # x (full M)
                    pl.BlockSpec((1, n_block, P), lambda b, n: (b, n, 0)),  # y (N tile)
                    const_spec((P, KD)),                                    # fused lambda1
                    const_spec((P, KD)),                                    # fused lambda2
                    const_spec((P, KD)),                                    # fused theta1
                    const_spec((KD, P)),                                    # fused theta2
                    const_spec((1, KD)),                                    # bias_lambda
                    const_spec((1, P)),                                     # folded out bias
                ],
                out_specs=pl.BlockSpec((1, n_block, P), lambda b, n: (b, n, 0)),
                scratch_shapes=[pltpu.VMEM((M, KD), x.dtype),   # r_all cache (per batch)
                                pltpu.VMEM((M, KD), x.dtype)],  # t_all cache (per batch)
            ),
            compiler_params=pltpu.CompilerParams(
                # N-tiles must run sequentially per batch for the x-projection cache;
                # the batch axis stays parallel for megacore / v7x 2-TC sharding.
                dimension_semantics=("parallel", "arbitrary"),
                vmem_limit_bytes=vmem_limit,
            ),
            cost_estimate=cost,
        )

    args = (x, y, L1, L2, T1, T2F, BL, OB)
    try:
        return build(True)(*args)
    except Exception:
        # Fallback if this jax build rejects pipeline_mode=pl.Buffered(1) at lowering.
        return build(False)(*args)


def reference(x, y, l1, l2, t1, t2, bl, bt, *, scale_dot_att=False):
    """Plain-JAX mirror of the PyTorch forward (mask=None, softmax)."""
    r = jnp.einsum('bmp,kpd->bmkd', x, l1) + bl
    dot_att = jnp.einsum('bmkd,kqd,bnq->kbmn', r, l2, y)
    if scale_dot_att:
        dot_att = dot_att * (l1.shape[-1] ** -0.5)
    att = jax.nn.softmax(dot_att, axis=-2)
    r2 = jnp.einsum('kbmn,bmp,kpd->bnkd', att, x, t1) + bt
    return jnp.einsum('bnkd,kqd->bnq', r2, t2)


def xavier_uniform(key, shape):
    # PyTorch xavier_uniform_ on [K, P, D]: fan_in = P*D, fan_out = K*D
    K, P, D = shape
    bound = (6.0 / (P * D + K * D)) ** 0.5
    return jax.random.uniform(key, shape, jnp.float32, minval=-bound, maxval=bound)


if __name__ == "__main__":
    B, M, N = 2, 8, 8
    dim, num_heads = 32, 4
    head_dim = dim // num_heads

    key = jax.random.PRNGKey(0)
    kx, ky, k1, k2, k3, k4, k5, k6 = jax.random.split(key, 8)

    x = jax.random.normal(kx, (B, M, dim), jnp.float32)
    y = jax.random.normal(ky, (B, N, dim), jnp.float32)

    lambda1 = xavier_uniform(k1, (num_heads, dim, head_dim))
    lambda2 = xavier_uniform(k2, (num_heads, dim, head_dim))
    theta1 = xavier_uniform(k3, (num_heads, dim, head_dim))
    theta2 = xavier_uniform(k4, (num_heads, dim, head_dim))

    # Case 1: zero biases (matches _reset_params), no logit scaling.
    bl0 = jnp.zeros((num_heads, head_dim), jnp.float32)
    bt0 = jnp.zeros((num_heads, head_dim), jnp.float32)
    out1 = multi_head_attention(x, y, lambda1, lambda2, theta1, theta2,
                                bl0, bt0, scale_dot_att=False)
    ref1 = reference(x, y, lambda1, lambda2, theta1, theta2,
                     bl0, bt0, scale_dot_att=False)

    # Case 2: non-zero biases and scale_dot_att=True (exercises bias folding + scaling).
    blr = 0.1 * jax.random.normal(k5, (num_heads, head_dim), jnp.float32)
    btr = 0.1 * jax.random.normal(k6, (num_heads, head_dim), jnp.float32)
    out2 = multi_head_attention(x, y, lambda1, lambda2, theta1, theta2,
                                blr, btr, scale_dot_att=True)
    ref2 = reference(x, y, lambda1, lambda2, theta1, theta2,
                     blr, btr, scale_dot_att=True)

    out1, out2 = jax.block_until_ready((out1, out2))

    assert out1.shape == (B, N, dim), out1.shape
    assert out2.shape == (B, N, dim), out2.shape
    assert jnp.allclose(out1, ref1, rtol=2e-2, atol=2e-2), \
        f"case1 max abs err = {jnp.max(jnp.abs(out1 - ref1))}"
    assert jnp.allclose(out2, ref2, rtol=2e-2, atol=2e-2), \
        f"case2 max abs err = {jnp.max(jnp.abs(out2 - ref2))}"

    print("KERNEL_OK")
</pallas_src>

<mosaic_0001>
module attributes {stable_mosaic.version = 11 : i64} {
  func.func @mha_kernel(%arg0: i32, %arg1: i32, %arg2: memref<1x8x32xf32, #tpu.memory_space<vmem>>, %arg3: memref<1x8x32xf32, #tpu.memory_space<vmem>>, %arg4: memref<32x32xf32, #tpu.memory_space<vmem>>, %arg5: memref<32x32xf32, #tpu.memory_space<vmem>>, %arg6: memref<32x32xf32, #tpu.memory_space<vmem>>, %arg7: memref<32x32xf32, #tpu.memory_space<vmem>>, %arg8: memref<1x32xf32, #tpu.memory_space<vmem>>, %arg9: memref<1x32xf32, #tpu.memory_space<vmem>>, %arg10: memref<1x8x32xf32, #tpu.memory_space<vmem>>, %arg11: memref<8x32xf32, #tpu.memory_space<vmem>>, %arg12: memref<8x32xf32, #tpu.memory_space<vmem>>) attributes {dimension_semantics = [#tpu.dimension_semantics<parallel>, #tpu.dimension_semantics<arbitrary>], iteration_bounds = array<i64: 2, 1>, scalar_prefetch = 0 : i64, scratch_operands = 2 : i64, tpu.core_type = #tpu.core_type<tc>, window_params = [{transform_indices = @transform_0, window_bounds = array<i64: 1, 8, 32>}, {transform_indices = @transform_1, window_bounds = array<i64: 1, 8, 32>}, {pipeline_mode = #tpu.pipeline_mode<synchronous>, transform_indices = @transform_2, window_bounds = array<i64: 32, 32>}, {pipeline_mode = #tpu.pipeline_mode<synchronous>, transform_indices = @transform_3, window_bounds = array<i64: 32, 32>}, {pipeline_mode = #tpu.pipeline_mode<synchronous>, transform_indices = @transform_4, window_bounds = array<i64: 32, 32>}, {pipeline_mode = #tpu.pipeline_mode<synchronous>, transform_indices = @transform_5, window_bounds = array<i64: 32, 32>}, {pipeline_mode = #tpu.pipeline_mode<synchronous>, transform_indices = @transform_6, window_bounds = array<i64: 1, 32>}, {pipeline_mode = #tpu.pipeline_mode<synchronous>, transform_indices = @transform_7, window_bounds = array<i64: 1, 32>}, {transform_indices = @transform_8, window_bounds = array<i64: 1, 8, 32>}]} {
    %c0_i32 = arith.constant 0 : i32
    %0 = arith.cmpi eq, %arg1, %c0_i32 : i32
    %1 = arith.extui %0 : i1 to i32
    %c0_i32_0 = arith.constant 0 : i32
    %2 = arith.cmpi ne, %1, %c0_i32_0 : i32
    scf.if %2 {
      %c0_40 = arith.constant 0 : index
      %c0_41 = arith.constant 0 : index
      %c0_42 = arith.constant 0 : index
      %88 = vector.load %arg2[%c0_40, %c0_41, %c0_42] : memref<1x8x32xf32, #tpu.memory_space<vmem>>, vector<1x8x32xf32>
      %89 = vector.shape_cast %88 : vector<1x8x32xf32> to vector<8x32xf32>
      %c0_43 = arith.constant 0 : index
      %c0_44 = arith.constant 0 : index
      %90 = vector.load %arg4[%c0_43, %c0_44] : memref<32x32xf32, #tpu.memory_space<vmem>>, vector<32x32xf32>
      %cst_45 = arith.constant dense<0.000000e+00> : vector<8x32xf32>
      %91 = tpu.matmul %89, %90, %cst_45 {dimension_numbers = #tpu.dot_dimension_numbers<[1], [0], [0], [1], [0, 0, 1, 1], [], []>} : vector<8x32xf32>, vector<32x32xf32>, vector<8x32xf32> -> vector<8x32xf32>
      %c0_46 = arith.constant 0 : index
      %c0_47 = arith.constant 0 : index
      %92 = vector.load %arg8[%c0_46, %c0_47] : memref<1x32xf32, #tpu.memory_space<vmem>>, vector<1x32xf32>
      %93 = vector.broadcast %92 : vector<1x32xf32> to vector<8x32xf32>
      %94 = arith.addf %91, %93 : vector<8x32xf32>
      %c0_48 = arith.constant 0 : index
      %c0_49 = arith.constant 0 : index
      %95 = vector.load %arg6[%c0_48, %c0_49] : memref<32x32xf32, #tpu.memory_space<vmem>>, vector<32x32xf32>
      %cst_50 = arith.constant dense<0.000000e+00> : vector<8x32xf32>
      %96 = tpu.matmul %89, %95, %cst_50 {dimension_numbers = #tpu.dot_dimension_numbers<[1], [0], [0], [1], [0, 0, 1, 1], [], []>} : vector<8x32xf32>, vector<32x32xf32>, vector<8x32xf32> -> vector<8x32xf32>
      %c0_51 = arith.constant 0 : index
      %c0_52 = arith.constant 0 : index
      %97 = vector.load %arg11[%c0_51, %c0_52] : memref<8x32xf32, #tpu.memory_space<vmem>>, vector<8x32xf32>
      tpu.vector_store %arg11[%c0_51, %c0_52], %94 {strides = array<i32>} : memref<8x32xf32, #tpu.memory_space<vmem>>, vector<8x32xf32>,
      %c0_53 = arith.constant 0 : index
      %c0_54 = arith.constant 0 : index
      %98 = vector.load %arg12[%c0_53, %c0_54] : memref<8x32xf32, #tpu.memory_space<vmem>>, vector<8x32xf32>
      tpu.vector_store %arg12[%c0_53, %c0_54], %96 {strides = array<i32>} : memref<8x32xf32, #tpu.memory_space<vmem>>, vector<8x32xf32>,
    } else {
    }
    %c0 = arith.constant 0 : index
    %c0_1 = arith.constant 0 : index
    %c0_2 = arith.constant 0 : index
    %3 = vector.load %arg3[%c0, %c0_1, %c0_2] : memref<1x8x32xf32, #tpu.memory_space<vmem>>, vector<1x8x32xf32>
    %4 = vector.shape_cast %3 : vector<1x8x32xf32> to vector<8x32xf32>
    %c0_3 = arith.constant 0 : index
    %c0_4 = arith.constant 0 : index
    %5 = vector.load %arg5[%c0_3, %c0_4] : memref<32x32xf32, #tpu.memory_space<vmem>>, vector<32x32xf32>
    %cst = arith.constant dense<0.000000e+00> : vector<8x32xf32>
    %6 = tpu.matmul %4, %5, %cst {dimension_numbers = #tpu.dot_dimension_numbers<[1], [0], [0], [1], [0, 0, 1, 1], [], []>} : vector<8x32xf32>, vector<32x32xf32>, vector<8x32xf32> -> vector<8x32xf32>
    %c0_5 = arith.constant 0 : index
    %c0_6 = arith.constant 0 : index
    %7 = vector.load %arg11[%c0_5, %c0_6] : memref<8x32xf32, #tpu.memory_space<vmem>>, vector<8x32xf32>
    %c0_7 = arith.constant 0 : index
    %c0_8 = arith.constant 0 : index
    %8 = vector.load %arg12[%c0_7, %c0_8] : memref<8x32xf32, #tpu.memory_space<vmem>>, vector<8x32xf32>
    %cst_9 = arith.constant 0.000000e+00 : f32
    %9 = vector.broadcast %cst_9 : f32 to vector<8x32xf32>
    %10 = vector.extract_strided_slice %7 {offsets = [0, 0], sizes = [8, 8], strides = [1, 1]} : vector<8x32xf32> to vector<8x8xf32>
    %11 = vector.extract_strided_slice %6 {offsets = [0, 0], sizes = [8, 8], strides = [1, 1]} : vector<8x32xf32> to vector<8x8xf32>
    %12 = vector.extract_strided_slice %8 {offsets = [0, 0], sizes = [8, 8], strides = [1, 1]} : vector<8x32xf32> to vector<8x8xf32>
    %cst_10 = arith.constant dense<0.000000e+00> : vector<8x8xf32>
    %13 = tpu.matmul %10, %11, %cst_10 {dimension_numbers = #tpu.dot_dimension_numbers<[1], [1], [0], [0], [0, 0, 1, 0], [], []>} : vector<8x8xf32>, vector<8x8xf32>, vector<8x8xf32> -> vector<8x8xf32>
    %cst_11 = arith.constant dense<0xFF800000> : vector<8xf32>
    %14 = vector.multi_reduction <maximumf>, %13, %cst_11 [0] : vector<8x8xf32> to vector<8xf32>
    %15 = vector.shape_cast %14 : vector<8xf32> to vector<1x8xf32>
    %16 = vector.broadcast %15 : vector<1x8xf32> to vector<8x8xf32>
    %17 = arith.subf %13, %16 : vector<8x8xf32>
    %18 = math.exp %17 : vector<8x8xf32>
    %cst_12 = arith.constant dense<0.000000e+00> : vector<8xf32>
    %19 = vector.multi_reduction <add>, %18, %cst_12 [0] : vector<8x8xf32> to vector<8xf32>
    %20 = vector.shape_cast %19 : vector<8xf32> to vector<1x8xf32>
    %21 = tpu.reciprocal %20 {approx = true} : vector<1x8xf32> -> vector<1x8xf32>
    %22 = vector.broadcast %21 : vector<1x8xf32> to vector<8x8xf32>
    %23 = arith.mulf %18, %22 : vector<8x8xf32>
    %cst_13 = arith.constant dense<0.000000e+00> : vector<8x8xf32>
    %24 = tpu.matmul %23, %12, %cst_13 {dimension_numbers = #tpu.dot_dimension_numbers<[0], [0], [1], [1], [0, 1, 1, 1], [], []>} : vector<8x8xf32>, vector<8x8xf32>, vector<8x8xf32> -> vector<8x8xf32>
    %c0_14 = arith.constant 0 : index
    %c0_15 = arith.constant 0 : index
    %25 = vector.load %arg7[%c0_14, %c0_15] : memref<32x32xf32, #tpu.memory_space<vmem>>, vector<8x32xf32>
    %cst_16 = arith.constant dense<0.000000e+00> : vector<8x32xf32>
    %26 = tpu.matmul %24, %25, %cst_16 {dimension_numbers = #tpu.dot_dimension_numbers<[1], [0], [0], [1], [0, 0, 1, 1], [], []>} : vector<8x8xf32>, vector<8x32xf32>, vector<8x32xf32> -> vector<8x32xf32>
    %27 = arith.addf %9, %26 : vector<8x32xf32>
    %28 = vector.extract_strided_slice %7 {offsets = [0, 8], sizes = [8, 8], strides = [1, 1]} : vector<8x32xf32> to vector<8x8xf32>
    %29 = vector.extract_strided_slice %6 {offsets = [0, 8], sizes = [8, 8], strides = [1, 1]} : vector<8x32xf32> to vector<8x8xf32>
    %30 = vector.extract_strided_slice %8 {offsets = [0, 8], sizes = [8, 8], strides = [1, 1]} : vector<8x32xf32> to vector<8x8xf32>
    %cst_17 = arith.constant dense<0.000000e+00> : vector<8x8xf32>
    %31 = tpu.matmul %28, %29, %cst_17 {dimension_numbers = #tpu.dot_dimension_numbers<[1], [1], [0], [0], [0, 0, 1, 0], [], []>} : vector<8x8xf32>, vector<8x8xf32>, vector<8x8xf32> -> vector<8x8xf32>
    %cst_18 = arith.constant dense<0xFF800000> : vector<8xf32>
    %32 = vector.multi_reduction <maximumf>, %31, %cst_18 [0] : vector<8x8xf32> to vector<8xf32>
    %33 = vector.shape_cast %32 : vector<8xf32> to vector<1x8xf32>
    %34 = vector.broadcast %33 : vector<1x8xf32> to vector<8x8xf32>
    %35 = arith.subf %31, %34 : vector<8x8xf32>
    %36 = math.exp %35 : vector<8x8xf32>
    %cst_19 = arith.constant dense<0.000000e+00> : vector<8xf32>
    %37 = vector.multi_reduction <add>, %36, %cst_19 [0] : vector<8x8xf32> to vector<8xf32>
    %38 = vector.shape_cast %37 : vector<8xf32> to vector<1x8xf32>
    %39 = tpu.reciprocal %38 {approx = true} : vector<1x8xf32> -> vector<1x8xf32>
    %40 = vector.broadcast %39 : vector<1x8xf32> to vector<8x8xf32>
    %41 = arith.mulf %36, %40 : vector<8x8xf32>
    %cst_20 = arith.constant dense<0.000000e+00> : vector<8x8xf32>
    %42 = tpu.matmul %41, %30, %cst_20 {dimension_numbers = #tpu.dot_dimension_numbers<[0], [0], [1], [1], [0, 1, 1, 1], [], []>} : vector<8x8xf32>, vector<8x8xf32>, vector<8x8xf32> -> vector<8x8xf32>
    %c8 = arith.constant 8 : index
    %c0_21 = arith.constant 0 : index
    %43 = vector.load %arg7[%c8, %c0_21] : memref<32x32xf32, #tpu.memory_space<vmem>>, vector<8x32xf32>
    %cst_22 = arith.constant dense<0.000000e+00> : vector<8x32xf32>
    %44 = tpu.matmul %42, %43, %cst_22 {dimension_numbers = #tpu.dot_dimension_numbers<[1], [0], [0], [1], [0, 0, 1, 1], [], []>} : vector<8x8xf32>, vector<8x32xf32>, vector<8x32xf32> -> vector<8x32xf32>
    %45 = arith.addf %27, %44 : vector<8x32xf32>
    %46 = vector.extract_strided_slice %7 {offsets = [0, 16], sizes = [8, 8], strides = [1, 1]} : vector<8x32xf32> to vector<8x8xf32>
    %47 = vector.extract_strided_slice %6 {offsets = [0, 16], sizes = [8, 8], strides = [1, 1]} : vector<8x32xf32> to vector<8x8xf32>
    %48 = vector.extract_strided_slice %8 {offsets = [0, 16], sizes = [8, 8], strides = [1, 1]} : vector<8x32xf32> to vector<8x8xf32>
    %cst_23 = arith.constant dense<0.000000e+00> : vector<8x8xf32>
    %49 = tpu.matmul %46, %47, %cst_23 {dimension_numbers = #tpu.dot_dimension_numbers<[1], [1], [0], [0], [0, 0, 1, 0], [], []>} : vector<8x8xf32>, vector<8x8xf32>, vector<8x8xf32> -> vector<8x8xf32>
    %cst_24 = arith.constant dense<0xFF800000> : vector<8xf32>
    %50 = vector.multi_reduction <maximumf>, %49, %cst_24 [0] : vector<8x8xf32> to vector<8xf32>
    %51 = vector.shape_cast %50 : vector<8xf32> to vector<1x8xf32>
    %52 = vector.broadcast %51 : vector<1x8xf32> to vector<8x8xf32>
    %53 = arith.subf %49, %52 : vector<8x8xf32>
    %54 = math.exp %53 : vector<8x8xf32>
    %cst_25 = arith.constant dense<0.000000e+00> : vector<8xf32>
    %55 = vector.multi_reduction <add>, %54, %cst_25 [0] : vector<8x8xf32> to vector<8xf32>
    %56 = vector.shape_cast %55 : vector<8xf32> to vector<1x8xf32>
    %57 = tpu.reciprocal %56 {approx = true} : vector<1x8xf32> -> vector<1x8xf32>
    %58 = vector.broadcast %57 : vector<1x8xf32> to vector<8x8xf32>
    %59 = arith.mulf %54, %58 : vector<8x8xf32>
    %cst_26 = arith.constant dense<0.000000e+00> : vector<8x8xf32>
    %60 = tpu.matmul %59, %48, %cst_26 {dimension_numbers = #tpu.dot_dimension_numbers<[0], [0], [1], [1], [0, 1, 1, 1], [], []>} : vector<8x8xf32>, vector<8x8xf32>, vector<8x8xf32> -> vector<8x8xf32>
    %c16 = arith.constant 16 : index
    %c0_27 = arith.constant 0 : index
    %61 = vector.load %arg7[%c16, %c0_27] : memref<32x32xf32, #tpu.memory_space<vmem>>, vector<8x32xf32>
    %cst_28 = arith.constant dense<0.000000e+00> : vector<8x32xf32>
    %62 = tpu.matmul %60, %61, %cst_28 {dimension_numbers = #tpu.dot_dimension_numbers<[1], [0], [0], [1], [0, 0, 1, 1], [], []>} : vector<8x8xf32>, vector<8x32xf32>, vector<8x32xf32> -> vector<8x32xf32>
    %63 = arith.addf %45, %62 : vector<8x32xf32>
    %64 = vector.extract_strided_slice %7 {offsets = [0, 24], sizes = [8, 8], strides = [1, 1]} : vector<8x32xf32> to vector<8x8xf32>
    %65 = vector.extract_strided_slice %6 {offsets = [0, 24], sizes = [8, 8], strides = [1, 1]} : vector<8x32xf32> to vector<8x8xf32>
    %66 = vector.extract_strided_slice %8 {offsets = [0, 24], sizes = [8, 8], strides = [1, 1]} : vector<8x32xf32> to vector<8x8xf32>
    %cst_29 = arith.constant dense<0.000000e+00> : vector<8x8xf32>
    %67 = tpu.matmul %64, %65, %cst_29 {dimension_numbers = #tpu.dot_dimension_numbers<[1], [1], [0], [0], [0, 0, 1, 0], [], []>} : vector<8x8xf32>, vector<8x8xf32>, vector<8x8xf32> -> vector<8x8xf32>
    %cst_30 = arith.constant dense<0xFF800000> : vector<8xf32>
    %68 = vector.multi_reduction <maximumf>, %67, %cst_30 [0] : vector<8x8xf32> to vector<8xf32>
    %69 = vector.shape_cast %68 : vector<8xf32> to vector<1x8xf32>
    %70 = vector.broadcast %69 : vector<1x8xf32> to vector<8x8xf32>
    %71 = arith.subf %67, %70 : vector<8x8xf32>
    %72 = math.exp %71 : vector<8x8xf32>
    %cst_31 = arith.constant dense<0.000000e+00> : vector<8xf32>
    %73 = vector.multi_reduction <add>, %72, %cst_31 [0] : vector<8x8xf32> to vector<8xf32>
    %74 = vector.shape_cast %73 : vector<8xf32> to vector<1x8xf32>
    %75 = tpu.reciprocal %74 {approx = true} : vector<1x8xf32> -> vector<1x8xf32>
    %76 = vector.broadcast %75 : vector<1x8xf32> to vector<8x8xf32>
    %77 = arith.mulf %72, %76 : vector<8x8xf32>
    %cst_32 = arith.constant dense<0.000000e+00> : vector<8x8xf32>
    %78 = tpu.matmul %77, %66, %cst_32 {dimension_numbers = #tpu.dot_dimension_numbers<[0], [0], [1], [1], [0, 1, 1, 1], [], []>} : vector<8x8xf32>, vector<8x8xf32>, vector<8x8xf32> -> vector<8x8xf32>
    %c24 = arith.constant 24 : index
    %c0_33 = arith.constant 0 : index
    %79 = vector.load %arg7[%c24, %c0_33] : memref<32x32xf32, #tpu.memory_space<vmem>>, vector<8x32xf32>
    %cst_34 = arith.constant dense<0.000000e+00> : vector<8x32xf32>
    %80 = tpu.matmul %78, %79, %cst_34 {dimension_numbers = #tpu.dot_dimension_numbers<[1], [0], [0], [1], [0, 0, 1, 1], [], []>} : vector<8x8xf32>, vector<8x32xf32>, vector<8x32xf32> -> vector<8x32xf32>
    %81 = arith.addf %63, %80 : vector<8x32xf32>
    %c0_35 = arith.constant 0 : index
    %c0_36 = arith.constant 0 : index
    %82 = vector.load %arg9[%c0_35, %c0_36] : memref<1x32xf32, #tpu.memory_space<vmem>>, vector<1x32xf32>
    %83 = vector.broadcast %82 : vector<1x32xf32> to vector<8x32xf32>
    %84 = arith.addf %81, %83 : vector<8x32xf32>
    %c0_37 = arith.constant 0 : index
    %c0_38 = arith.constant 0 : index
    %c0_39 = arith.constant 0 : index
    %85 = vector.load %arg10[%c0_37, %c0_38, %c0_39] : memref<1x8x32xf32, #tpu.memory_space<vmem>>, vector<1x8x32xf32>
    %86 = vector.shape_cast %85 : vector<1x8x32xf32> to vector<8x32xf32>
    %87 = vector.shape_cast %84 : vector<8x32xf32> to vector<1x8x32xf32>
    tpu.vector_store %arg10[%c0_37, %c0_38, %c0_39], %87 {strides = array<i32>} : memref<1x8x32xf32, #tpu.memory_space<vmem>>, vector<1x8x32xf32>,
    return
  }
  func.func @transform_0(%arg0: i32, %arg1: i32) -> (i32, i32, i32) {
    %c0_i32 = arith.constant 0 : i32
    %c0_i32_0 = arith.constant 0 : i32
    %c0_i32_1 = arith.constant 0 : i32
    return %arg0, %c0_i32, %c0_i32_0 : i32, i32, i32
  }
  func.func @transform_1(%arg0: i32, %arg1: i32) -> (i32, i32, i32) {
    %c0_i32 = arith.constant 0 : i32
    %c0_i32_0 = arith.constant 0 : i32
    return %arg0, %arg1, %c0_i32 : i32, i32, i32
  }
  func.func @transform_2(%arg0: i32, %arg1: i32) -> (i32, i32) {
    %c0_i32 = arith.constant 0 : i32
    %c0_i32_0 = arith.constant 0 : i32
    %c0_i32_1 = arith.constant 0 : i32
    return %c0_i32, %c0_i32_0 : i32, i32
  }
  func.func @transform_3(%arg0: i32, %arg1: i32) -> (i32, i32) {
    %c0_i32 = arith.constant 0 : i32
    %c0_i32_0 = arith.constant 0 : i32
    %c0_i32_1 = arith.constant 0 : i32
    return %c0_i32, %c0_i32_0 : i32, i32
  }
  func.func @transform_4(%arg0: i32, %arg1: i32) -> (i32, i32) {
    %c0_i32 = arith.constant 0 : i32
    %c0_i32_0 = arith.constant 0 : i32
    %c0_i32_1 = arith.constant 0 : i32
    return %c0_i32, %c0_i32_0 : i32, i32
  }
  func.func @transform_5(%arg0: i32, %arg1: i32) -> (i32, i32) {
    %c0_i32 = arith.constant 0 : i32
    %c0_i32_0 = arith.constant 0 : i32
    %c0_i32_1 = arith.constant 0 : i32
    return %c0_i32, %c0_i32_0 : i32, i32
  }
  func.func @transform_6(%arg0: i32, %arg1: i32) -> (i32, i32) {
    %c0_i32 = arith.constant 0 : i32
    %c0_i32_0 = arith.constant 0 : i32
    %c0_i32_1 = arith.constant 0 : i32
    return %c0_i32, %c0_i32_0 : i32, i32
  }
  func.func @transform_7(%arg0: i32, %arg1: i32) -> (i32, i32) {
    %c0_i32 = arith.constant 0 : i32
    %c0_i32_0 = arith.constant 0 : i32
    %c0_i32_1 = arith.constant 0 : i32
    return %c0_i32, %c0_i32_0 : i32, i32
  }
  func.func @transform_8(%arg0: i32, %arg1: i32) -> (i32, i32, i32) {
    %c0_i32 = arith.constant 0 : i32
    %c0_i32_0 = arith.constant 0 : i32
    return %arg0, %arg1, %c0_i32 : i32, i32, i32
  }
}

module attributes {stable_mosaic.version = 11 : i64} {
  func.func @mha_kernel(%arg0: i32, %arg1: i32, %arg2: memref<1x8x32xf32, #tpu.memory_space<vmem>>, %arg3: memref<1x8x32xf32, #tpu.memory_space<vmem>>, %arg4: memref<32x32xf32, #tpu.memory_space<vmem>>, %arg5: memref<32x32xf32, #tpu.memory_space<vmem>>, %arg6: memref<32x32xf32, #tpu.memory_space<vmem>>, %arg7: memref<32x32xf32, #tpu.memory_space<vmem>>, %arg8: memref<1x32xf32, #tpu.memory_space<vmem>>, %arg9: memref<1x32xf32, #tpu.memory_space<vmem>>, %arg10: memref<1x8x32xf32, #tpu.memory_space<vmem>>, %arg11: memref<8x32xf32, #tpu.memory_space<vmem>>, %arg12: memref<8x32xf32, #tpu.memory_space<vmem>>) attributes {dimension_semantics = [#tpu.dimension_semantics<parallel>, #tpu.dimension_semantics<arbitrary>], iteration_bounds = array<i64: 2, 1>, scalar_prefetch = 0 : i64, scratch_operands = 2 : i64, tpu.core_type = #tpu.core_type<tc>, window_params = [{transform_indices = @transform_0, window_bounds = array<i64: 1, 8, 32>}, {transform_indices = @transform_1, window_bounds = array<i64: 1, 8, 32>}, {pipeline_mode = #tpu.pipeline_mode<synchronous>, transform_indices = @transform_2, window_bounds = array<i64: 32, 32>}, {pipeline_mode = #tpu.pipeline_mode<synchronous>, transform_indices = @transform_3, window_bounds = array<i64: 32, 32>}, {pipeline_mode = #tpu.pipeline_mode<synchronous>, transform_indices = @transform_4, window_bounds = array<i64: 32, 32>}, {pipeline_mode = #tpu.pipeline_mode<synchronous>, transform_indices = @transform_5, window_bounds = array<i64: 32, 32>}, {pipeline_mode = #tpu.pipeline_mode<synchronous>, transform_indices = @transform_6, window_bounds = array<i64: 1, 32>}, {pipeline_mode = #tpu.pipeline_mode<synchronous>, transform_indices = @transform_7, window_bounds = array<i64: 1, 32>}, {transform_indices = @transform_8, window_bounds = array<i64: 1, 8, 32>}]} {
    %c0_i32 = arith.constant 0 : i32
    %0 = arith.cmpi eq, %arg1, %c0_i32 : i32
    %1 = arith.extui %0 : i1 to i32
    %c0_i32_0 = arith.constant 0 : i32
    %2 = arith.cmpi ne, %1, %c0_i32_0 : i32
    scf.if %2 {
      %c0_40 = arith.constant 0 : index
      %c0_41 = arith.constant 0 : index
      %c0_42 = arith.constant 0 : index
      %88 = vector.load %arg2[%c0_40, %c0_41, %c0_42] : memref<1x8x32xf32, #tpu.memory_space<vmem>>, vector<1x8x32xf32>
      %89 = vector.shape_cast %88 : vector<1x8x32xf32> to vector<8x32xf32>
      %c0_43 = arith.constant 0 : index
      %c0_44 = arith.constant 0 : index
      %90 = vector.load %arg4[%c0_43, %c0_44] : memref<32x32xf32, #tpu.memory_space<vmem>>, vector<32x32xf32>
      %cst_45 = arith.constant dense<0.000000e+00> : vector<8x32xf32>
      %91 = tpu.matmul %89, %90, %cst_45 {dimension_numbers = #tpu.dot_dimension_numbers<[1], [0], [0], [1], [0, 0, 1, 1], [], []>} : vector<8x32xf32>, vector<32x32xf32>, vector<8x32xf32> -> vector<8x32xf32>
      %c0_46 = arith.constant 0 : index
      %c0_47 = arith.constant 0 : index
      %92 = vector.load %arg8[%c0_46, %c0_47] : memref<1x32xf32, #tpu.memory_space<vmem>>, vector<1x32xf32>
      %93 = vector.broadcast %92 : vector<1x32xf32> to vector<8x32xf32>
      %94 = arith.addf %91, %93 : vector<8x32xf32>
      %c0_48 = arith.constant 0 : index
      %c0_49 = arith.constant 0 : index
      %95 = vector.load %arg6[%c0_48, %c0_49] : memref<32x32xf32, #tpu.memory_space<vmem>>, vector<32x32xf32>
      %cst_50 = arith.constant dense<0.000000e+00> : vector<8x32xf32>
      %96 = tpu.matmul %89, %95, %cst_50 {dimension_numbers = #tpu.dot_dimension_numbers<[1], [0], [0], [1], [0, 0, 1, 1], [], []>} : vector<8x32xf32>, vector<32x32xf32>, vector<8x32xf32> -> vector<8x32xf32>
      %c0_51 = arith.constant 0 : index
      %c0_52 = arith.constant 0 : index
      %97 = vector.load %arg11[%c0_51, %c0_52] : memref<8x32xf32, #tpu.memory_space<vmem>>, vector<8x32xf32>
      tpu.vector_store %arg11[%c0_51, %c0_52], %94 {strides = array<i32>} : memref<8x32xf32, #tpu.memory_space<vmem>>, vector<8x32xf32>,
      %c0_53 = arith.constant 0 : index
      %c0_54 = arith.constant 0 : index
      %98 = vector.load %arg12[%c0_53, %c0_54] : memref<8x32xf32, #tpu.memory_space<vmem>>, vector<8x32xf32>
      tpu.vector_store %arg12[%c0_53, %c0_54], %96 {strides = array<i32>} : memref<8x32xf32, #tpu.memory_space<vmem>>, vector<8x32xf32>,
    } else {
    }
    %c0 = arith.constant 0 : index
    %c0_1 = arith.constant 0 : index
    %c0_2 = arith.constant 0 : index
    %3 = vector.load %arg3[%c0, %c0_1, %c0_2] : memref<1x8x32xf32, #tpu.memory_space<vmem>>, vector<1x8x32xf32>
    %4 = vector.shape_cast %3 : vector<1x8x32xf32> to vector<8x32xf32>
    %c0_3 = arith.constant 0 : index
    %c0_4 = arith.constant 0 : index
    %5 = vector.load %arg5[%c0_3, %c0_4] : memref<32x32xf32, #tpu.memory_space<vmem>>, vector<32x32xf32>
    %cst = arith.constant dense<0.000000e+00> : vector<8x32xf32>
    %6 = tpu.matmul %4, %5, %cst {dimension_numbers = #tpu.dot_dimension_numbers<[1], [0], [0], [1], [0, 0, 1, 1], [], []>} : vector<8x32xf32>, vector<32x32xf32>, vector<8x32xf32> -> vector<8x32xf32>
    %c0_5 = arith.constant 0 : index
    %c0_6 = arith.constant 0 : index
    %7 = vector.load %arg11[%c0_5, %c0_6] : memref<8x32xf32, #tpu.memory_space<vmem>>, vector<8x32xf32>
    %c0_7 = arith.constant 0 : index
    %c0_8 = arith.constant 0 : index
    %8 = vector.load %arg12[%c0_7, %c0_8] : memref<8x32xf32, #tpu.memory_space<vmem>>, vector<8x32xf32>
    %cst_9 = arith.constant 0.000000e+00 : f32
    %9 = vector.broadcast %cst_9 : f32 to vector<8x32xf32>
    %10 = vector.extract_strided_slice %7 {offsets = [0, 0], sizes = [8, 8], strides = [1, 1]} : vector<8x32xf32> to vector<8x8xf32>
    %11 = vector.extract_strided_slice %6 {offsets = [0, 0], sizes = [8, 8], strides = [1, 1]} : vector<8x32xf32> to vector<8x8xf32>
    %12 = vector.extract_strided_slice %8 {offsets = [0, 0], sizes = [8, 8], strides = [1, 1]} : vector<8x32xf32> to vector<8x8xf32>
    %cst_10 = arith.constant dense<0.000000e+00> : vector<8x8xf32>
    %13 = tpu.matmul %10, %11, %cst_10 {dimension_numbers = #tpu.dot_dimension_numbers<[1], [1], [0], [0], [0, 0, 1, 0], [], []>} : vector<8x8xf32>, vector<8x8xf32>, vector<8x8xf32> -> vector<8x8xf32>
    %cst_11 = arith.constant dense<0xFF800000> : vector<8xf32>
    %14 = vector.multi_reduction <maximumf>, %13, %cst_11 [0] : vector<8x8xf32> to vector<8xf32>
    %15 = vector.shape_cast %14 : vector<8xf32> to vector<1x8xf32>
    %16 = vector.broadcast %15 : vector<1x8xf32> to vector<8x8xf32>
    %17 = arith.subf %13, %16 : vector<8x8xf32>
    %18 = math.exp %17 : vector<8x8xf32>
    %cst_12 = arith.constant dense<0.000000e+00> : vector<8xf32>
    %19 = vector.multi_reduction <add>, %18, %cst_12 [0] : vector<8x8xf32> to vector<8xf32>
    %20 = vector.shape_cast %19 : vector<8xf32> to vector<1x8xf32>
    %21 = tpu.reciprocal %20 {approx = true} : vector<1x8xf32> -> vector<1x8xf32>
    %22 = vector.broadcast %21 : vector<1x8xf32> to vector<8x8xf32>
    %23 = arith.mulf %18, %22 : vector<8x8xf32>
    %cst_13 = arith.constant dense<0.000000e+00> : vector<8x8xf32>
    %24 = tpu.matmul %23, %12, %cst_13 {dimension_numbers = #tpu.dot_dimension_numbers<[0], [0], [1], [1], [0, 1, 1, 1], [], []>} : vector<8x8xf32>, vector<8x8xf32>, vector<8x8xf32> -> vector<8x8xf32>
    %c0_14 = arith.constant 0 : index
    %c0_15 = arith.constant 0 : index
    %25 = vector.load %arg7[%c0_14, %c0_15] : memref<32x32xf32, #tpu.memory_space<vmem>>, vector<8x32xf32>
    %cst_16 = arith.constant dense<0.000000e+00> : vector<8x32xf32>
    %26 = tpu.matmul %24, %25, %cst_16 {dimension_numbers = #tpu.dot_dimension_numbers<[1], [0], [0], [1], [0, 0, 1, 1], [], []>} : vector<8x8xf32>, vector<8x32xf32>, vector<8x32xf32> -> vector<8x32xf32>
    %27 = arith.addf %9, %26 : vector<8x32xf32>
    %28 = vector.extract_strided_slice %7 {offsets = [0, 8], sizes = [8, 8], strides = [1, 1]} : vector<8x32xf32> to vector<8x8xf32>
    %29 = vector.extract_strided_slice %6 {offsets = [0, 8], sizes = [8, 8], strides = [1, 1]} : vector<8x32xf32> to vector<8x8xf32>
    %30 = vector.extract_strided_slice %8 {offsets = [0, 8], sizes = [8, 8], strides = [1, 1]} : vector<8x32xf32> to vector<8x8xf32>
    %cst_17 = arith.constant dense<0.000000e+00> : vector<8x8xf32>
    %31 = tpu.matmul %28, %29, %cst_17 {dimension_numbers = #tpu.dot_dimension_numbers<[1], [1], [0], [0], [0, 0, 1, 0], [], []>} : vector<8x8xf32>, vector<8x8xf32>, vector<8x8xf32> -> vector<8x8xf32>
    %cst_18 = arith.constant dense<0xFF800000> : vector<8xf32>
    %32 = vector.multi_reduction <maximumf>, %31, %cst_18 [0] : vector<8x8xf32> to vector<8xf32>
    %33 = vector.shape_cast %32 : vector<8xf32> to vector<1x8xf32>
    %34 = vector.broadcast %33 : vector<1x8xf32> to vector<8x8xf32>
    %35 = arith.subf %31, %34 : vector<8x8xf32>
    %36 = math.exp %35 : vector<8x8xf32>
    %cst_19 = arith.constant dense<0.000000e+00> : vector<8xf32>
    %37 = vector.multi_reduction <add>, %36, %cst_19 [0] : vector<8x8xf32> to vector<8xf32>
    %38 = vector.shape_cast %37 : vector<8xf32> to vector<1x8xf32>
    %39 = tpu.reciprocal %38 {approx = true} : vector<1x8xf32> -> vector<1x8xf32>
    %40 = vector.broadcast %39 : vector<1x8xf32> to vector<8x8xf32>
    %41 = arith.mulf %36, %40 : vector<8x8xf32>
    %cst_20 = arith.constant dense<0.000000e+00> : vector<8x8xf32>
    %42 = tpu.matmul %41, %30, %cst_20 {dimension_numbers = #tpu.dot_dimension_numbers<[0], [0], [1], [1], [0, 1, 1, 1], [], []>} : vector<8x8xf32>, vector<8x8xf32>, vector<8x8xf32> -> vector<8x8xf32>
    %c8 = arith.constant 8 : index
    %c0_21 = arith.constant 0 : index
    %43 = vector.load %arg7[%c8, %c0_21] : memref<32x32xf32, #tpu.memory_space<vmem>>, vector<8x32xf32>
    %cst_22 = arith.constant dense<0.000000e+00> : vector<8x32xf32>
    %44 = tpu.matmul %42, %43, %cst_22 {dimension_numbers = #tpu.dot_dimension_numbers<[1], [0], [0], [1], [0, 0, 1, 1], [], []>} : vector<8x8xf32>, vector<8x32xf32>, vector<8x32xf32> -> vector<8x32xf32>
    %45 = arith.addf %27, %44 : vector<8x32xf32>
    %46 = vector.extract_strided_slice %7 {offsets = [0, 16], sizes = [8, 8], strides = [1, 1]} : vector<8x32xf32> to vector<8x8xf32>
    %47 = vector.extract_strided_slice %6 {offsets = [0, 16], sizes = [8, 8], strides = [1, 1]} : vector<8x32xf32> to vector<8x8xf32>
    %48 = vector.extract_strided_slice %8 {offsets = [0, 16], sizes = [8, 8], strides = [1, 1]} : vector<8x32xf32> to vector<8x8xf32>
    %cst_23 = arith.constant dense<0.000000e+00> : vector<8x8xf32>
    %49 = tpu.matmul %46, %47, %cst_23 {dimension_numbers = #tpu.dot_dimension_numbers<[1], [1], [0], [0], [0, 0, 1, 0], [], []>} : vector<8x8xf32>, vector<8x8xf32>, vector<8x8xf32> -> vector<8x8xf32>
    %cst_24 = arith.constant dense<0xFF800000> : vector<8xf32>
    %50 = vector.multi_reduction <maximumf>, %49, %cst_24 [0] : vector<8x8xf32> to vector<8xf32>
    %51 = vector.shape_cast %50 : vector<8xf32> to vector<1x8xf32>
    %52 = vector.broadcast %51 : vector<1x8xf32> to vector<8x8xf32>
    %53 = arith.subf %49, %52 : vector<8x8xf32>
    %54 = math.exp %53 : vector<8x8xf32>
    %cst_25 = arith.constant dense<0.000000e+00> : vector<8xf32>
    %55 = vector.multi_reduction <add>, %54, %cst_25 [0] : vector<8x8xf32> to vector<8xf32>
    %56 = vector.shape_cast %55 : vector<8xf32> to vector<1x8xf32>
    %57 = tpu.reciprocal %56 {approx = true} : vector<1x8xf32> -> vector<1x8xf32>
    %58 = vector.broadcast %57 : vector<1x8xf32> to vector<8x8xf32>
    %59 = arith.mulf %54, %58 : vector<8x8xf32>
    %cst_26 = arith.constant dense<0.000000e+00> : vector<8x8xf32>
    %60 = tpu.matmul %59, %48, %cst_26 {dimension_numbers = #tpu.dot_dimension_numbers<[0], [0], [1], [1], [0, 1, 1, 1], [], []>} : vector<8x8xf32>, vector<8x8xf32>, vector<8x8xf32> -> vector<8x8xf32>
    %c16 = arith.constant 16 : index
    %c0_27 = arith.constant 0 : index
    %61 = vector.load %arg7[%c16, %c0_27] : memref<32x32xf32, #tpu.memory_space<vmem>>, vector<8x32xf32>
    %cst_28 = arith.constant dense<0.000000e+00> : vector<8x32xf32>
    %62 = tpu.matmul %60, %61, %cst_28 {dimension_numbers = #tpu.dot_dimension_numbers<[1], [0], [0], [1], [0, 0, 1, 1], [], []>} : vector<8x8xf32>, vector<8x32xf32>, vector<8x32xf32> -> vector<8x32xf32>
    %63 = arith.addf %45, %62 : vector<8x32xf32>
    %64 = vector.extract_strided_slice %7 {offsets = [0, 24], sizes = [8, 8], strides = [1, 1]} : vector<8x32xf32> to vector<8x8xf32>
    %65 = vector.extract_strided_slice %6 {offsets = [0, 24], sizes = [8, 8], strides = [1, 1]} : vector<8x32xf32> to vector<8x8xf32>
    %66 = vector.extract_strided_slice %8 {offsets = [0, 24], sizes = [8, 8], strides = [1, 1]} : vector<8x32xf32> to vector<8x8xf32>
    %cst_29 = arith.constant dense<0.000000e+00> : vector<8x8xf32>
    %67 = tpu.matmul %64, %65, %cst_29 {dimension_numbers = #tpu.dot_dimension_numbers<[1], [1], [0], [0], [0, 0, 1, 0], [], []>} : vector<8x8xf32>, vector<8x8xf32>, vector<8x8xf32> -> vector<8x8xf32>
    %cst_30 = arith.constant dense<0xFF800000> : vector<8xf32>
    %68 = vector.multi_reduction <maximumf>, %67, %cst_30 [0] : vector<8x8xf32> to vector<8xf32>
    %69 = vector.shape_cast %68 : vector<8xf32> to vector<1x8xf32>
    %70 = vector.broadcast %69 : vector<1x8xf32> to vector<8x8xf32>
    %71 = arith.subf %67, %70 : vector<8x8xf32>
    %72 = math.exp %71 : vector<8x8xf32>
    %cst_31 = arith.constant dense<0.000000e+00> : vector<8xf32>
    %73 = vector.multi_reduction <add>, %72, %cst_31 [0] : vector<8x8xf32> to vector<8xf32>
    %74 = vector.shape_cast %73 : vector<8xf32> to vector<1x8xf32>
    %75 = tpu.reciprocal %74 {approx = true} : vector<1x8xf32> -> vector<1x8xf32>
    %76 = vector.broadcast %75 : vector<1x8xf32> to vector<8x8xf32>
    %77 = arith.mulf %72, %76 : vector<8x8xf32>
    %cst_32 = arith.constant dense<0.000000e+00> : vector<8x8xf32>
    %78 = tpu.matmul %77, %66, %cst_32 {dimension_numbers = #tpu.dot_dimension_numbers<[0], [0], [1], [1], [0, 1, 1, 1], [], []>} : vector<8x8xf32>, vector<8x8xf32>, vector<8x8xf32> -> vector<8x8xf32>
    %c24 = arith.constant 24 : index
    %c0_33 = arith.constant 0 : index
    %79 = vector.load %arg7[%c24, %c0_33] : memref<32x32xf32, #tpu.memory_space<vmem>>, vector<8x32xf32>
    %cst_34 = arith.constant dense<0.000000e+00> : vector<8x32xf32>
    %80 = tpu.matmul %78, %79, %cst_34 {dimension_numbers = #tpu.dot_dimension_numbers<[1], [0], [0], [1], [0, 0, 1, 1], [], []>} : vector<8x8xf32>, vector<8x32xf32>, vector<8x32xf32> -> vector<8x32xf32>
    %81 = arith.addf %63, %80 : vector<8x32xf32>
    %c0_35 = arith.constant 0 : index
    %c0_36 = arith.constant 0 : index
    %82 = vector.load %arg9[%c0_35, %c0_36] : memref<1x32xf32, #tpu.memory_space<vmem>>, vector<1x32xf32>
    %83 = vector.broadcast %82 : vector<1x32xf32> to vector<8x32xf32>
    %84 = arith.addf %81, %83 : vector<8x32xf32>
    %c0_37 = arith.constant 0 : index
    %c0_38 = arith.constant 0 : index
    %c0_39 = arith.constant 0 : index
    %85 = vector.load %arg10[%c0_37, %c0_38, %c0_39] : memref<1x8x32xf32, #tpu.memory_space<vmem>>, vector<1x8x32xf32>
    %86 = vector.shape_cast %85 : vector<1x8x32xf32> to vector<8x32xf32>
    %87 = vector.shape_cast %84 : vector<8x32xf32> to vector<1x8x32xf32>
    tpu.vector_store %arg10[%c0_37, %c0_38, %c0_39], %87 {strides = array<i32>} : memref<1x8x32xf32, #tpu.memory_space<vmem>>, vector<1x8x32xf32>,
    return
  }
  func.func @transform_0(%arg0: i32, %arg1: i32) -> (i32, i32, i32) {
    %c0_i32 = arith.constant 0 : i32
    %c0_i32_0 = arith.constant 0 : i32
    %c0_i32_1 = arith.constant 0 : i32
    return %arg0, %c0_i32, %c0_i32_0 : i32, i32, i32
  }
  func.func @transform_1(%arg0: i32, %arg1: i32) -> (i32, i32, i32) {
    %c0_i32 = arith.constant 0 : i32
    %c0_i32_0 = arith.constant 0 : i32
    return %arg0, %arg1, %c0_i32 : i32, i32, i32
  }
  func.func @transform_2(%arg0: i32, %arg1: i32) -> (i32, i32) {
    %c0_i32 = arith.constant 0 : i32
    %c0_i32_0 = arith.constant 0 : i32
    %c0_i32_1 = arith.constant 0 : i32
    return %c0_i32, %c0_i32_0 : i32, i32
  }
  func.func @transform_3(%arg0: i32, %arg1: i32) -> (i32, i32) {
    %c0_i32 = arith.constant 0 : i32
    %c0_i32_0 = arith.constant 0 : i32
    %c0_i32_1 = arith.constant 0 : i32
    return %c0_i32, %c0_i32_0 : i32, i32
  }
  func.func @transform_4(%arg0: i32, %arg1: i32) -> (i32, i32) {
    %c0_i32 = arith.constant 0 : i32
    %c0_i32_0 = arith.constant 0 : i32
    %c0_i32_1 = arith.constant 0 : i32
    return %c0_i32, %c0_i32_0 : i32, i32
  }
  func.func @transform_5(%arg0: i32, %arg1: i32) -> (i32, i32) {
    %c0_i32 = arith.constant 0 : i32
    %c0_i32_0 = arith.constant 0 : i32
    %c0_i32_1 = arith.constant 0 : i32
    return %c0_i32, %c0_i32_0 : i32, i32
  }
  func.func @transform_6(%arg0: i32, %arg1: i32) -> (i32, i32) {
    %c0_i32 = arith.constant 0 : i32
    %c0_i32_0 = arith.constant 0 : i32
    %c0_i32_1 = arith.constant 0 : i32
    return %c0_i32, %c0_i32_0 : i32, i32
  }
  func.func @transform_7(%arg0: i32, %arg1: i32) -> (i32, i32) {
    %c0_i32 = arith.constant 0 : i32
    %c0_i32_0 = arith.constant 0 : i32
    %c0_i32_1 = arith.constant 0 : i32
    return %c0_i32, %c0_i32_0 : i32, i32
  }
  func.func @transform_8(%arg0: i32, %arg1: i32) -> (i32, i32, i32) {
    %c0_i32 = arith.constant 0 : i32
    %c0_i32_0 = arith.constant 0 : i32
    return %arg0, %arg1, %c0_i32 : i32, i32, i32
  }
}

</mosaic_0001>

<llo_original>
// kernel: tpu_custom_call.1
$region0: #{tpu_custom_call.1}
  #allocation0 [shape = 'u32[]', space=smem, size = 0x4, offset = 0x4, fixed_abs, tag = 'smem constant byte address 0x4 - core index']
  #allocation1 [shape = 'u32[144,128]{1,0:T(1,128)}', space=vmem, size = 0x12000, scoped, tag = 'internal scratch']
  #allocation2 [shape = 'f32[8,32]{1,0:T(8,128)}', space=vmem, size = 0x1000, scoped, tag = 'scratch operand']
  #allocation3 [shape = 'f32[8,32]{1,0:T(8,128)}', space=vmem, size = 0x1000, scoped, tag = 'scratch operand']
  %s0 = inlined_call_operand.hbm [shape: f32[2,8,32], index: 0, kind: input, shape index: {}]
  %s1 = inlined_call_operand.hbm [shape: f32[2,8,32], index: 1, kind: input, shape index: {}]
  %s2 = inlined_call_operand.hbm [shape: f32[32,32], index: 2, kind: input, shape index: {}]
  %s3 = inlined_call_operand.hbm [shape: f32[32,32], index: 3, kind: input, shape index: {}]
  %s4 = inlined_call_operand.hbm [shape: f32[32,32], index: 4, kind: input, shape index: {}]
  %s5 = inlined_call_operand.hbm [shape: f32[32,32], index: 5, kind: input, shape index: {}]
  %s6 = inlined_call_operand.vmem [shape: f32[1,32], index: 6, kind: input, shape index: {}]
  %s7 = inlined_call_operand.vmem [shape: f32[1,32], index: 7, kind: input, shape index: {}]
  %s8 = inlined_call_operand.hbm [shape: f32[2,8,32], index: 8, kind: output, shape index: {}]
  %s9 = sld [smem:[#allocation0]]
  $region93: #{tpu_custom_call.1} parent=0
    _
  %s11 = ssub.s32 1, %s9
  %s12 = scalar_select 0, %s11, %s9
  $region1: #{tpu_custom_call.1} parent=0
    #allocation4 [shape = 'u8[8192]{0}', space=vmem, size = 0x2000, scoped, tag = 'input window, operand 0']
    #allocation5 [shape = 's32[2]{0}', space=sflag, size = 0x8, scoped, tag = 'scoped memory for tpu_custom_call.1']
    #allocation6 [shape = 's32[2]{0}', space=sflag, size = 0x8, scoped, tag = 'scoped memory for tpu_custom_call.1']
    #allocation7 [shape = 'u8[8192]{0}', space=vmem, size = 0x2000, scoped, tag = 'input window, operand 1']
    #allocation8 [shape = 's32[2]{0}', space=sflag, size = 0x8, scoped, tag = 'scoped memory for tpu_custom_call.1']
    #allocation9 [shape = 'u8[16384]{0}', space=vmem, size = 0x4000, scoped, tag = 'input window, operand 2, single buffered']
    #allocation10 [shape = 'u8[16384]{0}', space=vmem, size = 0x4000, scoped, tag = 'input window, operand 3, single buffered']
    #allocation11 [shape = 's32[1]{0}', space=sflag, size = 0x4, scoped, tag = 'scoped memory for tpu_custom_call.1']
    #allocation12 [shape = 'u8[16384]{0}', space=vmem, size = 0x4000, scoped, tag = 'input window, operand 4, single buffered']
    #allocation13 [shape = 'u8[16384]{0}', space=vmem, size = 0x4000, scoped, tag = 'input window, operand 5, single buffered']
    #allocation14 [shape = 's32[1]{0}', space=sflag, size = 0x4, scoped, tag = 'scoped memory for tpu_custom_call.1']
    #allocation15 [shape = 'u8[8192]{0}', space=vmem, size = 0x2000, scoped, tag = 'output window, operand 0']
    %13 = vsyncpa [#allocation5], 0
    %s14 = scalar_lea.sflag [#allocation5], 1
    %15 = vsyncpa %s14, 0
    %16 = vsyncpa [#allocation8], 0
    %s17 = scalar_lea.sflag [#allocation8], 1
    %18 = vsyncpa %s17, 0
    %19 = vsyncpa [#allocation11], 0
    %20 = vsyncpa [#allocation14], 0
    %21 = vsyncpa [#allocation6], 0
    %s22 = scalar_lea.sflag [#allocation6], 1
    %23 = vsyncpa %s22, 0
    loop: start=0, step=1, limit=4
    $region2: #{tpu_custom_call.1} parent=1 // loop_pre_header
      _
    $region3: #{tpu_custom_call.1} parent=1 // loop_header
      %s25 = sphi 0, %s29
      %p26 = scmp.ge.s32.totalorder %s25, 4
      %s32 = sphi 0, %s44
      %s33 = sphi 0, %s40
      %s34 = sphi 0, %s32
      %s35 = sphi 0, %s33
      %s36 = sphi 0, %s34
      %s37 = sphi 0, %s35
      %s47 = sphi 0, %s49
      %s50 = sphi 0, %s47
      %s51 = sphi 0, %s50
      %s67 = sphi 0, %s51
      %s75 = sphi 0, %s77
      %s78 = sphi 0, %s75
      %s79 = sphi 0, %s78
      %s95 = sphi 0, %s79
      %s99 = sphi 0, %s99
      %s101 = sphi 0, %s99
      %s102 = sphi 0, %s101
      %s116 = sphi 0, %s102
      %s120 = sphi 0, %s120
      %s122 = sphi 0, %s120
      %s123 = sphi 0, %s122
      %s137 = sphi 0, %s123
      %s141 = sphi 0, %s141
      %s143 = sphi 0, %s141
      %s144 = sphi 0, %s143
      %s158 = sphi 0, %s144
      %s162 = sphi 0, %s162
      %s164 = sphi 0, %s162
      %s165 = sphi 0, %s164
      %s179 = sphi 0, %s165
      %s183 = sphi 0, %s183
      %s185 = sphi 0, %s183
      %s186 = sphi 0, %s185
      %s200 = sphi 0, %s186
      %s204 = sphi 0, %s204
      %s206 = sphi 0, %s204
      %s207 = sphi 0, %s206
      %s221 = sphi 0, %s207
      %s229 = sphi 0, %s231
      %s232 = sphi 0, %s229
      %s233 = sphi 0, %s232
      %s249 = sphi 0, %s233
    $region4: #{tpu_custom_call.1} parent=1 // loop_header_branch
      %28 = sbr.rel (%p26) target = $region8
    $region5: #{tpu_custom_call.1} parent=1 // loop_body
      %s30 = ssub.s32 %s25, 1
      %s31 = ssub.s32 %s25, 2
      %s38 = sadd.s32 1, %s33
      %p39 = scmp.ge.s32.totalorder %s38, 1
      %s40 = scalar_select %p39, 0, %s38
      %s41 = sadd.s32 1, %s32
      %s42 = scalar_select %p39, %s41, %s32
      %p43 = scmp.ge.s32.totalorder %s42, 2
      %s44 = scalar_select %p43, 0, %s42
      %s45 = ssub.s32 %s32, %s44
      %p46 = scmp.eq.s32.totalorder %s45, 0
      %s48 = sadd.s32 %s47, 1
      %s49 = scalar_select %p46, %s47, %s48
      %p52 = pneg %p46
      %p53 = scmp.eq.s32.totalorder %s25, 1
      %p54 = por %p52, %p53
      %p55 = scmp.ne.s32.totalorder %s47, %s50
      %p56 = scmp.eq.s32.totalorder %s25, 0
      %p57 = por %p55, %p56
      %p58 = scmp.ne.s32.totalorder %s47, %s50
      %p59 = scmp.eq.s32.totalorder %s30, 1
      %p60 = por %p58, %p59
      %p61 = scmp.ne.s32.totalorder %s50, %s51
      %p62 = scmp.eq.s32.totalorder %s30, 0
      %p63 = por %p61, %p62
      %p64 = scmp.ne.s32.totalorder %s50, %s51
      %p65 = scmp.eq.s32.totalorder %s31, 1
      %p66 = por %p64, %p65
      %p68 = scmp.ne.s32.totalorder %s51, %s67
      %p69 = scmp.eq.s32.totalorder %s31, 0
      %p70 = por %p68, %p69
      %s71 = ssub.s32 %s32, %s44
      %s72 = ssub.s32 %s33, %s40
      %s73 = sor.u32 %s71, %s72
      %p74 = scmp.eq.s32.totalorder %s73, 0
      %s76 = sadd.s32 %s75, 1
      %s77 = scalar_select %p74, %s75, %s76
      %p80 = pneg %p74
      %p81 = scmp.eq.s32.totalorder %s25, 1
      %p82 = por %p80, %p81
      %p83 = scmp.ne.s32.totalorder %s75, %s78
      %p84 = scmp.eq.s32.totalorder %s25, 0
      %p85 = por %p83, %p84
      %p86 = scmp.ne.s32.totalorder %s75, %s78
      %p87 = scmp.eq.s32.totalorder %s30, 1
      %p88 = por %p86, %p87
      %p89 = scmp.ne.s32.totalorder %s78, %s79
      %p90 = scmp.eq.s32.totalorder %s30, 0
      %p91 = por %p89, %p90
      %p92 = scmp.ne.s32.totalorder %s78, %s79
      %p93 = scmp.eq.s32.totalorder %s31, 1
      %p94 = por %p92, %p93
      %p96 = scmp.ne.s32.totalorder %s79, %s95
      %p97 = scmp.eq.s32.totalorder %s31, 0
      %p98 = por %p96, %p97
      %s100 = sadd.s32 %s99, 1
      %p103 = scmp.eq.s32.totalorder %s25, 1
      %p104 = scmp.ne.s32.totalorder %s99, %s101
      %p105 = scmp.eq.s32.totalorder %s25, 0
      %p106 = por %p104, %p105
      %p107 = scmp.ne.s32.totalorder %s99, %s101
      %p108 = scmp.eq.s32.totalorder %s30, 1
      %p109 = por %p107, %p108
      %p110 = scmp.ne.s32.totalorder %s101, %s102
      %p111 = scmp.eq.s32.totalorder %s30, 0
      %p112 = por %p110, %p111
      %p113 = scmp.ne.s32.totalorder %s101, %s102
      %p114 = scmp.eq.s32.totalorder %s31, 1
      %p115 = por %p113, %p114
      %p117 = scmp.ne.s32.totalorder %s102, %s116
      %p118 = scmp.eq.s32.totalorder %s31, 0
      %p119 = por %p117, %p118
      %s121 = sadd.s32 %s120, 1
      %p124 = scmp.eq.s32.totalorder %s25, 1
      %p125 = scmp.ne.s32.totalorder %s120, %s122
      %p126 = scmp.eq.s32.totalorder %s25, 0
      %p127 = por %p125, %p126
      %p128 = scmp.ne.s32.totalorder %s120, %s122
      %p129 = scmp.eq.s32.totalorder %s30, 1
      %p130 = por %p128, %p129
      %p131 = scmp.ne.s32.totalorder %s122, %s123
      %p132 = scmp.eq.s32.totalorder %s30, 0
      %p133 = por %p131, %p132
      %p134 = scmp.ne.s32.totalorder %s122, %s123
      %p135 = scmp.eq.s32.totalorder %s31, 1
      %p136 = por %p134, %p135
      %p138 = scmp.ne.s32.totalorder %s123, %s137
      %p139 = scmp.eq.s32.totalorder %s31, 0
      %p140 = por %p138, %p139
      %s142 = sadd.s32 %s141, 1
      %p145 = scmp.eq.s32.totalorder %s25, 1
      %p146 = scmp.ne.s32.totalorder %s141, %s143
      %p147 = scmp.eq.s32.totalorder %s25, 0
      %p148 = por %p146, %p147
      %p149 = scmp.ne.s32.totalorder %s141, %s143
      %p150 = scmp.eq.s32.totalorder %s30, 1
      %p151 = por %p149, %p150
      %p152 = scmp.ne.s32.totalorder %s143, %s144
      %p153 = scmp.eq.s32.totalorder %s30, 0
      %p154 = por %p152, %p153
      %p155 = scmp.ne.s32.totalorder %s143, %s144
      %p156 = scmp.eq.s32.totalorder %s31, 1
      %p157 = por %p155, %p156
      %p159 = scmp.ne.s32.totalorder %s144, %s158
      %p160 = scmp.eq.s32.totalorder %s31, 0
      %p161 = por %p159, %p160
      %s163 = sadd.s32 %s162, 1
      %p166 = scmp.eq.s32.totalorder %s25, 1
      %p167 = scmp.ne.s32.totalorder %s162, %s164
      %p168 = scmp.eq.s32.totalorder %s25, 0
      %p169 = por %p167, %p168
      %p170 = scmp.ne.s32.totalorder %s162, %s164
      %p171 = scmp.eq.s32.totalorder %s30, 1
      %p172 = por %p170, %p171
      %p173 = scmp.ne.s32.totalorder %s164, %s165
      %p174 = scmp.eq.s32.totalorder %s30, 0
      %p175 = por %p173, %p174
      %p176 = scmp.ne.s32.totalorder %s164, %s165
      %p177 = scmp.eq.s32.totalorder %s31, 1
      %p178 = por %p176, %p177
      %p180 = scmp.ne.s32.totalorder %s165, %s179
      %p181 = scmp.eq.s32.totalorder %s31, 0
      %p182 = por %p180, %p181
      %s184 = sadd.s32 %s183, 1
      %p187 = scmp.eq.s32.totalorder %s25, 1
      %p188 = scmp.ne.s32.totalorder %s183, %s185
      %p189 = scmp.eq.s32.totalorder %s25, 0
      %p190 = por %p188, %p189
      %p191 = scmp.ne.s32.totalorder %s183, %s185
      %p192 = scmp.eq.s32.totalorder %s30, 1
      %p193 = por %p191, %p192
      %p194 = scmp.ne.s32.totalorder %s185, %s186
      %p195 = scmp.eq.s32.totalorder %s30, 0
      %p196 = por %p194, %p195
      %p197 = scmp.ne.s32.totalorder %s185, %s186
      %p198 = scmp.eq.s32.totalorder %s31, 1
      %p199 = por %p197, %p198
      %p201 = scmp.ne.s32.totalorder %s186, %s200
      %p202 = scmp.eq.s32.totalorder %s31, 0
      %p203 = por %p201, %p202
      %s205 = sadd.s32 %s204, 1
      %p208 = scmp.eq.s32.totalorder %s25, 1
      %p209 = scmp.ne.s32.totalorder %s204, %s206
      %p210 = scmp.eq.s32.totalorder %s25, 0
      %p211 = por %p209, %p210
      %p212 = scmp.ne.s32.totalorder %s204, %s206
      %p213 = scmp.eq.s32.totalorder %s30, 1
      %p214 = por %p212, %p213
      %p215 = scmp.ne.s32.totalorder %s206, %s207
      %p216 = scmp.eq.s32.totalorder %s30, 0
      %p217 = por %p215, %p216
      %p218 = scmp.ne.s32.totalorder %s206, %s207
      %p219 = scmp.eq.s32.totalorder %s31, 1
      %p220 = por %p218, %p219
      %p222 = scmp.ne.s32.totalorder %s207, %s221
      %p223 = scmp.eq.s32.totalorder %s31, 0
      %p224 = por %p222, %p223
      %s225 = ssub.s32 %s32, %s44
      %s226 = ssub.s32 %s33, %s40
      %s227 = sor.u32 %s225, %s226
      %p228 = scmp.eq.s32.totalorder %s227, 0
      %s230 = sadd.s32 %s229, 1
      %s231 = scalar_select %p228, %s229, %s230
      %p234 = pneg %p228
      %p235 = scmp.eq.s32.totalorder %s25, 1
      %p236 = por %p234, %p235
      %p237 = scmp.ne.s32.totalorder %s229, %s232
      %p238 = scmp.eq.s32.totalorder %s25, 0
      %p239 = por %p237, %p238
      %p240 = scmp.ne.s32.totalorder %s229, %s232
      %p241 = scmp.eq.s32.totalorder %s30, 1
      %p242 = por %p240, %p241
      %p243 = scmp.ne.s32.totalorder %s232, %s233
      %p244 = scmp.eq.s32.totalorder %s30, 0
      %p245 = por %p243, %p244
      %p246 = scmp.ne.s32.totalorder %s232, %s233
      %p247 = scmp.eq.s32.totalorder %s31, 1
      %p248 = por %p246, %p247
      %p250 = scmp.ne.s32.totalorder %s233, %s249
      %p251 = scmp.eq.s32.totalorder %s31, 0
      %p252 = por %p250, %p251
      %p253 = scmp.le.s32.totalorder 1, %s25
      %p254 = scmp.lt.s32.totalorder %s25, 3
      %p255 = pnand %p253, %p254
      %p256 = pneg %p255
      // Predicated region
      $region9: #{tpu_custom_call.1} parent=5 // pred_check
        _
      $region10: #{tpu_custom_call.1} parent=5 // pred_check_branch
        %258 = sbr.rel (%p255) target = $region12
      $region11: #{tpu_custom_call.1} parent=5 // pred_region
        %s259 = ssub.s32 %s25, 1
        // Predicated region
        $region13: #{tpu_custom_call.1} parent=11 // pred_check
          %p260 = pneg %p112
        $region14: #{tpu_custom_call.1} parent=11 // pred_check_branch
          %262 = sbr.rel (%p260) target = $region16
        $region15: #{tpu_custom_call.1} parent=11 // pred_region
          %s264 = ssub.s32 512, 512
          %265 = vsyncadd [#allocation8], %s264
          %s266 = sshll.u32 [#allocation9], 4
          %s267 = int_to_ptr.vmem [resolvable:$true] %s266
          %272 = dma.hbm_to_vmem [thread:$0]  %s2, 512, %s267, [#allocation8], 128, 128, 8
        $region16: #{tpu_custom_call.1} parent=11 // pred_fallthru
          _
        // Predicated region
        $region17: #{tpu_custom_call.1} parent=11 // pred_check
          %p273 = pneg %p133
        $region18: #{tpu_custom_call.1} parent=11 // pred_check_branch
          %275 = sbr.rel (%p273) target = $region20
        $region19: #{tpu_custom_call.1} parent=11 // pred_region
          %s277 = ssub.s32 512, 512
          %278 = vsyncadd [#allocation11], %s277
          %s279 = sshll.u32 [#allocation10], 4
          %s280 = int_to_ptr.vmem [resolvable:$true] %s279
          %285 = dma.hbm_to_vmem [thread:$0]  %s3, 512, %s280, [#allocation11], 128, 128, 8
        $region20: #{tpu_custom_call.1} parent=11 // pred_fallthru
          _
        // Predicated region
        $region21: #{tpu_custom_call.1} parent=11 // pred_check
          %p286 = pneg %p154
        $region22: #{tpu_custom_call.1} parent=11 // pred_check_branch
          %288 = sbr.rel (%p286) target = $region24
        $region23: #{tpu_custom_call.1} parent=11 // pred_region
          %s290 = ssub.s32 512, 512
          %291 = vsyncadd [#allocation11], %s290
          %s292 = sshll.u32 [#allocation12], 4
          %s293 = int_to_ptr.vmem [resolvable:$true] %s292
          %298 = dma.hbm_to_vmem [thread:$0]  %s4, 512, %s293, [#allocation11], 128, 128, 8
        $region24: #{tpu_custom_call.1} parent=11 // pred_fallthru
          _
        // Predicated region
        $region25: #{tpu_custom_call.1} parent=11 // pred_check
          %p299 = pneg %p175
        $region26: #{tpu_custom_call.1} parent=11 // pred_check_branch
          %301 = sbr.rel (%p299) target = $region28
        $region27: #{tpu_custom_call.1} parent=11 // pred_region
          %s303 = ssub.s32 512, 512
          %304 = vsyncadd [#allocation14], %s303
          %s305 = sshll.u32 [#allocation13], 4
          %s306 = int_to_ptr.vmem [resolvable:$true] %s305
          %311 = dma.hbm_to_vmem [thread:$0]  %s5, 512, %s306, [#allocation14], 128, 128, 8
        $region28: #{tpu_custom_call.1} parent=11 // pred_fallthru
          _
        // Predicated region
        $region29: #{tpu_custom_call.1} parent=11 // pred_check
          %p312 = pneg %p196
        $region30: #{tpu_custom_call.1} parent=11 // pred_check_branch
          %314 = sbr.rel (%p312) target = $region32
        $region31: #{tpu_custom_call.1} parent=11 // pred_region
          _
        $region32: #{tpu_custom_call.1} parent=11 // pred_fallthru
          _
        // Predicated region
        $region33: #{tpu_custom_call.1} parent=11 // pred_check
          %p315 = pneg %p217
        $region34: #{tpu_custom_call.1} parent=11 // pred_check_branch
          %317 = sbr.rel (%p315) target = $region36
        $region35: #{tpu_custom_call.1} parent=11 // pred_region
          _
        $region36: #{tpu_custom_call.1} parent=11 // pred_fallthru
          _
      $region12: #{tpu_custom_call.1} parent=5 // pred_fallthru
        _
      %p318 = scmp.lt.s32.totalorder %s25, 2
      // Predicated region
      $region37: #{tpu_custom_call.1} parent=5 // pred_check
        %p319 = pneg %p318
      $region38: #{tpu_custom_call.1} parent=5 // pred_check_branch
        %321 = sbr.rel (%p319) target = $region40
      $region39: #{tpu_custom_call.1} parent=5 // pred_region
        // Predicated region
        $region41: #{tpu_custom_call.1} parent=39 // pred_check
          %p322 = pneg %p57
        $region42: #{tpu_custom_call.1} parent=39 // pred_check_branch
          %324 = sbr.rel (%p322) target = $region44
        $region43: #{tpu_custom_call.1} parent=39 // pred_region
          %s325 = sand.u32 %s47, 1
          %s326 = scalar_lea.sflag [#allocation5], %s325
          %s327 = sand.u32 %s47, 1
          %s328 = smul.addr %s327, 8
          %s329 = scalar_lea.vmem [#allocation4], %s328
          %s331 = ssub.s32 128, 128
          %332 = vsyncadd %s326, %s331
          %s333 = smul.addr %s32, 128
          %s334 = scalar_lea.hbm %s0, %s333
          %s336 = sshll.u32 %s329, 4
          %s337 = int_to_ptr.vmem [resolvable:$true] %s336
          %339 = dma.hbm_to_vmem [thread:$0]  %s334, 128, %s337, %s326
        $region44: #{tpu_custom_call.1} parent=39 // pred_fallthru
          _
        // Predicated region
        $region45: #{tpu_custom_call.1} parent=39 // pred_check
          %p340 = pneg %p85
        $region46: #{tpu_custom_call.1} parent=39 // pred_check_branch
          %342 = sbr.rel (%p340) target = $region48
        $region47: #{tpu_custom_call.1} parent=39 // pred_region
          %s343 = sand.u32 %s25, 1
          %s344 = scalar_lea.sflag [#allocation8], %s343
          %s345 = sand.u32 %s75, 1
          %s346 = smul.addr %s345, 8
          %s347 = scalar_lea.vmem [#allocation7], %s346
          %s349 = ssub.s32 128, 128
          %350 = vsyncadd %s344, %s349
          %s351 = sadd.s32 %s33, %s32
          %s352 = smul.addr %s351, 128
          %s353 = scalar_lea.hbm %s1, %s352
          %s355 = sshll.u32 %s347, 4
          %s356 = int_to_ptr.vmem [resolvable:$true] %s355
          %358 = dma.hbm_to_vmem [thread:$0]  %s353, 128, %s356, %s344
        $region48: #{tpu_custom_call.1} parent=39 // pred_fallthru
          _
      $region40: #{tpu_custom_call.1} parent=5 // pred_fallthru
        _
      %p359 = scmp.le.s32.totalorder 1, %s25
      %p360 = scmp.lt.s32.totalorder %s25, 3
      %p361 = pnand %p359, %p360
      %p362 = pneg %p361
      // Predicated region
      $region49: #{tpu_custom_call.1} parent=5 // pred_check
        _
      $region50: #{tpu_custom_call.1} parent=5 // pred_check_branch
        %364 = sbr.rel (%p361) target = $region52
      $region51: #{tpu_custom_call.1} parent=5 // pred_region
        %s365 = ssub.s32 %s25, 1
        %s366 = sand.u32 %s50, 1
        %s367 = scalar_lea.sflag [#allocation5], %s366
        %s368 = sand.u32 %s50, 1
        %s369 = smul.addr %s368, 8
        %s370 = scalar_lea.vmem [#allocation4], %s369
        // Predicated region
        $region53: #{tpu_custom_call.1} parent=51 // pred_check
          %p371 = pneg %p63
        $region54: #{tpu_custom_call.1} parent=51 // pred_check_branch
          %373 = sbr.rel (%p371) target = $region56
        $region55: #{tpu_custom_call.1} parent=51 // pred_region
          %374 = dma.done %s367, 128
        $region56: #{tpu_custom_call.1} parent=51 // pred_fallthru
          _
        %s375 = sand.u32 %s30, 1
        %s376 = scalar_lea.sflag [#allocation8], %s375
        %s377 = sand.u32 %s78, 1
        %s378 = smul.addr %s377, 8
        %s379 = scalar_lea.vmem [#allocation7], %s378
        // Predicated region
        $region57: #{tpu_custom_call.1} parent=51 // pred_check
          %p380 = pneg %p91
        $region58: #{tpu_custom_call.1} parent=51 // pred_check_branch
          %382 = sbr.rel (%p380) target = $region60
        $region59: #{tpu_custom_call.1} parent=51 // pred_region
          %383 = dma.done %s376, 128
        $region60: #{tpu_custom_call.1} parent=51 // pred_fallthru
          _
        // Predicated region
        $region61: #{tpu_custom_call.1} parent=51 // pred_check
          %p384 = pneg %p112
        $region62: #{tpu_custom_call.1} parent=51 // pred_check_branch
          %386 = sbr.rel (%p384) target = $region64
        $region63: #{tpu_custom_call.1} parent=51 // pred_region
          %387 = dma.done [#allocation8], 512
        $region64: #{tpu_custom_call.1} parent=51 // pred_fallthru
          _
        // Predicated region
        $region65: #{tpu_custom_call.1} parent=51 // pred_check
          %p388 = pneg %p133
        $region66: #{tpu_custom_call.1} parent=51 // pred_check_branch
          %390 = sbr.rel (%p388) target = $region68
        $region67: #{tpu_custom_call.1} parent=51 // pred_region
          %391 = dma.done [#allocation11], 512
        $region68: #{tpu_custom_call.1} parent=51 // pred_fallthru
          _
        // Predicated region
        $region69: #{tpu_custom_call.1} parent=51 // pred_check
          %p392 = pneg %p154
        $region70: #{tpu_custom_call.1} parent=51 // pred_check_branch
          %394 = sbr.rel (%p392) target = $region72
        $region71: #{tpu_custom_call.1} parent=51 // pred_region
          %395 = dma.done [#allocation11], 512
        $region72: #{tpu_custom_call.1} parent=51 // pred_fallthru
          _
        // Predicated region
        $region73: #{tpu_custom_call.1} parent=51 // pred_check
          %p396 = pneg %p175
        $region74: #{tpu_custom_call.1} parent=51 // pred_check_branch
          %398 = sbr.rel (%p396) target = $region76
        $region75: #{tpu_custom_call.1} parent=51 // pred_region
          %399 = dma.done [#allocation14], 512
        $region76: #{tpu_custom_call.1} parent=51 // pred_fallthru
          _
        %s400 = sand.u32 %s50, 1
        %s401 = scalar_lea.sflag [#allocation5], %s400
        %s402 = sand.u32 %s50, 1
        %s403 = smul.addr %s402, 8
        %s404 = scalar_lea.vmem [#allocation4], %s403
        %p405 = pneg %p63
        %p406 = pneg %p60
        %s407 = sand.u32 %s30, 1
        %s408 = scalar_lea.sflag [#allocation8], %s407
        %s409 = sand.u32 %s78, 1
        %s410 = smul.addr %s409, 8
        %s411 = scalar_lea.vmem [#allocation7], %s410
        %p412 = pneg %p91
        %p413 = pneg %p88
        %p414 = pneg %p112
        %p415 = pneg %p109
        %p416 = pneg %p133
        %p417 = pneg %p130
        %p418 = pneg %p154
        %p419 = pneg %p151
        %p420 = pneg %p175
        %p421 = pneg %p172
        %p422 = pneg %p196
        %p423 = pneg %p193
        %p424 = pneg %p217
        %p425 = pneg %p214
        %p426 = pneg %p245
        %p427 = pneg %p242
        %s428 = sand.u32 %s232, 1
        %s429 = scalar_lea.sflag [#allocation6], %s428
        %s430 = sand.u32 %s232, 1
        %s431 = smul.addr %s430, 8
        %s432 = scalar_lea.vmem [#allocation15], %s431
        %p433 = scmp.eq.s32.totalorder %s35, 0
        // Predicated region
        $region77: #{tpu_custom_call.1} parent=51 // pred_check
          %p434 = pneg %p433
        $region78: #{tpu_custom_call.1} parent=51 // pred_check_branch
          %436 = sbr.rel (%p434) target = $region80
        $region79: #{tpu_custom_call.1} parent=51 // pred_region
          %v437 = vld [vmem:[%s370] sm:$0xff]
          %v438 = vld [vmem:[#allocation9] sm:$0xff]
          %v439 = vld [vmem:[#allocation9 + $0x8] sm:$0xff]
          %v440 = vld [vmem:[#allocation9 + $0x10] sm:$0xff]
          %v441 = vld [vmem:[#allocation9 + $0x18] sm:$0xff]
          %v442 = vld [vmem:[%s6] sm:$0x1]
          %v444 = vlaneseq
          %v445 = vshrl.u32 %v444, 7
          %v446 = vsub.s32 0, %v445
          %v447 = vrot.slane %v442, %v446
          %vm449 = vcmask 261120
          %v451 = vsel %vm449, %v437, 0
          %453 = vmatprep.subr.mxu0 0.0
          %454 = vmatpush1.msra.mxu0 %v438
          %455 = vmatprep.subr.mxu0 0.0
          %456 = vmatpush1.msra.mxu0 %v439
          %457 = vmatprep.subr.mxu0 0.0
          %458 = vmatpush1.msra.mxu0 %v440
          %459 = vmatprep.subr.mxu0 0.0
          %460 = vmatpush1.msra.mxu0 %v441
          %461 = vmatprep.subr.mxu0 0.0
          %462 = vmatpush1.msra.mxu0 0.0
          %463 = vmatprep.subr.mxu0 0.0
          %464 = vmatpush1.msra.mxu0 0.0
          %465 = vmatprep.subr.mxu0 0.0
          %466 = vmatpush1.msra.mxu0 0.0
          %467 = vmatprep.subr.mxu0 0.0
          %468 = vmatpush1.msra.mxu0 0.0
          %469 = vmatprep.subr.mxu0 0.0
          %470 = vmatpush1.msra.mxu0 0.0
          %471 = vmatprep.subr.mxu0 0.0
          %472 = vmatpush1.msra.mxu0 0.0
          %473 = vmatprep.subr.mxu0 0.0
          %474 = vmatpush1.msra.mxu0 0.0
          %475 = vmatprep.subr.mxu0 0.0
          %476 = vmatpush1.msra.mxu0 0.0
          %477 = vmatprep.subr.mxu0 0.0
          %478 = vmatpush1.msra.mxu0 0.0
          %479 = vmatprep.subr.mxu0 0.0
          %480 = vmatpush1.msra.mxu0 0.0
          %481 = vmatprep.subr.mxu0 0.0
          %482 = vmatpush1.msra.mxu0 0.0
          %483 = vmatprep.subr.mxu0 0.0
          %484 = vmatpush1.msra.mxu0 0.0
          %485 = vmatprep.subr.mxu0 0.0
          %486 = vmatpush1.msra.mxu0 0.0
          %487 = vmatprep.subr.mxu0 0.0
          %488 = vmatpush1.msra.mxu0 0.0
          %489 = vmatprep.subr.mxu0 0.0
          %490 = vmatpush1.msra.mxu0 0.0
          %491 = vmatprep.subr.mxu0 0.0
          %492 = vmatpush1.msra.mxu0 0.0
          %493 = vmatprep.subr.mxu0 0.0
          %494 = vmatpush1.msra.mxu0 0.0
          %495 = vmatprep.subr.mxu0 0.0
          %496 = vmatpush1.msra.mxu0 0.0
          %497 = vmatprep.subr.mxu0 0.0
          %498 = vmatpush1.msra.mxu0 0.0
          %499 = vmatprep.subr.mxu0 0.0
          %500 = vmatpush1.msra.mxu0 0.0
          %501 = vmatprep.subr.mxu0 0.0
          %502 = vmatpush1.msra.mxu0 0.0
          %503 = vmatprep.subr.mxu0 0.0
          %504 = vmatpush1.msra.mxu0 0.0
          %505 = vmatprep.subr.mxu0 0.0
          %506 = vmatpush1.msra.mxu0 0.0
          %507 = vmatprep.subr.mxu0 0.0
          %508 = vmatpush1.msra.mxu0 0.0
          %509 = vmatprep.subr.mxu0 0.0
          %510 = vmatpush1.msra.mxu0 0.0
          %511 = vmatprep.subr.mxu0 0.0
          %512 = vmatpush1.msra.mxu0 0.0
          %513 = vmatprep.subr.mxu0 0.0
          %514 = vmatpush1.msra.mxu0 0.0
          %515 = vmatprep.subr.mxu0 0.0
          %516 = vmatpush1.msra.mxu0 0.0
          %517 = vmatprep.mubr.f32.mxu0 0.0
          %518 = vmatmul.mubr.f32.gmra.mrb[0].mxu0 %v451
          %v519 = vpop.f32.mrb[0].mxu0
          %v520 = vadd.f32 %v447, %v519
          %v521 = vpop.f32.mrb[0].mxu0
          %522 = vdwg.mxu0
          %v523 = vld [vmem:[#allocation12] sm:$0xff]
          %v524 = vld [vmem:[#allocation12 + $0x8] sm:$0xff]
          %v525 = vld [vmem:[#allocation12 + $0x10] sm:$0xff]
          %v526 = vld [vmem:[#allocation12 + $0x18] sm:$0xff]
          %527 = vmatprep.subr.mxu0 0.0
          %528 = vmatpush1.msra.mxu0 %v523
          %529 = vmatprep.subr.mxu0 0.0
          %530 = vmatpush1.msra.mxu0 %v524
          %531 = vmatprep.subr.mxu0 0.0
          %532 = vmatpush1.msra.mxu0 %v525
          %533 = vmatprep.subr.mxu0 0.0
          %534 = vmatpush1.msra.mxu0 %v526
          %535 = vmatprep.subr.mxu0 0.0
          %536 = vmatpush1.msra.mxu0 0.0
          %537 = vmatprep.subr.mxu0 0.0
          %538 = vmatpush1.msra.mxu0 0.0
          %539 = vmatprep.subr.mxu0 0.0
          %540 = vmatpush1.msra.mxu0 0.0
          %541 = vmatprep.subr.mxu0 0.0
          %542 = vmatpush1.msra.mxu0 0.0
          %543 = vmatprep.subr.mxu0 0.0
          %544 = vmatpush1.msra.mxu0 0.0
          %545 = vmatprep.subr.mxu0 0.0
          %546 = vmatpush1.msra.mxu0 0.0
          %547 = vmatprep.subr.mxu0 0.0
          %548 = vmatpush1.msra.mxu0 0.0
          %549 = vmatprep.subr.mxu0 0.0
          %550 = vmatpush1.msra.mxu0 0.0
          %551 = vmatprep.subr.mxu0 0.0
          %552 = vmatpush1.msra.mxu0 0.0
          %553 = vmatprep.subr.mxu0 0.0
          %554 = vmatpush1.msra.mxu0 0.0
          %555 = vmatprep.subr.mxu0 0.0
          %556 = vmatpush1.msra.mxu0 0.0
          %557 = vmatprep.subr.mxu0 0.0
          %558 = vmatpush1.msra.mxu0 0.0
          %559 = vmatprep.subr.mxu0 0.0
          %560 = vmatpush1.msra.mxu0 0.0
          %561 = vmatprep.subr.mxu0 0.0
          %562 = vmatpush1.msra.mxu0 0.0
          %563 = vmatprep.subr.mxu0 0.0
          %564 = vmatpush1.msra.mxu0 0.0
          %565 = vmatprep.subr.mxu0 0.0
          %566 = vmatpush1.msra.mxu0 0.0
          %567 = vmatprep.subr.mxu0 0.0
          %568 = vmatpush1.msra.mxu0 0.0
          %569 = vmatprep.subr.mxu0 0.0
          %570 = vmatpush1.msra.mxu0 0.0
          %571 = vmatprep.subr.mxu0 0.0
          %572 = vmatpush1.msra.mxu0 0.0
          %573 = vmatprep.subr.mxu0 0.0
          %574 = vmatpush1.msra.mxu0 0.0
          %575 = vmatprep.subr.mxu0 0.0
          %576 = vmatpush1.msra.mxu0 0.0
          %577 = vmatprep.subr.mxu0 0.0
          %578 = vmatpush1.msra.mxu0 0.0
          %579 = vmatprep.subr.mxu0 0.0
          %580 = vmatpush1.msra.mxu0 0.0
          %581 = vmatprep.subr.mxu0 0.0
          %582 = vmatpush1.msra.mxu0 0.0
          %583 = vmatprep.subr.mxu0 0.0
          %584 = vmatpush1.msra.mxu0 0.0
          %585 = vmatprep.subr.mxu0 0.0
          %586 = vmatpush1.msra.mxu0 0.0
          %587 = vmatprep.subr.mxu0 0.0
          %588 = vmatpush1.msra.mxu0 0.0
          %589 = vmatprep.subr.mxu0 0.0
          %590 = vmatpush1.msra.mxu0 0.0
          %591 = vmatprep.mubr.f32.mxu0 0.0
          %592 = vmatmul.mubr.f32.gmra.mrb[0].mxu0 %v451
          %v593 = vpop.f32.mrb[0].mxu0
          %v594 = vadd.f32 0.0, %v593
          %v595 = vpop.f32.mrb[0].mxu0
          %596 = vdwg.mxu0
          %597 = vst.msk [vmem:[#allocation2] sm:$0xff] %vm449, %v520
          %598 = vst.msk [vmem:[#allocation3] sm:$0xff] %vm449, %v594
        $region80: #{tpu_custom_call.1} parent=51 // pred_fallthru
          _
        %v599 = vld [vmem:[%s379] sm:$0xff]
        %v600 = vld [vmem:[#allocation10] sm:$0xff]
        %v601 = vld [vmem:[#allocation10 + $0x8] sm:$0xff]
        %v602 = vld [vmem:[#allocation10 + $0x10] sm:$0xff]
        %v603 = vld [vmem:[#allocation10 + $0x18] sm:$0xff]
        %vm604 = vcmask 261120
        %v606 = vsel %vm604, %v599, 0
        %608 = vmatprep.subr.mxu0 0.0
        %609 = vmatpush1.msra.mxu0 %v600
        %610 = vmatprep.subr.mxu0 0.0
        %611 = vmatpush1.msra.mxu0 %v601
        %612 = vmatprep.subr.mxu0 0.0
        %613 = vmatpush1.msra.mxu0 %v602
        %614 = vmatprep.subr.mxu0 0.0
        %615 = vmatpush1.msra.mxu0 %v603
        %616 = vmatprep.subr.mxu0 0.0
        %617 = vmatpush1.msra.mxu0 0.0
        %618 = vmatprep.subr.mxu0 0.0
        %619 = vmatpush1.msra.mxu0 0.0
        %620 = vmatprep.subr.mxu0 0.0
        %621 = vmatpush1.msra.mxu0 0.0
        %622 = vmatprep.subr.mxu0 0.0
        %623 = vmatpush1.msra.mxu0 0.0
        %624 = vmatprep.subr.mxu0 0.0
        %625 = vmatpush1.msra.mxu0 0.0
        %626 = vmatprep.subr.mxu0 0.0
        %627 = vmatpush1.msra.mxu0 0.0
        %628 = vmatprep.subr.mxu0 0.0
        %629 = vmatpush1.msra.mxu0 0.0
        %630 = vmatprep.subr.mxu0 0.0
        %631 = vmatpush1.msra.mxu0 0.0
        %632 = vmatprep.subr.mxu0 0.0
        %633 = vmatpush1.msra.mxu0 0.0
        %634 = vmatprep.subr.mxu0 0.0
        %635 = vmatpush1.msra.mxu0 0.0
        %636 = vmatprep.subr.mxu0 0.0
        %637 = vmatpush1.msra.mxu0 0.0
        %638 = vmatprep.subr.mxu0 0.0
        %639 = vmatpush1.msra.mxu0 0.0
        %640 = vmatprep.subr.mxu0 0.0
        %641 = vmatpush1.msra.mxu0 0.0
        %642 = vmatprep.subr.mxu0 0.0
        %643 = vmatpush1.msra.mxu0 0.0
        %644 = vmatprep.subr.mxu0 0.0
        %645 = vmatpush1.msra.mxu0 0.0
        %646 = vmatprep.subr.mxu0 0.0
        %647 = vmatpush1.msra.mxu0 0.0
        %648 = vmatprep.subr.mxu0 0.0
        %649 = vmatpush1.msra.mxu0 0.0
        %650 = vmatprep.subr.mxu0 0.0
        %651 = vmatpush1.msra.mxu0 0.0
        %652 = vmatprep.subr.mxu0 0.0
        %653 = vmatpush1.msra.mxu0 0.0
        %654 = vmatprep.subr.mxu0 0.0
        %655 = vmatpush1.msra.mxu0 0.0
        %656 = vmatprep.subr.mxu0 0.0
        %657 = vmatpush1.msra.mxu0 0.0
        %658 = vmatprep.subr.mxu0 0.0
        %659 = vmatpush1.msra.mxu0 0.0
        %660 = vmatprep.subr.mxu0 0.0
        %661 = vmatpush1.msra.mxu0 0.0
        %662 = vmatprep.subr.mxu0 0.0
        %663 = vmatpush1.msra.mxu0 0.0
        %664 = vmatprep.subr.mxu0 0.0
        %665 = vmatpush1.msra.mxu0 0.0
        %666 = vmatprep.subr.mxu0 0.0
        %667 = vmatpush1.msra.mxu0 0.0
        %668 = vmatprep.subr.mxu0 0.0
        %669 = vmatpush1.msra.mxu0 0.0
        %670 = vmatprep.subr.mxu0 0.0
        %671 = vmatpush1.msra.mxu0 0.0
        %672 = vmatprep.mubr.f32.mxu0 0.0
        %673 = vmatmul.mubr.f32.gmra.mrb[0].mxu0 %v606
        %v674 = vpop.f32.mrb[0].mxu0
        %v675 = vadd.f32 0.0, %v674
        %v676 = vpop.f32.mrb[0].mxu0
        %677 = vdwg.mxu0
        %v678 = vld [vmem:[#allocation2] sm:$0xff]
        %v679 = vld [vmem:[#allocation3] sm:$0xff]
        %vm680 = vcmask 64512
        %v682 = vsel %vm680, %v678, 0
        %v685 = vsel %vm680, %v675, 0
        %687 = vmatprep.subr.mxu0 0.0
        %688 = vmatpush1.xpose.msra.mxu0 %v685
        %689 = vmatprep.subr.mxu0 0.0
        %690 = vmatpush1.xpose.msra.mxu0 0.0
        %691 = vmatprep.subr.mxu0 0.0
        %692 = vmatpush1.xpose.msra.mxu0 0.0
        %693 = vmatprep.subr.mxu0 0.0
        %694 = vmatpush1.xpose.msra.mxu0 0.0
        %695 = vmatprep.subr.mxu0 0.0
        %696 = vmatpush1.xpose.msra.mxu0 0.0
        %697 = vmatprep.subr.mxu0 0.0
        %698 = vmatpush1.xpose.msra.mxu0 0.0
        %699 = vmatprep.subr.mxu0 0.0
        %700 = vmatpush1.xpose.msra.mxu0 0.0
        %701 = vmatprep.subr.mxu0 0.0
        %702 = vmatpush1.xpose.msra.mxu0 0.0
        %703 = vmatprep.subr.mxu0 0.0
        %704 = vmatpush1.xpose.msra.mxu0 0.0
        %705 = vmatprep.subr.mxu0 0.0
        %706 = vmatpush1.xpose.msra.mxu0 0.0
        %707 = vmatprep.subr.mxu0 0.0
        %708 = vmatpush1.xpose.msra.mxu0 0.0
        %709 = vmatprep.subr.mxu0 0.0
        %710 = vmatpush1.xpose.msra.mxu0 0.0
        %711 = vmatprep.subr.mxu0 0.0
        %712 = vmatpush1.xpose.msra.mxu0 0.0
        %713 = vmatprep.subr.mxu0 0.0
        %714 = vmatpush1.xpose.msra.mxu0 0.0
        %715 = vmatprep.subr.mxu0 0.0
        %716 = vmatpush1.xpose.msra.mxu0 0.0
        %717 = vmatprep.subr.mxu0 0.0
        %718 = vmatpush1.xpose.msra.mxu0 0.0
        %719 = vmatprep.subr.mxu0 0.0
        %720 = vmatpush1.xpose.msra.mxu0 0.0
        %721 = vmatprep.subr.mxu0 0.0
        %722 = vmatpush1.xpose.msra.mxu0 0.0
        %723 = vmatprep.subr.mxu0 0.0
        %724 = vmatpush1.xpose.msra.mxu0 0.0
        %725 = vmatprep.subr.mxu0 0.0
        %726 = vmatpush1.xpose.msra.mxu0 0.0
        %727 = vmatprep.subr.mxu0 0.0
        %728 = vmatpush1.xpose.msra.mxu0 0.0
        %729 = vmatprep.subr.mxu0 0.0
        %730 = vmatpush1.xpose.msra.mxu0 0.0
        %731 = vmatprep.subr.mxu0 0.0
        %732 = vmatpush1.xpose.msra.mxu0 0.0
        %733 = vmatprep.subr.mxu0 0.0
        %734 = vmatpush1.xpose.msra.mxu0 0.0
        %735 = vmatprep.subr.mxu0 0.0
        %736 = vmatpush1.xpose.msra.mxu0 0.0
        %737 = vmatprep.subr.mxu0 0.0
        %738 = vmatpush1.xpose.msra.mxu0 0.0
        %739 = vmatprep.subr.mxu0 0.0
        %740 = vmatpush1.xpose.msra.mxu0 0.0
        %741 = vmatprep.subr.mxu0 0.0
        %742 = vmatpush1.xpose.msra.mxu0 0.0
        %743 = vmatprep.subr.mxu0 0.0
        %744 = vmatpush1.xpose.msra.mxu0 0.0
        %745 = vmatprep.subr.mxu0 0.0
        %746 = vmatpush1.xpose.msra.mxu0 0.0
        %747 = vmatprep.subr.mxu0 0.0
        %748 = vmatpush1.xpose.msra.mxu0 0.0
        %749 = vmatprep.subr.mxu0 0.0
        %750 = vmatpush1.xpose.msra.mxu0 0.0
        %751 = vmatprep.mubr.f32.mxu0 0.0
        %752 = vmatmul.mubr.f32.gmra.mrb[0].mxu0 %v682
        %v753 = vpop.f32.mrb[0].mxu0
        %v754 = vadd.f32 0.0, %v753
        %v755 = vpop.f32.mrb[0].mxu0
        %756 = vdwg.mxu0
        %v757 = vsel %vm680, %v754, -inf
        %v758 = vrot.slane %v757, 4
        %v759 = vmax.f32 %v757, %v758
        %v760 = vrot.slane %v759, 2
        %v761 = vmax.f32 %v759, %v760
        %v762 = vrot.slane %v761, 1
        %v763 = vmax.f32 %v761, %v762
        %v764 = vsub.f32 %v754, %v763
        %v765 = vmul.f32 %v764, 1.442695
        %v766 = vpow.pop %v765
        %v767 = vsel %vm680, %v766, 0.0
        %v768 = vrot.slane %v767, 4
        %v769 = vadd.f32 %v767, %v768
        %v770 = vrot.slane %v769, 2
        %v771 = vadd.f32 %v769, %v770
        %v772 = vrot.slane %v771, 1
        %v773 = vadd.f32 %v771, %v772
        %v774 = vrcp.pop %v773
        %v775 = vmul.f32 %v766, %v774
        %776 = vxpose.xlu0.b32.start [1/16] %v775, 128
        %777 = vxpose.xlu0.b32.cont [2/16] 0.0, 128
        %778 = vxpose.xlu0.b32.cont [3/16] 0.0, 128
        %779 = vxpose.xlu0.b32.cont [4/16] 0.0, 128
        %780 = vxpose.xlu0.b32.cont [5/16] 0.0, 128
        %781 = vxpose.xlu0.b32.cont [6/16] 0.0, 128
        %782 = vxpose.xlu0.b32.cont [7/16] 0.0, 128
        %783 = vxpose.xlu0.b32.cont [8/16] 0.0, 128
        %784 = vxpose.xlu0.b32.cont [9/16] 0.0, 128
        %785 = vxpose.xlu0.b32.cont [10/16] 0.0, 128
        %786 = vxpose.xlu0.b32.cont [11/16] 0.0, 128
        %787 = vxpose.xlu0.b32.cont [12/16] 0.0, 128
        %788 = vxpose.xlu0.b32.cont [13/16] 0.0, 128
        %789 = vxpose.xlu0.b32.cont [14/16] 0.0, 128
        %790 = vxpose.xlu0.b32.cont [15/16] 0.0, 128
        %791 = vxpose.xlu0.b32.end [16/16] 0.0, 128
        %v792 = vpop.trf.xlu0
        %v793 = vpop.trf.xlu0
        %v794 = vpop.trf.xlu0
        %v795 = vpop.trf.xlu0
        %v796 = vpop.trf.xlu0
        %v797 = vpop.trf.xlu0
        %v798 = vpop.trf.xlu0
        %v799 = vpop.trf.xlu0
        %v800 = vpop.trf.xlu0
        %v801 = vpop.trf.xlu0
        %v802 = vpop.trf.xlu0
        %v803 = vpop.trf.xlu0
        %v804 = vpop.trf.xlu0
        %v805 = vpop.trf.xlu0
        %v806 = vpop.trf.xlu0
        %v807 = vpop.trf.xlu0
        %v809 = vsel %vm680, %v792, 0
        %811 = vmatprep.subr.mxu0 0.0
        %812 = vmatpush1.msra.mxu0 %v679
        %813 = vmatprep.subr.mxu0 0.0
        %814 = vmatpush1.msra.mxu0 0.0
        %815 = vmatprep.subr.mxu0 0.0
        %816 = vmatpush1.msra.mxu0 0.0
        %817 = vmatprep.subr.mxu0 0.0
        %818 = vmatpush1.msra.mxu0 0.0
        %819 = vmatprep.subr.mxu0 0.0
        %820 = vmatpush1.msra.mxu0 0.0
        %821 = vmatprep.subr.mxu0 0.0
        %822 = vmatpush1.msra.mxu0 0.0
        %823 = vmatprep.subr.mxu0 0.0
        %824 = vmatpush1.msra.mxu0 0.0
        %825 = vmatprep.subr.mxu0 0.0
        %826 = vmatpush1.msra.mxu0 0.0
        %827 = vmatprep.subr.mxu0 0.0
        %828 = vmatpush1.msra.mxu0 0.0
        %829 = vmatprep.subr.mxu0 0.0
        %830 = vmatpush1.msra.mxu0 0.0
        %831 = vmatprep.subr.mxu0 0.0
        %832 = vmatpush1.msra.mxu0 0.0
        %833 = vmatprep.subr.mxu0 0.0
        %834 = vmatpush1.msra.mxu0 0.0
        %835 = vmatprep.subr.mxu0 0.0
        %836 = vmatpush1.msra.mxu0 0.0
        %837 = vmatprep.subr.mxu0 0.0
        %838 = vmatpush1.msra.mxu0 0.0
        %839 = vmatprep.subr.mxu0 0.0
        %840 = vmatpush1.msra.mxu0 0.0
        %841 = vmatprep.subr.mxu0 0.0
        %842 = vmatpush1.msra.mxu0 0.0
        %843 = vmatprep.subr.mxu0 0.0
        %844 = vmatpush1.msra.mxu0 0.0
        %845 = vmatprep.subr.mxu0 0.0
        %846 = vmatpush1.msra.mxu0 0.0
        %847 = vmatprep.subr.mxu0 0.0
        %848 = vmatpush1.msra.mxu0 0.0
        %849 = vmatprep.subr.mxu0 0.0
        %850 = vmatpush1.msra.mxu0 0.0
        %851 = vmatprep.subr.mxu0 0.0
        %852 = vmatpush1.msra.mxu0 0.0
        %853 = vmatprep.subr.mxu0 0.0
        %854 = vmatpush1.msra.mxu0 0.0
        %855 = vmatprep.subr.mxu0 0.0
        %856 = vmatpush1.msra.mxu0 0.0
        %857 = vmatprep.subr.mxu0 0.0
        %858 = vmatpush1.msra.mxu0 0.0
        %859 = vmatprep.subr.mxu0 0.0
        %860 = vmatpush1.msra.mxu0 0.0
        %861 = vmatprep.subr.mxu0 0.0
        %862 = vmatpush1.msra.mxu0 0.0
        %863 = vmatprep.subr.mxu0 0.0
        %864 = vmatpush1.msra.mxu0 0.0
        %865 = vmatprep.subr.mxu0 0.0
        %866 = vmatpush1.msra.mxu0 0.0
        %867 = vmatprep.subr.mxu0 0.0
        %868 = vmatpush1.msra.mxu0 0.0
        %869 = vmatprep.subr.mxu0 0.0
        %870 = vmatpush1.msra.mxu0 0.0
        %871 = vmatprep.subr.mxu0 0.0
        %872 = vmatpush1.msra.mxu0 0.0
        %873 = vmatprep.subr.mxu0 0.0
        %874 = vmatpush1.msra.mxu0 0.0
        %875 = vmatprep.mubr.f32.mxu0 0.0
        %876 = vmatmul.mubr.f32.gmra.mrb[0].mxu0 %v809
        %v877 = vpop.f32.mrb[0].mxu0
        %v878 = vadd.f32 0.0, %v877
        %v879 = vpop.f32.mrb[0].mxu0
        %880 = vdwg.mxu0
        %v881 = vld [vmem:[#allocation13] sm:$0xff]
        %882 = vrot.lane.b32.xlu0 %v678, 120
        %v883 = vpop.permute.xlu0 %882
        %884 = vrot.lane.b32.xlu0 %v675, 120
        %v885 = vpop.permute.xlu0 %884
        %v886 = vsel %vm680, %v883, 0
        %v888 = vsel %vm680, %v885, 0
        %890 = vmatprep.subr.mxu0 0.0
        %891 = vmatpush1.xpose.msra.mxu0 %v888
        %892 = vmatprep.subr.mxu0 0.0
        %893 = vmatpush1.xpose.msra.mxu0 0.0
        %894 = vmatprep.subr.mxu0 0.0
        %895 = vmatpush1.xpose.msra.mxu0 0.0
        %896 = vmatprep.subr.mxu0 0.0
        %897 = vmatpush1.xpose.msra.mxu0 0.0
        %898 = vmatprep.subr.mxu0 0.0
        %899 = vmatpush1.xpose.msra.mxu0 0.0
        %900 = vmatprep.subr.mxu0 0.0
        %901 = vmatpush1.xpose.msra.mxu0 0.0
        %902 = vmatprep.subr.mxu0 0.0
        %903 = vmatpush1.xpose.msra.mxu0 0.0
        %904 = vmatprep.subr.mxu0 0.0
        %905 = vmatpush1.xpose.msra.mxu0 0.0
        %906 = vmatprep.subr.mxu0 0.0
        %907 = vmatpush1.xpose.msra.mxu0 0.0
        %908 = vmatprep.subr.mxu0 0.0
        %909 = vmatpush1.xpose.msra.mxu0 0.0
        %910 = vmatprep.subr.mxu0 0.0
        %911 = vmatpush1.xpose.msra.mxu0 0.0
        %912 = vmatprep.subr.mxu0 0.0
        %913 = vmatpush1.xpose.msra.mxu0 0.0
        %914 = vmatprep.subr.mxu0 0.0
        %915 = vmatpush1.xpose.msra.mxu0 0.0
        %916 = vmatprep.subr.mxu0 0.0
        %917 = vmatpush1.xpose.msra.mxu0 0.0
        %918 = vmatprep.subr.mxu0 0.0
        %919 = vmatpush1.xpose.msra.mxu0 0.0
        %920 = vmatprep.subr.mxu0 0.0
        %921 = vmatpush1.xpose.msra.mxu0 0.0
        %922 = vmatprep.subr.mxu0 0.0
        %923 = vmatpush1.xpose.msra.mxu0 0.0
        %924 = vmatprep.subr.mxu0 0.0
        %925 = vmatpush1.xpose.msra.mxu0 0.0
        %926 = vmatprep.subr.mxu0 0.0
        %927 = vmatpush1.xpose.msra.mxu0 0.0
        %928 = vmatprep.subr.mxu0 0.0
        %929 = vmatpush1.xpose.msra.mxu0 0.0
        %930 = vmatprep.subr.mxu0 0.0
        %931 = vmatpush1.xpose.msra.mxu0 0.0
        %932 = vmatprep.subr.mxu0 0.0
        %933 = vmatpush1.xpose.msra.mxu0 0.0
        %934 = vmatprep.subr.mxu0 0.0
        %935 = vmatpush1.xpose.msra.mxu0 0.0
        %936 = vmatprep.subr.mxu0 0.0
        %937 = vmatpush1.xpose.msra.mxu0 0.0
        %938 = vmatprep.subr.mxu0 0.0
        %939 = vmatpush1.xpose.msra.mxu0 0.0
        %940 = vmatprep.subr.mxu0 0.0
        %941 = vmatpush1.xpose.msra.mxu0 0.0
        %942 = vmatprep.subr.mxu0 0.0
        %943 = vmatpush1.xpose.msra.mxu0 0.0
        %944 = vmatprep.subr.mxu0 0.0
        %945 = vmatpush1.xpose.msra.mxu0 0.0
        %946 = vmatprep.subr.mxu0 0.0
        %947 = vmatpush1.xpose.msra.mxu0 0.0
        %948 = vmatprep.subr.mxu0 0.0
        %949 = vmatpush1.xpose.msra.mxu0 0.0
        %950 = vmatprep.subr.mxu0 0.0
        %951 = vmatpush1.xpose.msra.mxu0 0.0
        %952 = vmatprep.subr.mxu0 0.0
        %953 = vmatpush1.xpose.msra.mxu0 0.0
        %954 = vmatprep.mubr.f32.mxu0 0.0
        %955 = vmatmul.mubr.f32.gmra.mrb[0].mxu0 %v886
        %v956 = vpop.f32.mrb[0].mxu0
        %v957 = vadd.f32 0.0, %v956
        %v958 = vpop.f32.mrb[0].mxu0
        %959 = vdwg.mxu0
        %v960 = vsel %vm680, %v957, -inf
        %v961 = vrot.slane %v960, 4
        %v962 = vmax.f32 %v960, %v961
        %v963 = vrot.slane %v962, 2
        %v964 = vmax.f32 %v962, %v963
        %v965 = vrot.slane %v964, 1
        %v966 = vmax.f32 %v964, %v965
        %v967 = vsub.f32 %v957, %v966
        %v968 = vmul.f32 %v967, 1.442695
        %v969 = vpow.pop %v968
        %v970 = vsel %vm680, %v969, 0.0
        %v971 = vrot.slane %v970, 4
        %v972 = vadd.f32 %v970, %v971
        %v973 = vrot.slane %v972, 2
        %v974 = vadd.f32 %v972, %v973
        %v975 = vrot.slane %v974, 1
        %v976 = vadd.f32 %v974, %v975
        %v977 = vrcp.pop %v976
        %v978 = vmul.f32 %v969, %v977
        %979 = vxpose.xlu0.b32.start [1/16] %v978, 128
        %980 = vxpose.xlu0.b32.cont [2/16] 0.0, 128
        %981 = vxpose.xlu0.b32.cont [3/16] 0.0, 128
        %982 = vxpose.xlu0.b32.cont [4/16] 0.0, 128
        %983 = vxpose.xlu0.b32.cont [5/16] 0.0, 128
        %984 = vxpose.xlu0.b32.cont [6/16] 0.0, 128
        %985 = vxpose.xlu0.b32.cont [7/16] 0.0, 128
        %986 = vxpose.xlu0.b32.cont [8/16] 0.0, 128
        %987 = vxpose.xlu0.b32.cont [9/16] 0.0, 128
        %988 = vxpose.xlu0.b32.cont [10/16] 0.0, 128
        %989 = vxpose.xlu0.b32.cont [11/16] 0.0, 128
        %990 = vxpose.xlu0.b32.cont [12/16] 0.0, 128
        %991 = vxpose.xlu0.b32.cont [13/16] 0.0, 128
        %992 = vxpose.xlu0.b32.cont [14/16] 0.0, 128
        %993 = vxpose.xlu0.b32.cont [15/16] 0.0, 128
        %994 = vxpose.xlu0.b32.end [16/16] 0.0, 128
        %v995 = vpop.trf.xlu0
        %v996 = vpop.trf.xlu0
        %v997 = vpop.trf.xlu0
        %v998 = vpop.trf.xlu0
        %v999 = vpop.trf.xlu0
        %v1000 = vpop.trf.xlu0
        %v1001 = vpop.trf.xlu0
        %v1002 = vpop.trf.xlu0
        %v1003 = vpop.trf.xlu0
        %v1004 = vpop.trf.xlu0
        %v1005 = vpop.trf.xlu0
        %v1006 = vpop.trf.xlu0
        %v1007 = vpop.trf.xlu0
        %v1008 = vpop.trf.xlu0
        %v1009 = vpop.trf.xlu0
        %v1010 = vpop.trf.xlu0
        %1012 = vrot.lane.b32.xlu0 %v679, 120
        %v1013 = vpop.permute.xlu0 %1012
        %v1016 = vsel %vm680, %v995, 0
        %1018 = vmatprep.subr.mxu0 0.0
        %1019 = vmatpush1.msra.mxu0 %v1013
        %1020 = vmatprep.subr.mxu0 0.0
        %1021 = vmatpush1.msra.mxu0 0.0
        %1022 = vmatprep.subr.mxu0 0.0
        %1023 = vmatpush1.msra.mxu0 0.0
        %1024 = vmatprep.subr.mxu0 0.0
        %1025 = vmatpush1.msra.mxu0 0.0
        %1026 = vmatprep.subr.mxu0 0.0
        %1027 = vmatpush1.msra.mxu0 0.0
        %1028 = vmatprep.subr.mxu0 0.0
        %1029 = vmatpush1.msra.mxu0 0.0
        %1030 = vmatprep.subr.mxu0 0.0
        %1031 = vmatpush1.msra.mxu0 0.0
        %1032 = vmatprep.subr.mxu0 0.0
        %1033 = vmatpush1.msra.mxu0 0.0
        %1034 = vmatprep.subr.mxu0 0.0
        %1035 = vmatpush1.msra.mxu0 0.0
        %1036 = vmatprep.subr.mxu0 0.0
        %1037 = vmatpush1.msra.mxu0 0.0
        %1038 = vmatprep.subr.mxu0 0.0
        %1039 = vmatpush1.msra.mxu0 0.0
        %1040 = vmatprep.subr.mxu0 0.0
        %1041 = vmatpush1.msra.mxu0 0.0
        %1042 = vmatprep.subr.mxu0 0.0
        %1043 = vmatpush1.msra.mxu0 0.0
        %1044 = vmatprep.subr.mxu0 0.0
        %1045 = vmatpush1.msra.mxu0 0.0
        %1046 = vmatprep.subr.mxu0 0.0
        %1047 = vmatpush1.msra.mxu0 0.0
        %1048 = vmatprep.subr.mxu0 0.0
        %1049 = vmatpush1.msra.mxu0 0.0
        %1050 = vmatprep.subr.mxu0 0.0
        %1051 = vmatpush1.msra.mxu0 0.0
        %1052 = vmatprep.subr.mxu0 0.0
        %1053 = vmatpush1.msra.mxu0 0.0
        %1054 = vmatprep.subr.mxu0 0.0
        %1055 = vmatpush1.msra.mxu0 0.0
        %1056 = vmatprep.subr.mxu0 0.0
        %1057 = vmatpush1.msra.mxu0 0.0
        %1058 = vmatprep.subr.mxu0 0.0
        %1059 = vmatpush1.msra.mxu0 0.0
        %1060 = vmatprep.subr.mxu0 0.0
        %1061 = vmatpush1.msra.mxu0 0.0
        %1062 = vmatprep.subr.mxu0 0.0
        %1063 = vmatpush1.msra.mxu0 0.0
        %1064 = vmatprep.subr.mxu0 0.0
        %1065 = vmatpush1.msra.mxu0 0.0
        %1066 = vmatprep.subr.mxu0 0.0
        %1067 = vmatpush1.msra.mxu0 0.0
        %1068 = vmatprep.subr.mxu0 0.0
        %1069 = vmatpush1.msra.mxu0 0.0
        %1070 = vmatprep.subr.mxu0 0.0
        %1071 = vmatpush1.msra.mxu0 0.0
        %1072 = vmatprep.subr.mxu0 0.0
        %1073 = vmatpush1.msra.mxu0 0.0
        %1074 = vmatprep.subr.mxu0 0.0
        %1075 = vmatpush1.msra.mxu0 0.0
        %1076 = vmatprep.subr.mxu0 0.0
        %1077 = vmatpush1.msra.mxu0 0.0
        %1078 = vmatprep.subr.mxu0 0.0
        %1079 = vmatpush1.msra.mxu0 0.0
        %1080 = vmatprep.subr.mxu0 0.0
        %1081 = vmatpush1.msra.mxu0 0.0
        %1082 = vmatprep.mubr.f32.mxu0 0.0
        %1083 = vmatmul.mubr.f32.gmra.mrb[0].mxu0 %v1016
        %v1084 = vpop.f32.mrb[0].mxu0
        %v1085 = vadd.f32 0.0, %v1084
        %v1086 = vpop.f32.mrb[0].mxu0
        %1087 = vdwg.mxu0
        %v1088 = vld [vmem:[#allocation13 + $0x8] sm:$0xff]
        %v1090 = vsel %vm680, %v1085, 0
        %1092 = vmatprep.subr.mxu0 0.0
        %1093 = vmatpush1.msra.mxu0 %v1088
        %1094 = vmatprep.subr.mxu0 0.0
        %1095 = vmatpush1.msra.mxu0 0.0
        %1096 = vmatprep.subr.mxu0 0.0
        %1097 = vmatpush1.msra.mxu0 0.0
        %1098 = vmatprep.subr.mxu0 0.0
        %1099 = vmatpush1.msra.mxu0 0.0
        %1100 = vmatprep.subr.mxu0 0.0
        %1101 = vmatpush1.msra.mxu0 0.0
        %1102 = vmatprep.subr.mxu0 0.0
        %1103 = vmatpush1.msra.mxu0 0.0
        %1104 = vmatprep.subr.mxu0 0.0
        %1105 = vmatpush1.msra.mxu0 0.0
        %1106 = vmatprep.subr.mxu0 0.0
        %1107 = vmatpush1.msra.mxu0 0.0
        %1108 = vmatprep.subr.mxu0 0.0
        %1109 = vmatpush1.msra.mxu0 0.0
        %1110 = vmatprep.subr.mxu0 0.0
        %1111 = vmatpush1.msra.mxu0 0.0
        %1112 = vmatprep.subr.mxu0 0.0
        %1113 = vmatpush1.msra.mxu0 0.0
        %1114 = vmatprep.subr.mxu0 0.0
        %1115 = vmatpush1.msra.mxu0 0.0
        %1116 = vmatprep.subr.mxu0 0.0
        %1117 = vmatpush1.msra.mxu0 0.0
        %1118 = vmatprep.subr.mxu0 0.0
        %1119 = vmatpush1.msra.mxu0 0.0
        %1120 = vmatprep.subr.mxu0 0.0
        %1121 = vmatpush1.msra.mxu0 0.0
        %1122 = vmatprep.subr.mxu0 0.0
        %1123 = vmatpush1.msra.mxu0 0.0
        %1124 = vmatprep.subr.mxu0 0.0
        %1125 = vmatpush1.msra.mxu0 0.0
        %1126 = vmatprep.subr.mxu0 0.0
        %1127 = vmatpush1.msra.mxu0 0.0
        %1128 = vmatprep.subr.mxu0 0.0
        %1129 = vmatpush1.msra.mxu0 0.0
        %1130 = vmatprep.subr.mxu0 0.0
        %1131 = vmatpush1.msra.mxu0 0.0
        %1132 = vmatprep.subr.mxu0 0.0
        %1133 = vmatpush1.msra.mxu0 0.0
        %1134 = vmatprep.subr.mxu0 0.0
        %1135 = vmatpush1.msra.mxu0 0.0
        %1136 = vmatprep.subr.mxu0 0.0
        %1137 = vmatpush1.msra.mxu0 0.0
        %1138 = vmatprep.subr.mxu0 0.0
        %1139 = vmatpush1.msra.mxu0 0.0
        %1140 = vmatprep.subr.mxu0 0.0
        %1141 = vmatpush1.msra.mxu0 0.0
        %1142 = vmatprep.subr.mxu0 0.0
        %1143 = vmatpush1.msra.mxu0 0.0
        %1144 = vmatprep.subr.mxu0 0.0
        %1145 = vmatpush1.msra.mxu0 0.0
        %1146 = vmatprep.subr.mxu0 0.0
        %1147 = vmatpush1.msra.mxu0 0.0
        %1148 = vmatprep.subr.mxu0 0.0
        %1149 = vmatpush1.msra.mxu0 0.0
        %1150 = vmatprep.subr.mxu0 0.0
        %1151 = vmatpush1.msra.mxu0 0.0
        %1152 = vmatprep.subr.mxu0 0.0
        %1153 = vmatpush1.msra.mxu0 0.0
        %1154 = vmatprep.subr.mxu0 0.0
        %1155 = vmatpush1.msra.mxu0 0.0
        %1156 = vmatprep.mubr.f32.mxu0 0.0
        %1157 = vmatmul.mubr.f32.gmra.mrb[0].mxu0 %v1090
        %v1158 = vpop.f32.mrb[0].mxu0
        %v1159 = vadd.f32 0.0, %v1158
        %v1160 = vpop.f32.mrb[0].mxu0
        %1161 = vdwg.mxu0
        %v1163 = vsel %vm680, %v878, 0
        %1165 = vmatprep.subr.mxu0 0.0
        %1166 = vmatpush1.msra.mxu0 %v881
        %1167 = vmatprep.subr.mxu0 0.0
        %1168 = vmatpush1.msra.mxu0 0.0
        %1169 = vmatprep.subr.mxu0 0.0
        %1170 = vmatpush1.msra.mxu0 0.0
        %1171 = vmatprep.subr.mxu0 0.0
        %1172 = vmatpush1.msra.mxu0 0.0
        %1173 = vmatprep.subr.mxu0 0.0
        %1174 = vmatpush1.msra.mxu0 0.0
        %1175 = vmatprep.subr.mxu0 0.0
        %1176 = vmatpush1.msra.mxu0 0.0
        %1177 = vmatprep.subr.mxu0 0.0
        %1178 = vmatpush1.msra.mxu0 0.0
        %1179 = vmatprep.subr.mxu0 0.0
        %1180 = vmatpush1.msra.mxu0 0.0
        %1181 = vmatprep.subr.mxu0 0.0
        %1182 = vmatpush1.msra.mxu0 0.0
        %1183 = vmatprep.subr.mxu0 0.0
        %1184 = vmatpush1.msra.mxu0 0.0
        %1185 = vmatprep.subr.mxu0 0.0
        %1186 = vmatpush1.msra.mxu0 0.0
        %1187 = vmatprep.subr.mxu0 0.0
        %1188 = vmatpush1.msra.mxu0 0.0
        %1189 = vmatprep.subr.mxu0 0.0
        %1190 = vmatpush1.msra.mxu0 0.0
        %1191 = vmatprep.subr.mxu0 0.0
        %1192 = vmatpush1.msra.mxu0 0.0
        %1193 = vmatprep.subr.mxu0 0.0
        %1194 = vmatpush1.msra.mxu0 0.0
        %1195 = vmatprep.subr.mxu0 0.0
        %1196 = vmatpush1.msra.mxu0 0.0
        %1197 = vmatprep.subr.mxu0 0.0
        %1198 = vmatpush1.msra.mxu0 0.0
        %1199 = vmatprep.subr.mxu0 0.0
        %1200 = vmatpush1.msra.mxu0 0.0
        %1201 = vmatprep.subr.mxu0 0.0
        %1202 = vmatpush1.msra.mxu0 0.0
        %1203 = vmatprep.subr.mxu0 0.0
        %1204 = vmatpush1.msra.mxu0 0.0
        %1205 = vmatprep.subr.mxu0 0.0
        %1206 = vmatpush1.msra.mxu0 0.0
        %1207 = vmatprep.subr.mxu0 0.0
        %1208 = vmatpush1.msra.mxu0 0.0
        %1209 = vmatprep.subr.mxu0 0.0
        %1210 = vmatpush1.msra.mxu0 0.0
        %1211 = vmatprep.subr.mxu0 0.0
        %1212 = vmatpush1.msra.mxu0 0.0
        %1213 = vmatprep.subr.mxu0 0.0
        %1214 = vmatpush1.msra.mxu0 0.0
        %1215 = vmatprep.subr.mxu0 0.0
        %1216 = vmatpush1.msra.mxu0 0.0
        %1217 = vmatprep.subr.mxu0 0.0
        %1218 = vmatpush1.msra.mxu0 0.0
        %1219 = vmatprep.subr.mxu0 0.0
        %1220 = vmatpush1.msra.mxu0 0.0
        %1221 = vmatprep.subr.mxu0 0.0
        %1222 = vmatpush1.msra.mxu0 0.0
        %1223 = vmatprep.subr.mxu0 0.0
        %1224 = vmatpush1.msra.mxu0 0.0
        %1225 = vmatprep.subr.mxu0 0.0
        %1226 = vmatpush1.msra.mxu0 0.0
        %1227 = vmatprep.subr.mxu0 0.0
        %1228 = vmatpush1.msra.mxu0 0.0
        %1229 = vmatprep.mubr.f32.mxu0 0.0
        %1230 = vmatmul.mubr.f32.gmra.mrb[0].mxu0 %v1163
        %v1231 = vpop.f32.mrb[0].mxu0
        %v1232 = vadd.f32 %v1159, %v1231
        %v1233 = vpop.f32.mrb[0].mxu0
        %1234 = vdwg.mxu0
        %1235 = vrot.lane.b32.xlu0 %v678, 112
        %v1236 = vpop.permute.xlu0 %1235
        %1237 = vrot.lane.b32.xlu0 %v675, 112
        %v1238 = vpop.permute.xlu0 %1237
        %v1239 = vsel %vm680, %v1236, 0
        %v1241 = vsel %vm680, %v1238, 0
        %1243 = vmatprep.subr.mxu0 0.0
        %1244 = vmatpush1.xpose.msra.mxu0 %v1241
        %1245 = vmatprep.subr.mxu0 0.0
        %1246 = vmatpush1.xpose.msra.mxu0 0.0
        %1247 = vmatprep.subr.mxu0 0.0
        %1248 = vmatpush1.xpose.msra.mxu0 0.0
        %1249 = vmatprep.subr.mxu0 0.0
        %1250 = vmatpush1.xpose.msra.mxu0 0.0
        %1251 = vmatprep.subr.mxu0 0.0
        %1252 = vmatpush1.xpose.msra.mxu0 0.0
        %1253 = vmatprep.subr.mxu0 0.0
        %1254 = vmatpush1.xpose.msra.mxu0 0.0
        %1255 = vmatprep.subr.mxu0 0.0
        %1256 = vmatpush1.xpose.msra.mxu0 0.0
        %1257 = vmatprep.subr.mxu0 0.0
        %1258 = vmatpush1.xpose.msra.mxu0 0.0
        %1259 = vmatprep.subr.mxu0 0.0
        %1260 = vmatpush1.xpose.msra.mxu0 0.0
        %1261 = vmatprep.subr.mxu0 0.0
        %1262 = vmatpush1.xpose.msra.mxu0 0.0
        %1263 = vmatprep.subr.mxu0 0.0
        %1264 = vmatpush1.xpose.msra.mxu0 0.0
        %1265 = vmatprep.subr.mxu0 0.0
        %1266 = vmatpush1.xpose.msra.mxu0 0.0
        %1267 = vmatprep.subr.mxu0 0.0
        %1268 = vmatpush1.xpose.msra.mxu0 0.0
        %1269 = vmatprep.subr.mxu0 0.0
        %1270 = vmatpush1.xpose.msra.mxu0 0.0
        %1271 = vmatprep.subr.mxu0 0.0
        %1272 = vmatpush1.xpose.msra.mxu0 0.0
        %1273 = vmatprep.subr.mxu0 0.0
        %1274 = vmatpush1.xpose.msra.mxu0 0.0
        %1275 = vmatprep.subr.mxu0 0.0
        %1276 = vmatpush1.xpose.msra.mxu0 0.0
        %1277 = vmatprep.subr.mxu0 0.0
        %1278 = vmatpush1.xpose.msra.mxu0 0.0
        %1279 = vmatprep.subr.mxu0 0.0
        %1280 = vmatpush1.xpose.msra.mxu0 0.0
        %1281 = vmatprep.subr.mxu0 0.0
        %1282 = vmatpush1.xpose.msra.mxu0 0.0
        %1283 = vmatprep.subr.mxu0 0.0
        %1284 = vmatpush1.xpose.msra.mxu0 0.0
        %1285 = vmatprep.subr.mxu0 0.0
        %1286 = vmatpush1.xpose.msra.mxu0 0.0
        %1287 = vmatprep.subr.mxu0 0.0
        %1288 = vmatpush1.xpose.msra.mxu0 0.0
        %1289 = vmatprep.subr.mxu0 0.0
        %1290 = vmatpush1.xpose.msra.mxu0 0.0
        %1291 = vmatprep.subr.mxu0 0.0
        %1292 = vmatpush1.xpose.msra.mxu0 0.0
        %1293 = vmatprep.subr.mxu0 0.0
        %1294 = vmatpush1.xpose.msra.mxu0 0.0
        %1295 = vmatprep.subr.mxu0 0.0
        %1296 = vmatpush1.xpose.msra.mxu0 0.0
        %1297 = vmatprep.subr.mxu0 0.0
        %1298 = vmatpush1.xpose.msra.mxu0 0.0
        %1299 = vmatprep.subr.mxu0 0.0
        %1300 = vmatpush1.xpose.msra.mxu0 0.0
        %1301 = vmatprep.subr.mxu0 0.0
        %1302 = vmatpush1.xpose.msra.mxu0 0.0
        %1303 = vmatprep.subr.mxu0 0.0
        %1304 = vmatpush1.xpose.msra.mxu0 0.0
        %1305 = vmatprep.subr.mxu0 0.0
        %1306 = vmatpush1.xpose.msra.mxu0 0.0
        %1307 = vmatprep.mubr.f32.mxu0 0.0
        %1308 = vmatmul.mubr.f32.gmra.mrb[0].mxu0 %v1239
        %v1309 = vpop.f32.mrb[0].mxu0
        %v1310 = vadd.f32 0.0, %v1309
        %v1311 = vpop.f32.mrb[0].mxu0
        %1312 = vdwg.mxu0
        %v1313 = vsel %vm680, %v1310, -inf
        %v1314 = vrot.slane %v1313, 4
        %v1315 = vmax.f32 %v1313, %v1314
        %v1316 = vrot.slane %v1315, 2
        %v1317 = vmax.f32 %v1315, %v1316
        %v1318 = vrot.slane %v1317, 1
        %v1319 = vmax.f32 %v1317, %v1318
        %v1320 = vsub.f32 %v1310, %v1319
        %v1321 = vmul.f32 %v1320, 1.442695
        %v1322 = vpow.pop %v1321
        %v1323 = vsel %vm680, %v1322, 0.0
        %v1324 = vrot.slane %v1323, 4
        %v1325 = vadd.f32 %v1323, %v1324
        %v1326 = vrot.slane %v1325, 2
        %v1327 = vadd.f32 %v1325, %v1326
        %v1328 = vrot.slane %v1327, 1
        %v1329 = vadd.f32 %v1327, %v1328
        %v1330 = vrcp.pop %v1329
        %v1331 = vmul.f32 %v1322, %v1330
        %1332 = vxpose.xlu0.b32.start [1/16] %v1331, 128
        %1333 = vxpose.xlu0.b32.cont [2/16] 0.0, 128
        %1334 = vxpose.xlu0.b32.cont [3/16] 0.0, 128
        %1335 = vxpose.xlu0.b32.cont [4/16] 0.0, 128
        %1336 = vxpose.xlu0.b32.cont [5/16] 0.0, 128
        %1337 = vxpose.xlu0.b32.cont [6/16] 0.0, 128
        %1338 = vxpose.xlu0.b32.cont [7/16] 0.0, 128
        %1339 = vxpose.xlu0.b32.cont [8/16] 0.0, 128
        %1340 = vxpose.xlu0.b32.cont [9/16] 0.0, 128
        %1341 = vxpose.xlu0.b32.cont [10/16] 0.0, 128
        %1342 = vxpose.xlu0.b32.cont [11/16] 0.0, 128
        %1343 = vxpose.xlu0.b32.cont [12/16] 0.0, 128
        %1344 = vxpose.xlu0.b32.cont [13/16] 0.0, 128
        %1345 = vxpose.xlu0.b32.cont [14/16] 0.0, 128
        %1346 = vxpose.xlu0.b32.cont [15/16] 0.0, 128
        %1347 = vxpose.xlu0.b32.end [16/16] 0.0, 128
        %v1348 = vpop.trf.xlu0
        %v1349 = vpop.trf.xlu0
        %v1350 = vpop.trf.xlu0
        %v1351 = vpop.trf.xlu0
        %v1352 = vpop.trf.xlu0
        %v1353 = vpop.trf.xlu0
        %v1354 = vpop.trf.xlu0
        %v1355 = vpop.trf.xlu0
        %v1356 = vpop.trf.xlu0
        %v1357 = vpop.trf.xlu0
        %v1358 = vpop.trf.xlu0
        %v1359 = vpop.trf.xlu0
        %v1360 = vpop.trf.xlu0
        %v1361 = vpop.trf.xlu0
        %v1362 = vpop.trf.xlu0
        %v1363 = vpop.trf.xlu0
        %1364 = vrot.lane.b32.xlu0 %v679, 112
        %v1365 = vpop.permute.xlu0 %1364
        %v1368 = vsel %vm680, %v1348, 0
        %1370 = vmatprep.subr.mxu0 0.0
        %1371 = vmatpush1.msra.mxu0 %v1365
        %1372 = vmatprep.subr.mxu0 0.0
        %1373 = vmatpush1.msra.mxu0 0.0
        %1374 = vmatprep.subr.mxu0 0.0
        %1375 = vmatpush1.msra.mxu0 0.0
        %1376 = vmatprep.subr.mxu0 0.0
        %1377 = vmatpush1.msra.mxu0 0.0
        %1378 = vmatprep.subr.mxu0 0.0
        %1379 = vmatpush1.msra.mxu0 0.0
        %1380 = vmatprep.subr.mxu0 0.0
        %1381 = vmatpush1.msra.mxu0 0.0
        %1382 = vmatprep.subr.mxu0 0.0
        %1383 = vmatpush1.msra.mxu0 0.0
        %1384 = vmatprep.subr.mxu0 0.0
        %1385 = vmatpush1.msra.mxu0 0.0
        %1386 = vmatprep.subr.mxu0 0.0
        %1387 = vmatpush1.msra.mxu0 0.0
        %1388 = vmatprep.subr.mxu0 0.0
        %1389 = vmatpush1.msra.mxu0 0.0
        %1390 = vmatprep.subr.mxu0 0.0
        %1391 = vmatpush1.msra.mxu0 0.0
        %1392 = vmatprep.subr.mxu0 0.0
        %1393 = vmatpush1.msra.mxu0 0.0
        %1394 = vmatprep.subr.mxu0 0.0
        %1395 = vmatpush1.msra.mxu0 0.0
        %1396 = vmatprep.subr.mxu0 0.0
        %1397 = vmatpush1.msra.mxu0 0.0
        %1398 = vmatprep.subr.mxu0 0.0
        %1399 = vmatpush1.msra.mxu0 0.0
        %1400 = vmatprep.subr.mxu0 0.0
        %1401 = vmatpush1.msra.mxu0 0.0
        %1402 = vmatprep.subr.mxu0 0.0
        %1403 = vmatpush1.msra.mxu0 0.0
        %1404 = vmatprep.subr.mxu0 0.0
        %1405 = vmatpush1.msra.mxu0 0.0
        %1406 = vmatprep.subr.mxu0 0.0
        %1407 = vmatpush1.msra.mxu0 0.0
        %1408 = vmatprep.subr.mxu0 0.0
        %1409 = vmatpush1.msra.mxu0 0.0
        %1410 = vmatprep.subr.mxu0 0.0
        %1411 = vmatpush1.msra.mxu0 0.0
        %1412 = vmatprep.subr.mxu0 0.0
        %1413 = vmatpush1.msra.mxu0 0.0
        %1414 = vmatprep.subr.mxu0 0.0
        %1415 = vmatpush1.msra.mxu0 0.0
        %1416 = vmatprep.subr.mxu0 0.0
        %1417 = vmatpush1.msra.mxu0 0.0
        %1418 = vmatprep.subr.mxu0 0.0
        %1419 = vmatpush1.msra.mxu0 0.0
        %1420 = vmatprep.subr.mxu0 0.0
        %1421 = vmatpush1.msra.mxu0 0.0
        %1422 = vmatprep.subr.mxu0 0.0
        %1423 = vmatpush1.msra.mxu0 0.0
        %1424 = vmatprep.subr.mxu0 0.0
        %1425 = vmatpush1.msra.mxu0 0.0
        %1426 = vmatprep.subr.mxu0 0.0
        %1427 = vmatpush1.msra.mxu0 0.0
        %1428 = vmatprep.subr.mxu0 0.0
        %1429 = vmatpush1.msra.mxu0 0.0
        %1430 = vmatprep.subr.mxu0 0.0
        %1431 = vmatpush1.msra.mxu0 0.0
        %1432 = vmatprep.subr.mxu0 0.0
        %1433 = vmatpush1.msra.mxu0 0.0
        %1434 = vmatprep.mubr.f32.mxu0 0.0
        %1435 = vmatmul.mubr.f32.gmra.mrb[0].mxu0 %v1368
        %v1436 = vpop.f32.mrb[0].mxu0
        %v1437 = vadd.f32 0.0, %v1436
        %v1438 = vpop.f32.mrb[0].mxu0
        %1439 = vdwg.mxu0
        %v1440 = vld [vmem:[#allocation13 + $0x10] sm:$0xff]
        %v1442 = vsel %vm680, %v1437, 0
        %1444 = vmatprep.subr.mxu0 0.0
        %1445 = vmatpush1.msra.mxu0 %v1440
        %1446 = vmatprep.subr.mxu0 0.0
        %1447 = vmatpush1.msra.mxu0 0.0
        %1448 = vmatprep.subr.mxu0 0.0
        %1449 = vmatpush1.msra.mxu0 0.0
        %1450 = vmatprep.subr.mxu0 0.0
        %1451 = vmatpush1.msra.mxu0 0.0
        %1452 = vmatprep.subr.mxu0 0.0
        %1453 = vmatpush1.msra.mxu0 0.0
        %1454 = vmatprep.subr.mxu0 0.0
        %1455 = vmatpush1.msra.mxu0 0.0
        %1456 = vmatprep.subr.mxu0 0.0
        %1457 = vmatpush1.msra.mxu0 0.0
        %1458 = vmatprep.subr.mxu0 0.0
        %1459 = vmatpush1.msra.mxu0 0.0
        %1460 = vmatprep.subr.mxu0 0.0
        %1461 = vmatpush1.msra.mxu0 0.0
        %1462 = vmatprep.subr.mxu0 0.0
        %1463 = vmatpush1.msra.mxu0 0.0
        %1464 = vmatprep.subr.mxu0 0.0
        %1465 = vmatpush1.msra.mxu0 0.0
        %1466 = vmatprep.subr.mxu0 0.0
        %1467 = vmatpush1.msra.mxu0 0.0
        %1468 = vmatprep.subr.mxu0 0.0
        %1469 = vmatpush1.msra.mxu0 0.0
        %1470 = vmatprep.subr.mxu0 0.0
        %1471 = vmatpush1.msra.mxu0 0.0
        %1472 = vmatprep.subr.mxu0 0.0
        %1473 = vmatpush1.msra.mxu0 0.0
        %1474 = vmatprep.subr.mxu0 0.0
        %1475 = vmatpush1.msra.mxu0 0.0
        %1476 = vmatprep.subr.mxu0 0.0
        %1477 = vmatpush1.msra.mxu0 0.0
        %1478 = vmatprep.subr.mxu0 0.0
        %1479 = vmatpush1.msra.mxu0 0.0
        %1480 = vmatprep.subr.mxu0 0.0
        %1481 = vmatpush1.msra.mxu0 0.0
        %1482 = vmatprep.subr.mxu0 0.0
        %1483 = vmatpush1.msra.mxu0 0.0
        %1484 = vmatprep.subr.mxu0 0.0
        %1485 = vmatpush1.msra.mxu0 0.0
        %1486 = vmatprep.subr.mxu0 0.0
        %1487 = vmatpush1.msra.mxu0 0.0
        %1488 = vmatprep.subr.mxu0 0.0
        %1489 = vmatpush1.msra.mxu0 0.0
        %1490 = vmatprep.subr.mxu0 0.0
        %1491 = vmatpush1.msra.mxu0 0.0
        %1492 = vmatprep.subr.mxu0 0.0
        %1493 = vmatpush1.msra.mxu0 0.0
        %1494 = vmatprep.subr.mxu0 0.0
        %1495 = vmatpush1.msra.mxu0 0.0
        %1496 = vmatprep.subr.mxu0 0.0
        %1497 = vmatpush1.msra.mxu0 0.0
        %1498 = vmatprep.subr.mxu0 0.0
        %1499 = vmatpush1.msra.mxu0 0.0
        %1500 = vmatprep.subr.mxu0 0.0
        %1501 = vmatpush1.msra.mxu0 0.0
        %1502 = vmatprep.subr.mxu0 0.0
        %1503 = vmatpush1.msra.mxu0 0.0
        %1504 = vmatprep.subr.mxu0 0.0
        %1505 = vmatpush1.msra.mxu0 0.0
        %1506 = vmatprep.subr.mxu0 0.0
        %1507 = vmatpush1.msra.mxu0 0.0
        %1508 = vmatprep.mubr.f32.mxu0 0.0
        %1509 = vmatmul.mubr.f32.gmra.mrb[0].mxu0 %v1442
        %v1510 = vpop.f32.mrb[0].mxu0
        %v1511 = vadd.f32 0.0, %v1510
        %v1512 = vpop.f32.mrb[0].mxu0
        %1513 = vdwg.mxu0
        %v1514 = vadd.f32 %v1232, %v1511
        %1515 = vrot.lane.b32.xlu0 %v678, 104
        %v1516 = vpop.permute.xlu0 %1515
        %1517 = vrot.lane.b32.xlu0 %v675, 104
        %v1518 = vpop.permute.xlu0 %1517
        %v1519 = vsel %vm680, %v1516, 0
        %v1521 = vsel %vm680, %v1518, 0
        %1523 = vmatprep.subr.mxu0 0.0
        %1524 = vmatpush1.xpose.msra.mxu0 %v1521
        %1525 = vmatprep.subr.mxu0 0.0
        %1526 = vmatpush1.xpose.msra.mxu0 0.0
        %1527 = vmatprep.subr.mxu0 0.0
        %1528 = vmatpush1.xpose.msra.mxu0 0.0
        %1529 = vmatprep.subr.mxu0 0.0
        %1530 = vmatpush1.xpose.msra.mxu0 0.0
        %1531 = vmatprep.subr.mxu0 0.0
        %1532 = vmatpush1.xpose.msra.mxu0 0.0
        %1533 = vmatprep.subr.mxu0 0.0
        %1534 = vmatpush1.xpose.msra.mxu0 0.0
        %1535 = vmatprep.subr.mxu0 0.0
        %1536 = vmatpush1.xpose.msra.mxu0 0.0
        %1537 = vmatprep.subr.mxu0 0.0
        %1538 = vmatpush1.xpose.msra.mxu0 0.0
        %1539 = vmatprep.subr.mxu0 0.0
        %1540 = vmatpush1.xpose.msra.mxu0 0.0
        %1541 = vmatprep.subr.mxu0 0.0
        %1542 = vmatpush1.xpose.msra.mxu0 0.0
        %1543 = vmatprep.subr.mxu0 0.0
        %1544 = vmatpush1.xpose.msra.mxu0 0.0
        %1545 = vmatprep.subr.mxu0 0.0
        %1546 = vmatpush1.xpose.msra.mxu0 0.0
        %1547 = vmatprep.subr.mxu0 0.0
        %1548 = vmatpush1.xpose.msra.mxu0 0.0
        %1549 = vmatprep.subr.mxu0 0.0
        %1550 = vmatpush1.xpose.msra.mxu0 0.0
        %1551 = vmatprep.subr.mxu0 0.0
        %1552 = vmatpush1.xpose.msra.mxu0 0.0
        %1553 = vmatprep.subr.mxu0 0.0
        %1554 = vmatpush1.xpose.msra.mxu0 0.0
        %1555 = vmatprep.subr.mxu0 0.0
        %1556 = vmatpush1.xpose.msra.mxu0 0.0
        %1557 = vmatprep.subr.mxu0 0.0
        %1558 = vmatpush1.xpose.msra.mxu0 0.0
        %1559 = vmatprep.subr.mxu0 0.0
        %1560 = vmatpush1.xpose.msra.mxu0 0.0
        %1561 = vmatprep.subr.mxu0 0.0
        %1562 = vmatpush1.xpose.msra.mxu0 0.0
        %1563 = vmatprep.subr.mxu0 0.0
        %1564 = vmatpush1.xpose.msra.mxu0 0.0
        %1565 = vmatprep.subr.mxu0 0.0
        %1566 = vmatpush1.xpose.msra.mxu0 0.0
        %1567 = vmatprep.subr.mxu0 0.0
        %1568 = vmatpush1.xpose.msra.mxu0 0.0
        %1569 = vmatprep.subr.mxu0 0.0
        %1570 = vmatpush1.xpose.msra.mxu0 0.0
        %1571 = vmatprep.subr.mxu0 0.0
        %1572 = vmatpush1.xpose.msra.mxu0 0.0
        %1573 = vmatprep.subr.mxu0 0.0
        %1574 = vmatpush1.xpose.msra.mxu0 0.0
        %1575 = vmatprep.subr.mxu0 0.0
        %1576 = vmatpush1.xpose.msra.mxu0 0.0
        %1577 = vmatprep.subr.mxu0 0.0
        %1578 = vmatpush1.xpose.msra.mxu0 0.0
        %1579 = vmatprep.subr.mxu0 0.0
        %1580 = vmatpush1.xpose.msra.mxu0 0.0
        %1581 = vmatprep.subr.mxu0 0.0
        %1582 = vmatpush1.xpose.msra.mxu0 0.0
        %1583 = vmatprep.subr.mxu0 0.0
        %1584 = vmatpush1.xpose.msra.mxu0 0.0
        %1585 = vmatprep.subr.mxu0 0.0
        %1586 = vmatpush1.xpose.msra.mxu0 0.0
        %1587 = vmatprep.mubr.f32.mxu0 0.0
        %1588 = vmatmul.mubr.f32.gmra.mrb[0].mxu0 %v1519
        %v1589 = vpop.f32.mrb[0].mxu0
        %v1590 = vadd.f32 0.0, %v1589
        %v1591 = vpop.f32.mrb[0].mxu0
        %1592 = vdwg.mxu0
        %v1593 = vsel %vm680, %v1590, -inf
        %v1594 = vrot.slane %v1593, 4
        %v1595 = vmax.f32 %v1593, %v1594
        %v1596 = vrot.slane %v1595, 2
        %v1597 = vmax.f32 %v1595, %v1596
        %v1598 = vrot.slane %v1597, 1
        %v1599 = vmax.f32 %v1597, %v1598
        %v1600 = vsub.f32 %v1590, %v1599
        %v1601 = vmul.f32 %v1600, 1.442695
        %v1602 = vpow.pop %v1601
        %v1603 = vsel %vm680, %v1602, 0.0
        %v1604 = vrot.slane %v1603, 4
        %v1605 = vadd.f32 %v1603, %v1604
        %v1606 = vrot.slane %v1605, 2
        %v1607 = vadd.f32 %v1605, %v1606
        %v1608 = vrot.slane %v1607, 1
        %v1609 = vadd.f32 %v1607, %v1608
        %v1610 = vrcp.pop %v1609
        %v1611 = vmul.f32 %v1602, %v1610
        %1612 = vxpose.xlu0.b32.start [1/16] %v1611, 128
        %1613 = vxpose.xlu0.b32.cont [2/16] 0.0, 128
        %1614 = vxpose.xlu0.b32.cont [3/16] 0.0, 128
        %1615 = vxpose.xlu0.b32.cont [4/16] 0.0, 128
        %1616 = vxpose.xlu0.b32.cont [5/16] 0.0, 128
        %1617 = vxpose.xlu0.b32.cont [6/16] 0.0, 128
        %1618 = vxpose.xlu0.b32.cont [7/16] 0.0, 128
        %1619 = vxpose.xlu0.b32.cont [8/16] 0.0, 128
        %1620 = vxpose.xlu0.b32.cont [9/16] 0.0, 128
        %1621 = vxpose.xlu0.b32.cont [10/16] 0.0, 128
        %1622 = vxpose.xlu0.b32.cont [11/16] 0.0, 128
        %1623 = vxpose.xlu0.b32.cont [12/16] 0.0, 128
        %1624 = vxpose.xlu0.b32.cont [13/16] 0.0, 128
        %1625 = vxpose.xlu0.b32.cont [14/16] 0.0, 128
        %1626 = vxpose.xlu0.b32.cont [15/16] 0.0, 128
        %1627 = vxpose.xlu0.b32.end [16/16] 0.0, 128
        %v1628 = vpop.trf.xlu0
        %v1629 = vpop.trf.xlu0
        %v1630 = vpop.trf.xlu0
        %v1631 = vpop.trf.xlu0
        %v1632 = vpop.trf.xlu0
        %v1633 = vpop.trf.xlu0
        %v1634 = vpop.trf.xlu0
        %v1635 = vpop.trf.xlu0
        %v1636 = vpop.trf.xlu0
        %v1637 = vpop.trf.xlu0
        %v1638 = vpop.trf.xlu0
        %v1639 = vpop.trf.xlu0
        %v1640 = vpop.trf.xlu0
        %v1641 = vpop.trf.xlu0
        %v1642 = vpop.trf.xlu0
        %v1643 = vpop.trf.xlu0
        %1644 = vrot.lane.b32.xlu0 %v679, 104
        %v1645 = vpop.permute.xlu0 %1644
        %v1648 = vsel %vm680, %v1628, 0
        %1650 = vmatprep.subr.mxu0 0.0
        %1651 = vmatpush1.msra.mxu0 %v1645
        %1652 = vmatprep.subr.mxu0 0.0
        %1653 = vmatpush1.msra.mxu0 0.0
        %1654 = vmatprep.subr.mxu0 0.0
        %1655 = vmatpush1.msra.mxu0 0.0
        %1656 = vmatprep.subr.mxu0 0.0
        %1657 = vmatpush1.msra.mxu0 0.0
        %1658 = vmatprep.subr.mxu0 0.0
        %1659 = vmatpush1.msra.mxu0 0.0
        %1660 = vmatprep.subr.mxu0 0.0
        %1661 = vmatpush1.msra.mxu0 0.0
        %1662 = vmatprep.subr.mxu0 0.0
        %1663 = vmatpush1.msra.mxu0 0.0
        %1664 = vmatprep.subr.mxu0 0.0
        %1665 = vmatpush1.msra.mxu0 0.0
        %1666 = vmatprep.subr.mxu0 0.0
        %1667 = vmatpush1.msra.mxu0 0.0
        %1668 = vmatprep.subr.mxu0 0.0
        %1669 = vmatpush1.msra.mxu0 0.0
        %1670 = vmatprep.subr.mxu0 0.0
        %1671 = vmatpush1.msra.mxu0 0.0
        %1672 = vmatprep.subr.mxu0 0.0
        %1673 = vmatpush1.msra.mxu0 0.0
        %1674 = vmatprep.subr.mxu0 0.0
        %1675 = vmatpush1.msra.mxu0 0.0
        %1676 = vmatprep.subr.mxu0 0.0
        %1677 = vmatpush1.msra.mxu0 0.0
        %1678 = vmatprep.subr.mxu0 0.0
        %1679 = vmatpush1.msra.mxu0 0.0
        %1680 = vmatprep.subr.mxu0 0.0
        %1681 = vmatpush1.msra.mxu0 0.0
        %1682 = vmatprep.subr.mxu0 0.0
        %1683 = vmatpush1.msra.mxu0 0.0
        %1684 = vmatprep.subr.mxu0 0.0
        %1685 = vmatpush1.msra.mxu0 0.0
        %1686 = vmatprep.subr.mxu0 0.0
        %1687 = vmatpush1.msra.mxu0 0.0
        %1688 = vmatprep.subr.mxu0 0.0
        %1689 = vmatpush1.msra.mxu0 0.0
        %1690 = vmatprep.subr.mxu0 0.0
        %1691 = vmatpush1.msra.mxu0 0.0
        %1692 = vmatprep.subr.mxu0 0.0
        %1693 = vmatpush1.msra.mxu0 0.0
        %1694 = vmatprep.subr.mxu0 0.0
        %1695 = vmatpush1.msra.mxu0 0.0
        %1696 = vmatprep.subr.mxu0 0.0
        %1697 = vmatpush1.msra.mxu0 0.0
        %1698 = vmatprep.subr.mxu0 0.0
        %1699 = vmatpush1.msra.mxu0 0.0
        %1700 = vmatprep.subr.mxu0 0.0
        %1701 = vmatpush1.msra.mxu0 0.0
        %1702 = vmatprep.subr.mxu0 0.0
        %1703 = vmatpush1.msra.mxu0 0.0
        %1704 = vmatprep.subr.mxu0 0.0
        %1705 = vmatpush1.msra.mxu0 0.0
        %1706 = vmatprep.subr.mxu0 0.0
        %1707 = vmatpush1.msra.mxu0 0.0
        %1708 = vmatprep.subr.mxu0 0.0
        %1709 = vmatpush1.msra.mxu0 0.0
        %1710 = vmatprep.subr.mxu0 0.0
        %1711 = vmatpush1.msra.mxu0 0.0
        %1712 = vmatprep.subr.mxu0 0.0
        %1713 = vmatpush1.msra.mxu0 0.0
        %1714 = vmatprep.mubr.f32.mxu0 0.0
        %1715 = vmatmul.mubr.f32.gmra.mrb[0].mxu0 %v1648
        %v1716 = vpop.f32.mrb[0].mxu0
        %v1717 = vadd.f32 0.0, %v1716
        %v1718 = vpop.f32.mrb[0].mxu0
        %1719 = vdwg.mxu0
        %v1720 = vld [vmem:[#allocation13 + $0x18] sm:$0xff]
        %v1722 = vsel %vm680, %v1717, 0
        %1724 = vmatprep.subr.mxu0 0.0
        %1725 = vmatpush1.msra.mxu0 %v1720
        %1726 = vmatprep.subr.mxu0 0.0
        %1727 = vmatpush1.msra.mxu0 0.0
        %1728 = vmatprep.subr.mxu0 0.0
        %1729 = vmatpush1.msra.mxu0 0.0
        %1730 = vmatprep.subr.mxu0 0.0
        %1731 = vmatpush1.msra.mxu0 0.0
        %1732 = vmatprep.subr.mxu0 0.0
        %1733 = vmatpush1.msra.mxu0 0.0
        %1734 = vmatprep.subr.mxu0 0.0
        %1735 = vmatpush1.msra.mxu0 0.0
        %1736 = vmatprep.subr.mxu0 0.0
        %1737 = vmatpush1.msra.mxu0 0.0
        %1738 = vmatprep.subr.mxu0 0.0
        %1739 = vmatpush1.msra.mxu0 0.0
        %1740 = vmatprep.subr.mxu0 0.0
        %1741 = vmatpush1.msra.mxu0 0.0
        %1742 = vmatprep.subr.mxu0 0.0
        %1743 = vmatpush1.msra.mxu0 0.0
        %1744 = vmatprep.subr.mxu0 0.0
        %1745 = vmatpush1.msra.mxu0 0.0
        %1746 = vmatprep.subr.mxu0 0.0
        %1747 = vmatpush1.msra.mxu0 0.0
        %1748 = vmatprep.subr.mxu0 0.0
        %1749 = vmatpush1.msra.mxu0 0.0
        %1750 = vmatprep.subr.mxu0 0.0
        %1751 = vmatpush1.msra.mxu0 0.0
        %1752 = vmatprep.subr.mxu0 0.0
        %1753 = vmatpush1.msra.mxu0 0.0
        %1754 = vmatprep.subr.mxu0 0.0
        %1755 = vmatpush1.msra.mxu0 0.0
        %1756 = vmatprep.subr.mxu0 0.0
        %1757 = vmatpush1.msra.mxu0 0.0
        %1758 = vmatprep.subr.mxu0 0.0
        %1759 = vmatpush1.msra.mxu0 0.0
        %1760 = vmatprep.subr.mxu0 0.0
        %1761 = vmatpush1.msra.mxu0 0.0
        %1762 = vmatprep.subr.mxu0 0.0
        %1763 = vmatpush1.msra.mxu0 0.0
        %1764 = vmatprep.subr.mxu0 0.0
        %1765 = vmatpush1.msra.mxu0 0.0
        %1766 = vmatprep.subr.mxu0 0.0
        %1767 = vmatpush1.msra.mxu0 0.0
        %1768 = vmatprep.subr.mxu0 0.0
        %1769 = vmatpush1.msra.mxu0 0.0
        %1770 = vmatprep.subr.mxu0 0.0
        %1771 = vmatpush1.msra.mxu0 0.0
        %1772 = vmatprep.subr.mxu0 0.0
        %1773 = vmatpush1.msra.mxu0 0.0
        %1774 = vmatprep.subr.mxu0 0.0
        %1775 = vmatpush1.msra.mxu0 0.0
        %1776 = vmatprep.subr.mxu0 0.0
        %1777 = vmatpush1.msra.mxu0 0.0
        %1778 = vmatprep.subr.mxu0 0.0
        %1779 = vmatpush1.msra.mxu0 0.0
        %1780 = vmatprep.subr.mxu0 0.0
        %1781 = vmatpush1.msra.mxu0 0.0
        %1782 = vmatprep.subr.mxu0 0.0
        %1783 = vmatpush1.msra.mxu0 0.0
        %1784 = vmatprep.subr.mxu0 0.0
        %1785 = vmatpush1.msra.mxu0 0.0
        %1786 = vmatprep.subr.mxu0 0.0
        %1787 = vmatpush1.msra.mxu0 0.0
        %1788 = vmatprep.mubr.f32.mxu0 0.0
        %1789 = vmatmul.mubr.f32.gmra.mrb[0].mxu0 %v1722
        %v1790 = vpop.f32.mrb[0].mxu0
        %v1791 = vadd.f32 0.0, %v1790
        %v1792 = vpop.f32.mrb[0].mxu0
        %1793 = vdwg.mxu0
        %v1794 = vadd.f32 %v1514, %v1791
        %v1795 = vld [vmem:[%s7] sm:$0x1]
        %v1797 = vlaneseq
        %v1798 = vshrl.u32 %v1797, 7
        %v1799 = vsub.s32 0, %v1798
        %v1800 = vrot.slane %v1795, %v1799
        %v1802 = vadd.f32 %v1794, %v1800
        %1803 = vst.msk [vmem:[%s432] sm:$0xff] %vm604, %v1802
        %s1804 = sand.u32 %s232, 1
        %s1805 = scalar_lea.sflag [#allocation6], %s1804
        %s1806 = sand.u32 %s232, 1
        %s1807 = smul.addr %s1806, 8
        %s1808 = scalar_lea.vmem [#allocation15], %s1807
        // Predicated region
        $region81: #{tpu_custom_call.1} parent=51 // pred_check
          %p1809 = pneg %p242
        $region82: #{tpu_custom_call.1} parent=51 // pred_check_branch
          %1811 = sbr.rel (%p1809) target = $region84
        $region83: #{tpu_custom_call.1} parent=51 // pred_region
          %s1813 = ssub.s32 128, 128
          %1814 = vsyncadd %s1805, %s1813
          %s1815 = sadd.s32 %s35, %s34
          %s1816 = smul.addr %s1815, 128
          %s1817 = scalar_lea.hbm %s8, %s1816
          %s1819 = sshll.u32 %s1808, 4
          %s1820 = int_to_ptr.vmem [resolvable:$true] %s1819
          %1822 = dma.vmem_to_hbm [thread:$0]  %s1820, 128, %s1817, %s1805
        $region84: #{tpu_custom_call.1} parent=51 // pred_fallthru
          _
      $region52: #{tpu_custom_call.1} parent=5 // pred_fallthru
        _
      %p1823 = scmp.le.s32.totalorder 2, %s25
      // Predicated region
      $region85: #{tpu_custom_call.1} parent=5 // pred_check
        %p1824 = pneg %p1823
      $region86: #{tpu_custom_call.1} parent=5 // pred_check_branch
        %1826 = sbr.rel (%p1824) target = $region88
      $region87: #{tpu_custom_call.1} parent=5 // pred_region
        %s1827 = ssub.s32 %s25, 2
        // Predicated region
        $region89: #{tpu_custom_call.1} parent=87 // pred_check
          %p1828 = pneg %p248
        $region90: #{tpu_custom_call.1} parent=87 // pred_check_branch
          %1830 = sbr.rel (%p1828) target = $region92
        $region91: #{tpu_custom_call.1} parent=87 // pred_region
          %s1831 = sand.u32 %s233, 1
          %s1832 = scalar_lea.sflag [#allocation6], %s1831
          %s1833 = sand.u32 %s233, 1
          %s1834 = smul.addr %s1833, 8
          %s1835 = scalar_lea.vmem [#allocation15], %s1834
          %1836 = dma.done %s1832, 128
        $region92: #{tpu_custom_call.1} parent=87 // pred_fallthru
          _
      $region88: #{tpu_custom_call.1} parent=5 // pred_fallthru
        _
    $region6: #{tpu_custom_call.1} parent=1 // loop_footer
      %s29 = sadd.s32 1, %s25
    $region7: #{tpu_custom_call.1} parent=1 // loop_footer_branch
      %24 = sbr.rel target = $region3
    $region8: #{tpu_custom_call.1} parent=1 // loop_exit
      _
    %1837 = vsyncpa [#allocation5], 1
    %s1838 = scalar_lea.sflag [#allocation5], 1
    %1839 = vsyncpa %s1838, 1
    %1840 = vsyncpa [#allocation8], 1
    %s1841 = scalar_lea.sflag [#allocation8], 1
    %1842 = vsyncpa %s1841, 1
    %1843 = vsyncpa [#allocation11], 1
    %1844 = vsyncpa [#allocation14], 1
    %1845 = vsyncpa [#allocation6], 1
    %s1846 = scalar_lea.sflag [#allocation6], 1
    %1847 = vsyncpa %s1846, 1

// kernel: tpu_custom_call.1
$region0: #{tpu_custom_call.1}
  #allocation0 [shape = 'u32[]', space=smem, size = 0x4, offset = 0x4, fixed_abs, tag = 'smem constant byte address 0x4 - core index']
  #allocation1 [shape = 'u32[144,128]{1,0:T(1,128)}', space=vmem, size = 0x12000, scoped, tag = 'internal scratch']
  #allocation2 [shape = 'f32[8,32]{1,0:T(8,128)}', space=vmem, size = 0x1000, scoped, tag = 'scratch operand']
  #allocation3 [shape = 'f32[8,32]{1,0:T(8,128)}', space=vmem, size = 0x1000, scoped, tag = 'scratch operand']
  %s0 = inlined_call_operand.hbm [shape: f32[2,8,32], index: 0, kind: input, shape index: {}]
  %s1 = inlined_call_operand.hbm [shape: f32[2,8,32], index: 1, kind: input, shape index: {}]
  %s2 = inlined_call_operand.hbm [shape: f32[32,32], index: 2, kind: input, shape index: {}]
  %s3 = inlined_call_operand.hbm [shape: f32[32,32], index: 3, kind: input, shape index: {}]
  %s4 = inlined_call_operand.hbm [shape: f32[32,32], index: 4, kind: input, shape index: {}]
  %s5 = inlined_call_operand.hbm [shape: f32[32,32], index: 5, kind: input, shape index: {}]
  %s6 = inlined_call_operand.vmem [shape: f32[1,32], index: 6, kind: input, shape index: {}]
  %s7 = inlined_call_operand.vmem [shape: f32[1,32], index: 7, kind: input, shape index: {}]
  %s8 = inlined_call_operand.hbm [shape: f32[2,8,32], index: 8, kind: output, shape index: {}]
  %s9 = sld [smem:[#allocation0]]
  $region93: #{tpu_custom_call.1} parent=0
    _
  %s11 = ssub.s32 1, %s9
  %s12 = scalar_select 0, %s11, %s9
  $region1: #{tpu_custom_call.1} parent=0
    #allocation4 [shape = 'u8[8192]{0}', space=vmem, size = 0x2000, scoped, tag = 'input window, operand 0']
    #allocation5 [shape = 's32[2]{0}', space=sflag, size = 0x8, scoped, tag = 'scoped memory for tpu_custom_call.1']
    #allocation6 [shape = 's32[2]{0}', space=sflag, size = 0x8, scoped, tag = 'scoped memory for tpu_custom_call.1']
    #allocation7 [shape = 'u8[8192]{0}', space=vmem, size = 0x2000, scoped, tag = 'input window, operand 1']
    #allocation8 [shape = 's32[2]{0}', space=sflag, size = 0x8, scoped, tag = 'scoped memory for tpu_custom_call.1']
    #allocation9 [shape = 'u8[16384]{0}', space=vmem, size = 0x4000, scoped, tag = 'input window, operand 2, single buffered']
    #allocation10 [shape = 'u8[16384]{0}', space=vmem, size = 0x4000, scoped, tag = 'input window, operand 3, single buffered']
    #allocation11 [shape = 's32[1]{0}', space=sflag, size = 0x4, scoped, tag = 'scoped memory for tpu_custom_call.1']
    #allocation12 [shape = 'u8[16384]{0}', space=vmem, size = 0x4000, scoped, tag = 'input window, operand 4, single buffered']
    #allocation13 [shape = 'u8[16384]{0}', space=vmem, size = 0x4000, scoped, tag = 'input window, operand 5, single buffered']
    #allocation14 [shape = 's32[1]{0}', space=sflag, size = 0x4, scoped, tag = 'scoped memory for tpu_custom_call.1']
    #allocation15 [shape = 'u8[8192]{0}', space=vmem, size = 0x2000, scoped, tag = 'output window, operand 0']
    %13 = vsyncpa [#allocation5], 0
    %s14 = scalar_lea.sflag [#allocation5], 1
    %15 = vsyncpa %s14, 0
    %16 = vsyncpa [#allocation8], 0
    %s17 = scalar_lea.sflag [#allocation8], 1
    %18 = vsyncpa %s17, 0
    %19 = vsyncpa [#allocation11], 0
    %20 = vsyncpa [#allocation14], 0
    %21 = vsyncpa [#allocation6], 0
    %s22 = scalar_lea.sflag [#allocation6], 1
    %23 = vsyncpa %s22, 0
    loop: start=0, step=1, limit=4
    $region2: #{tpu_custom_call.1} parent=1 // loop_pre_header
      _
    $region3: #{tpu_custom_call.1} parent=1 // loop_header
      %s25 = sphi 0, %s29
      %p26 = scmp.ge.s32.totalorder %s25, 4
      %s32 = sphi 0, %s44
      %s33 = sphi 0, %s40
      %s34 = sphi 0, %s32
      %s35 = sphi 0, %s33
      %s36 = sphi 0, %s34
      %s37 = sphi 0, %s35
      %s47 = sphi 0, %s49
      %s50 = sphi 0, %s47
      %s51 = sphi 0, %s50
      %s67 = sphi 0, %s51
      %s75 = sphi 0, %s77
      %s78 = sphi 0, %s75
      %s79 = sphi 0, %s78
      %s95 = sphi 0, %s79
      %s99 = sphi 0, %s99
      %s101 = sphi 0, %s99
      %s102 = sphi 0, %s101
      %s116 = sphi 0, %s102
      %s120 = sphi 0, %s120
      %s122 = sphi 0, %s120
      %s123 = sphi 0, %s122
      %s137 = sphi 0, %s123
      %s141 = sphi 0, %s141
      %s143 = sphi 0, %s141
      %s144 = sphi 0, %s143
      %s158 = sphi 0, %s144
      %s162 = sphi 0, %s162
      %s164 = sphi 0, %s162
      %s165 = sphi 0, %s164
      %s179 = sphi 0, %s165
      %s183 = sphi 0, %s183
      %s185 = sphi 0, %s183
      %s186 = sphi 0, %s185
      %s200 = sphi 0, %s186
      %s204 = sphi 0, %s204
      %s206 = sphi 0, %s204
      %s207 = sphi 0, %s206
      %s221 = sphi 0, %s207
      %s229 = sphi 0, %s231
      %s232 = sphi 0, %s229
      %s233 = sphi 0, %s232
      %s249 = sphi 0, %s233
    $region4: #{tpu_custom_call.1} parent=1 // loop_header_branch
      %28 = sbr.rel (%p26) target = $region8
    $region5: #{tpu_custom_call.1} parent=1 // loop_body
      %s30 = ssub.s32 %s25, 1
      %s31 = ssub.s32 %s25, 2
      %s38 = sadd.s32 1, %s33
      %p39 = scmp.ge.s32.totalorder %s38, 1
      %s40 = scalar_select %p39, 0, %s38
      %s41 = sadd.s32 1, %s32
      %s42 = scalar_select %p39, %s41, %s32
      %p43 = scmp.ge.s32.totalorder %s42, 2
      %s44 = scalar_select %p43, 0, %s42
      %s45 = ssub.s32 %s32, %s44
      %p46 = scmp.eq.s32.totalorder %s45, 0
      %s48 = sadd.s32 %s47, 1
      %s49 = scalar_select %p46, %s47, %s48
      %p52 = pneg %p46
      %p53 = scmp.eq.s32.totalorder %s25, 1
      %p54 = por %p52, %p53
      %p55 = scmp.ne.s32.totalorder %s47, %s50
      %p56 = scmp.eq.s32.totalorder %s25, 0
      %p57 = por %p55, %p56
      %p58 = scmp.ne.s32.totalorder %s47, %s50
      %p59 = scmp.eq.s32.totalorder %s30, 1
      %p60 = por %p58, %p59
      %p61 = scmp.ne.s32.totalorder %s50, %s51
      %p62 = scmp.eq.s32.totalorder %s30, 0
      %p63 = por %p61, %p62
      %p64 = scmp.ne.s32.totalorder %s50, %s51
      %p65 = scmp.eq.s32.totalorder %s31, 1
      %p66 = por %p64, %p65
      %p68 = scmp.ne.s32.totalorder %s51, %s67
      %p69 = scmp.eq.s32.totalorder %s31, 0
      %p70 = por %p68, %p69
      %s71 = ssub.s32 %s32, %s44
      %s72 = ssub.s32 %s33, %s40
      %s73 = sor.u32 %s71, %s72
      %p74 = scmp.eq.s32.totalorder %s73, 0
      %s76 = sadd.s32 %s75, 1
      %s77 = scalar_select %p74, %s75, %s76
      %p80 = pneg %p74
      %p81 = scmp.eq.s32.totalorder %s25, 1
      %p82 = por %p80, %p81
      %p83 = scmp.ne.s32.totalorder %s75, %s78
      %p84 = scmp.eq.s32.totalorder %s25, 0
      %p85 = por %p83, %p84
      %p86 = scmp.ne.s32.totalorder %s75, %s78
      %p87 = scmp.eq.s32.totalorder %s30, 1
      %p88 = por %p86, %p87
      %p89 = scmp.ne.s32.totalorder %s78, %s79
      %p90 = scmp.eq.s32.totalorder %s30, 0
      %p91 = por %p89, %p90
      %p92 = scmp.ne.s32.totalorder %s78, %s79
      %p93 = scmp.eq.s32.totalorder %s31, 1
      %p94 = por %p92, %p93
      %p96 = scmp.ne.s32.totalorder %s79, %s95
      %p97 = scmp.eq.s32.totalorder %s31, 0
      %p98 = por %p96, %p97
      %s100 = sadd.s32 %s99, 1
      %p103 = scmp.eq.s32.totalorder %s25, 1
      %p104 = scmp.ne.s32.totalorder %s99, %s101
      %p105 = scmp.eq.s32.totalorder %s25, 0
      %p106 = por %p104, %p105
      %p107 = scmp.ne.s32.totalorder %s99, %s101
      %p108 = scmp.eq.s32.totalorder %s30, 1
      %p109 = por %p107, %p108
      %p110 = scmp.ne.s32.totalorder %s101, %s102
      %p111 = scmp.eq.s32.totalorder %s30, 0
      %p112 = por %p110, %p111
      %p113 = scmp.ne.s32.totalorder %s101, %s102
      %p114 = scmp.eq.s32.totalorder %s31, 1
      %p115 = por %p113, %p114
      %p117 = scmp.ne.s32.totalorder %s102, %s116
      %p118 = scmp.eq.s32.totalorder %s31, 0
      %p119 = por %p117, %p118
      %s121 = sadd.s32 %s120, 1
      %p124 = scmp.eq.s32.totalorder %s25, 1
      %p125 = scmp.ne.s32.totalorder %s120, %s122
      %p126 = scmp.eq.s32.totalorder %s25, 0
      %p127 = por %p125, %p126
      %p128 = scmp.ne.s32.totalorder %s120, %s122
      %p129 = scmp.eq.s32.totalorder %s30, 1
      %p130 = por %p128, %p129
      %p131 = scmp.ne.s32.totalorder %s122, %s123
      %p132 = scmp.eq.s32.totalorder %s30, 0
      %p133 = por %p131, %p132
      %p134 = scmp.ne.s32.totalorder %s122, %s123
      %p135 = scmp.eq.s32.totalorder %s31, 1
      %p136 = por %p134, %p135
      %p138 = scmp.ne.s32.totalorder %s123, %s137
      %p139 = scmp.eq.s32.totalorder %s31, 0
      %p140 = por %p138, %p139
      %s142 = sadd.s32 %s141, 1
      %p145 = scmp.eq.s32.totalorder %s25, 1
      %p146 = scmp.ne.s32.totalorder %s141, %s143
      %p147 = scmp.eq.s32.totalorder %s25, 0
      %p148 = por %p146, %p147
      %p149 = scmp.ne.s32.totalorder %s141, %s143
      %p150 = scmp.eq.s32.totalorder %s30, 1
      %p151 = por %p149, %p150
      %p152 = scmp.ne.s32.totalorder %s143, %s144
      %p153 = scmp.eq.s32.totalorder %s30, 0
      %p154 = por %p152, %p153
      %p155 = scmp.ne.s32.totalorder %s143, %s144
      %p156 = scmp.eq.s32.totalorder %s31, 1
      %p157 = por %p155, %p156
      %p159 = scmp.ne.s32.totalorder %s144, %s158
      %p160 = scmp.eq.s32.totalorder %s31, 0
      %p161 = por %p159, %p160
      %s163 = sadd.s32 %s162, 1
      %p166 = scmp.eq.s32.totalorder %s25, 1
      %p167 = scmp.ne.s32.totalorder %s162, %s164
      %p168 = scmp.eq.s32.totalorder %s25, 0
      %p169 = por %p167, %p168
      %p170 = scmp.ne.s32.totalorder %s162, %s164
      %p171 = scmp.eq.s32.totalorder %s30, 1
      %p172 = por %p170, %p171
      %p173 = scmp.ne.s32.totalorder %s164, %s165
      %p174 = scmp.eq.s32.totalorder %s30, 0
      %p175 = por %p173, %p174
      %p176 = scmp.ne.s32.totalorder %s164, %s165
      %p177 = scmp.eq.s32.totalorder %s31, 1
      %p178 = por %p176, %p177
      %p180 = scmp.ne.s32.totalorder %s165, %s179
      %p181 = scmp.eq.s32.totalorder %s31, 0
      %p182 = por %p180, %p181
      %s184 = sadd.s32 %s183, 1
      %p187 = scmp.eq.s32.totalorder %s25, 1
      %p188 = scmp.ne.s32.totalorder %s183, %s185
      %p189 = scmp.eq.s32.totalorder %s25, 0
      %p190 = por %p188, %p189
      %p191 = scmp.ne.s32.totalorder %s183, %s185
      %p192 = scmp.eq.s32.totalorder %s30, 1
      %p193 = por %p191, %p192
      %p194 = scmp.ne.s32.totalorder %s185, %s186
      %p195 = scmp.eq.s32.totalorder %s30, 0
      %p196 = por %p194, %p195
      %p197 = scmp.ne.s32.totalorder %s185, %s186
      %p198 = scmp.eq.s32.totalorder %s31, 1
      %p199 = por %p197, %p198
      %p201 = scmp.ne.s32.totalorder %s186, %s200
      %p202 = scmp.eq.s32.totalorder %s31, 0
      %p203 = por %p201, %p202
      %s205 = sadd.s32 %s204, 1
      %p208 = scmp.eq.s32.totalorder %s25, 1
      %p209 = scmp.ne.s32.totalorder %s204, %s206
      %p210 = scmp.eq.s32.totalorder %s25, 0
      %p211 = por %p209, %p210
      %p212 = scmp.ne.s32.totalorder %s204, %s206
      %p213 = scmp.eq.s32.totalorder %s30, 1
      %p214 = por %p212, %p213
      %p215 = scmp.ne.s32.totalorder %s206, %s207
      %p216 = scmp.eq.s32.totalorder %s30, 0
      %p217 = por %p215, %p216
      %p218 = scmp.ne.s32.totalorder %s206, %s207
      %p219 = scmp.eq.s32.totalorder %s31, 1
      %p220 = por %p218, %p219
      %p222 = scmp.ne.s32.totalorder %s207, %s221
      %p223 = scmp.eq.s32.totalorder %s31, 0
      %p224 = por %p222, %p223
      %s225 = ssub.s32 %s32, %s44
      %s226 = ssub.s32 %s33, %s40
      %s227 = sor.u32 %s225, %s226
      %p228 = scmp.eq.s32.totalorder %s227, 0
      %s230 = sadd.s32 %s229, 1
      %s231 = scalar_select %p228, %s229, %s230
      %p234 = pneg %p228
      %p235 = scmp.eq.s32.totalorder %s25, 1
      %p236 = por %p234, %p235
      %p237 = scmp.ne.s32.totalorder %s229, %s232
      %p238 = scmp.eq.s32.totalorder %s25, 0
      %p239 = por %p237, %p238
      %p240 = scmp.ne.s32.totalorder %s229, %s232
      %p241 = scmp.eq.s32.totalorder %s30, 1
      %p242 = por %p240, %p241
      %p243 = scmp.ne.s32.totalorder %s232, %s233
      %p244 = scmp.eq.s32.totalorder %s30, 0
      %p245 = por %p243, %p244
      %p246 = scmp.ne.s32.totalorder %s232, %s233
      %p247 = scmp.eq.s32.totalorder %s31, 1
      %p248 = por %p246, %p247
      %p250 = scmp.ne.s32.totalorder %s233, %s249
      %p251 = scmp.eq.s32.totalorder %s31, 0
      %p252 = por %p250, %p251
      %p253 = scmp.le.s32.totalorder 1, %s25
      %p254 = scmp.lt.s32.totalorder %s25, 3
      %p255 = pnand %p253, %p254
      %p256 = pneg %p255
      // Predicated region
      $region9: #{tpu_custom_call.1} parent=5 // pred_check
        _
      $region10: #{tpu_custom_call.1} parent=5 // pred_check_branch
        %258 = sbr.rel (%p255) target = $region12
      $region11: #{tpu_custom_call.1} parent=5 // pred_region
        %s259 = ssub.s32 %s25, 1
        // Predicated region
        $region13: #{tpu_custom_call.1} parent=11 // pred_check
          %p260 = pneg %p112
        $region14: #{tpu_custom_call.1} parent=11 // pred_check_branch
          %262 = sbr.rel (%p260) target = $region16
        $region15: #{tpu_custom_call.1} parent=11 // pred_region
          %s264 = ssub.s32 512, 512
          %265 = vsyncadd [#allocation8], %s264
          %s266 = sshll.u32 [#allocation9], 4
          %s267 = int_to_ptr.vmem [resolvable:$true] %s266
          %272 = dma.hbm_to_vmem [thread:$0]  %s2, 512, %s267, [#allocation8], 128, 128, 8
        $region16: #{tpu_custom_call.1} parent=11 // pred_fallthru
          _
        // Predicated region
        $region17: #{tpu_custom_call.1} parent=11 // pred_check
          %p273 = pneg %p133
        $region18: #{tpu_custom_call.1} parent=11 // pred_check_branch
          %275 = sbr.rel (%p273) target = $region20
        $region19: #{tpu_custom_call.1} parent=11 // pred_region
          %s277 = ssub.s32 512, 512
          %278 = vsyncadd [#allocation11], %s277
          %s279 = sshll.u32 [#allocation10], 4
          %s280 = int_to_ptr.vmem [resolvable:$true] %s279
          %285 = dma.hbm_to_vmem [thread:$0]  %s3, 512, %s280, [#allocation11], 128, 128, 8
        $region20: #{tpu_custom_call.1} parent=11 // pred_fallthru
          _
        // Predicated region
        $region21: #{tpu_custom_call.1} parent=11 // pred_check
          %p286 = pneg %p154
        $region22: #{tpu_custom_call.1} parent=11 // pred_check_branch
          %288 = sbr.rel (%p286) target = $region24
        $region23: #{tpu_custom_call.1} parent=11 // pred_region
          %s290 = ssub.s32 512, 512
          %291 = vsyncadd [#allocation11], %s290
          %s292 = sshll.u32 [#allocation12], 4
          %s293 = int_to_ptr.vmem [resolvable:$true] %s292
          %298 = dma.hbm_to_vmem [thread:$0]  %s4, 512, %s293, [#allocation11], 128, 128, 8
        $region24: #{tpu_custom_call.1} parent=11 // pred_fallthru
          _
        // Predicated region
        $region25: #{tpu_custom_call.1} parent=11 // pred_check
          %p299 = pneg %p175
        $region26: #{tpu_custom_call.1} parent=11 // pred_check_branch
          %301 = sbr.rel (%p299) target = $region28
        $region27: #{tpu_custom_call.1} parent=11 // pred_region
          %s303 = ssub.s32 512, 512
          %304 = vsyncadd [#allocation14], %s303
          %s305 = sshll.u32 [#allocation13], 4
          %s306 = int_to_ptr.vmem [resolvable:$true] %s305
          %311 = dma.hbm_to_vmem [thread:$0]  %s5, 512, %s306, [#allocation14], 128, 128, 8
        $region28: #{tpu_custom_call.1} parent=11 // pred_fallthru
          _
        // Predicated region
        $region29: #{tpu_custom_call.1} parent=11 // pred_check
          %p312 = pneg %p196
        $region30: #{tpu_custom_call.1} parent=11 // pred_check_branch
          %314 = sbr.rel (%p312) target = $region32
        $region31: #{tpu_custom_call.1} parent=11 // pred_region
          _
        $region32: #{tpu_custom_call.1} parent=11 // pred_fallthru
          _
        // Predicated region
        $region33: #{tpu_custom_call.1} parent=11 // pred_check
          %p315 = pneg %p217
        $region34: #{tpu_custom_call.1} parent=11 // pred_check_branch
          %317 = sbr.rel (%p315) target = $region36
        $region35: #{tpu_custom_call.1} parent=11 // pred_region
          _
        $region36: #{tpu_custom_call.1} parent=11 // pred_fallthru
          _
      $region12: #{tpu_custom_call.1} parent=5 // pred_fallthru
        _
      %p318 = scmp.lt.s32.totalorder %s25, 2
      // Predicated region
      $region37: #{tpu_custom_call.1} parent=5 // pred_check
        %p319 = pneg %p318
      $region38: #{tpu_custom_call.1} parent=5 // pred_check_branch
        %321 = sbr.rel (%p319) target = $region40
      $region39: #{tpu_custom_call.1} parent=5 // pred_region
        // Predicated region
        $region41: #{tpu_custom_call.1} parent=39 // pred_check
          %p322 = pneg %p57
        $region42: #{tpu_custom_call.1} parent=39 // pred_check_branch
          %324 = sbr.rel (%p322) target = $region44
        $region43: #{tpu_custom_call.1} parent=39 // pred_region
          %s325 = sand.u32 %s47, 1
          %s326 = scalar_lea.sflag [#allocation5], %s325
          %s327 = sand.u32 %s47, 1
          %s328 = smul.addr %s327, 8
          %s329 = scalar_lea.vmem [#allocation4], %s328
          %s331 = ssub.s32 128, 128
          %332 = vsyncadd %s326, %s331
          %s333 = smul.addr %s32, 128
          %s334 = scalar_lea.hbm %s0, %s333
          %s336 = sshll.u32 %s329, 4
          %s337 = int_to_ptr.vmem [resolvable:$true] %s336
          %339 = dma.hbm_to_vmem [thread:$0]  %s334, 128, %s337, %s326
        $region44: #{tpu_custom_call.1} parent=39 // pred_fallthru
          _
        // Predicated region
        $region45: #{tpu_custom_call.1} parent=39 // pred_check
          %p340 = pneg %p85
        $region46: #{tpu_custom_call.1} parent=39 // pred_check_branch
          %342 = sbr.rel (%p340) target = $region48
        $region47: #{tpu_custom_call.1} parent=39 // pred_region
          %s343 = sand.u32 %s25, 1
          %s344 = scalar_lea.sflag [#allocation8], %s343
          %s345 = sand.u32 %s75, 1
          %s346 = smul.addr %s345, 8
          %s347 = scalar_lea.vmem [#allocation7], %s346
          %s349 = ssub.s32 128, 128
          %350 = vsyncadd %s344, %s349
          %s351 = sadd.s32 %s33, %s32
          %s352 = smul.addr %s351, 128
          %s353 = scalar_lea.hbm %s1, %s352
          %s355 = sshll.u32 %s347, 4
          %s356 = int_to_ptr.vmem [resolvable:$true] %s355
          %358 = dma.hbm_to_vmem [thread:$0]  %s353, 128, %s356, %s344
        $region48: #{tpu_custom_call.1} parent=39 // pred_fallthru
          _
      $region40: #{tpu_custom_call.1} parent=5 // pred_fallthru
        _
      %p359 = scmp.le.s32.totalorder 1, %s25
      %p360 = scmp.lt.s32.totalorder %s25, 3
      %p361 = pnand %p359, %p360
      %p362 = pneg %p361
      // Predicated region
      $region49: #{tpu_custom_call.1} parent=5 // pred_check
        _
      $region50: #{tpu_custom_call.1} parent=5 // pred_check_branch
        %364 = sbr.rel (%p361) target = $region52
      $region51: #{tpu_custom_call.1} parent=5 // pred_region
        %s365 = ssub.s32 %s25, 1
        %s366 = sand.u32 %s50, 1
        %s367 = scalar_lea.sflag [#allocation5], %s366
        %s368 = sand.u32 %s50, 1
        %s369 = smul.addr %s368, 8
        %s370 = scalar_lea.vmem [#allocation4], %s369
        // Predicated region
        $region53: #{tpu_custom_call.1} parent=51 // pred_check
          %p371 = pneg %p63
        $region54: #{tpu_custom_call.1} parent=51 // pred_check_branch
          %373 = sbr.rel (%p371) target = $region56
        $region55: #{tpu_custom_call.1} parent=51 // pred_region
          %374 = dma.done %s367, 128
        $region56: #{tpu_custom_call.1} parent=51 // pred_fallthru
          _
        %s375 = sand.u32 %s30, 1
        %s376 = scalar_lea.sflag [#allocation8], %s375
        %s377 = sand.u32 %s78, 1
        %s378 = smul.addr %s377, 8
        %s379 = scalar_lea.vmem [#allocation7], %s378
        // Predicated region
        $region57: #{tpu_custom_call.1} parent=51 // pred_check
          %p380 = pneg %p91
        $region58: #{tpu_custom_call.1} parent=51 // pred_check_branch
          %382 = sbr.rel (%p380) target = $region60
        $region59: #{tpu_custom_call.1} parent=51 // pred_region
          %383 = dma.done %s376, 128
        $region60: #{tpu_custom_call.1} parent=51 // pred_fallthru
          _
        // Predicated region
        $region61: #{tpu_custom_call.1} parent=51 // pred_check
          %p384 = pneg %p112
        $region62: #{tpu_custom_call.1} parent=51 // pred_check_branch
          %386 = sbr.rel (%p384) target = $region64
        $region63: #{tpu_custom_call.1} parent=51 // pred_region
          %387 = dma.done [#allocation8], 512
        $region64: #{tpu_custom_call.1} parent=51 // pred_fallthru
          _
        // Predicated region
        $region65: #{tpu_custom_call.1} parent=51 // pred_check
          %p388 = pneg %p133
        $region66: #{tpu_custom_call.1} parent=51 // pred_check_branch
          %390 = sbr.rel (%p388) target = $region68
        $region67: #{tpu_custom_call.1} parent=51 // pred_region
          %391 = dma.done [#allocation11], 512
        $region68: #{tpu_custom_call.1} parent=51 // pred_fallthru
          _
        // Predicated region
        $region69: #{tpu_custom_call.1} parent=51 // pred_check
          %p392 = pneg %p154
        $region70: #{tpu_custom_call.1} parent=51 // pred_check_branch
          %394 = sbr.rel (%p392) target = $region72
        $region71: #{tpu_custom_call.1} parent=51 // pred_region
          %395 = dma.done [#allocation11], 512
        $region72: #{tpu_custom_call.1} parent=51 // pred_fallthru
          _
        // Predicated region
        $region73: #{tpu_custom_call.1} parent=51 // pred_check
          %p396 = pneg %p175
        $region74: #{tpu_custom_call.1} parent=51 // pred_check_branch
          %398 = sbr.rel (%p396) target = $region76
        $region75: #{tpu_custom_call.1} parent=51 // pred_region
          %399 = dma.done [#allocation14], 512
        $region76: #{tpu_custom_call.1} parent=51 // pred_fallthru
          _
        %s400 = sand.u32 %s50, 1
        %s401 = scalar_lea.sflag [#allocation5], %s400
        %s402 = sand.u32 %s50, 1
        %s403 = smul.addr %s402, 8
        %s404 = scalar_lea.vmem [#allocation4], %s403
        %p405 = pneg %p63
        %p406 = pneg %p60
        %s407 = sand.u32 %s30, 1
        %s408 = scalar_lea.sflag [#allocation8], %s407
        %s409 = sand.u32 %s78, 1
        %s410 = smul.addr %s409, 8
        %s411 = scalar_lea.vmem [#allocation7], %s410
        %p412 = pneg %p91
        %p413 = pneg %p88
        %p414 = pneg %p112
        %p415 = pneg %p109
        %p416 = pneg %p133
        %p417 = pneg %p130
        %p418 = pneg %p154
        %p419 = pneg %p151
        %p420 = pneg %p175
        %p421 = pneg %p172
        %p422 = pneg %p196
        %p423 = pneg %p193
        %p424 = pneg %p217
        %p425 = pneg %p214
        %p426 = pneg %p245
        %p427 = pneg %p242
        %s428 = sand.u32 %s232, 1
        %s429 = scalar_lea.sflag [#allocation6], %s428
        %s430 = sand.u32 %s232, 1
        %s431 = smul.addr %s430, 8
        %s432 = scalar_lea.vmem [#allocation15], %s431
        %p433 = scmp.eq.s32.totalorder %s35, 0
        // Predicated region
        $region77: #{tpu_custom_call.1} parent=51 // pred_check
          %p434 = pneg %p433
        $region78: #{tpu_custom_call.1} parent=51 // pred_check_branch
          %436 = sbr.rel (%p434) target = $region80
        $region79: #{tpu_custom_call.1} parent=51 // pred_region
          %v437 = vld [vmem:[%s370] sm:$0xff]
          %v438 = vld [vmem:[#allocation9] sm:$0xff]
          %v439 = vld [vmem:[#allocation9 + $0x8] sm:$0xff]
          %v440 = vld [vmem:[#allocation9 + $0x10] sm:$0xff]
          %v441 = vld [vmem:[#allocation9 + $0x18] sm:$0xff]
          %v442 = vld [vmem:[%s6] sm:$0x1]
          %v444 = vlaneseq
          %v445 = vshrl.u32 %v444, 7
          %v446 = vsub.s32 0, %v445
          %v447 = vrot.slane %v442, %v446
          %vm449 = vcmask 261120
          %v451 = vsel %vm449, %v437, 0
          %453 = vmatprep.subr.mxu0 0.0
          %454 = vmatpush1.msra.mxu0 %v438
          %455 = vmatprep.subr.mxu0 0.0
          %456 = vmatpush1.msra.mxu0 %v439
          %457 = vmatprep.subr.mxu0 0.0
          %458 = vmatpush1.msra.mxu0 %v440
          %459 = vmatprep.subr.mxu0 0.0
          %460 = vmatpush1.msra.mxu0 %v441
          %461 = vmatprep.subr.mxu0 0.0
          %462 = vmatpush1.msra.mxu0 0.0
          %463 = vmatprep.subr.mxu0 0.0
          %464 = vmatpush1.msra.mxu0 0.0
          %465 = vmatprep.subr.mxu0 0.0
          %466 = vmatpush1.msra.mxu0 0.0
          %467 = vmatprep.subr.mxu0 0.0
          %468 = vmatpush1.msra.mxu0 0.0
          %469 = vmatprep.subr.mxu0 0.0
          %470 = vmatpush1.msra.mxu0 0.0
          %471 = vmatprep.subr.mxu0 0.0
          %472 = vmatpush1.msra.mxu0 0.0
          %473 = vmatprep.subr.mxu0 0.0
          %474 = vmatpush1.msra.mxu0 0.0
          %475 = vmatprep.subr.mxu0 0.0
          %476 = vmatpush1.msra.mxu0 0.0
          %477 = vmatprep.subr.mxu0 0.0
          %478 = vmatpush1.msra.mxu0 0.0
          %479 = vmatprep.subr.mxu0 0.0
          %480 = vmatpush1.msra.mxu0 0.0
          %481 = vmatprep.subr.mxu0 0.0
          %482 = vmatpush1.msra.mxu0 0.0
          %483 = vmatprep.subr.mxu0 0.0
          %484 = vmatpush1.msra.mxu0 0.0
          %485 = vmatprep.subr.mxu0 0.0
          %486 = vmatpush1.msra.mxu0 0.0
          %487 = vmatprep.subr.mxu0 0.0
          %488 = vmatpush1.msra.mxu0 0.0
          %489 = vmatprep.subr.mxu0 0.0
          %490 = vmatpush1.msra.mxu0 0.0
          %491 = vmatprep.subr.mxu0 0.0
          %492 = vmatpush1.msra.mxu0 0.0
          %493 = vmatprep.subr.mxu0 0.0
          %494 = vmatpush1.msra.mxu0 0.0
          %495 = vmatprep.subr.mxu0 0.0
          %496 = vmatpush1.msra.mxu0 0.0
          %497 = vmatprep.subr.mxu0 0.0
          %498 = vmatpush1.msra.mxu0 0.0
          %499 = vmatprep.subr.mxu0 0.0
          %500 = vmatpush1.msra.mxu0 0.0
          %501 = vmatprep.subr.mxu0 0.0
          %502 = vmatpush1.msra.mxu0 0.0
          %503 = vmatprep.subr.mxu0 0.0
          %504 = vmatpush1.msra.mxu0 0.0
          %505 = vmatprep.subr.mxu0 0.0
          %506 = vmatpush1.msra.mxu0 0.0
          %507 = vmatprep.subr.mxu0 0.0
          %508 = vmatpush1.msra.mxu0 0.0
          %509 = vmatprep.subr.mxu0 0.0
          %510 = vmatpush1.msra.mxu0 0.0
          %511 = vmatprep.subr.mxu0 0.0
          %512 = vmatpush1.msra.mxu0 0.0
          %513 = vmatprep.subr.mxu0 0.0
          %514 = vmatpush1.msra.mxu0 0.0
          %515 = vmatprep.subr.mxu0 0.0
          %516 = vmatpush1.msra.mxu0 0.0
          %517 = vmatprep.mubr.f32.mxu0 0.0
          %518 = vmatmul.mubr.f32.gmra.mrb[0].mxu0 %v451
          %v519 = vpop.f32.mrb[0].mxu0
          %v520 = vadd.f32 %v447, %v519
          %v521 = vpop.f32.mrb[0].mxu0
          %522 = vdwg.mxu0
          %v523 = vld [vmem:[#allocation12] sm:$0xff]
          %v524 = vld [vmem:[#allocation12 + $0x8] sm:$0xff]
          %v525 = vld [vmem:[#allocation12 + $0x10] sm:$0xff]
          %v526 = vld [vmem:[#allocation12 + $0x18] sm:$0xff]
          %527 = vmatprep.subr.mxu0 0.0
          %528 = vmatpush1.msra.mxu0 %v523
          %529 = vmatprep.subr.mxu0 0.0
          %530 = vmatpush1.msra.mxu0 %v524
          %531 = vmatprep.subr.mxu0 0.0
          %532 = vmatpush1.msra.mxu0 %v525
          %533 = vmatprep.subr.mxu0 0.0
          %534 = vmatpush1.msra.mxu0 %v526
          %535 = vmatprep.subr.mxu0 0.0
          %536 = vmatpush1.msra.mxu0 0.0
          %537 = vmatprep.subr.mxu0 0.0
          %538 = vmatpush1.msra.mxu0 0.0
          %539 = vmatprep.subr.mxu0 0.0
          %540 = vmatpush1.msra.mxu0 0.0
          %541 = vmatprep.subr.mxu0 0.0
          %542 = vmatpush1.msra.mxu0 0.0
          %543 = vmatprep.subr.mxu0 0.0
          %544 = vmatpush1.msra.mxu0 0.0
          %545 = vmatprep.subr.mxu0 0.0
          %546 = vmatpush1.msra.mxu0 0.0
          %547 = vmatprep.subr.mxu0 0.0
          %548 = vmatpush1.msra.mxu0 0.0
          %549 = vmatprep.subr.mxu0 0.0
          %550 = vmatpush1.msra.mxu0 0.0
          %551 = vmatprep.subr.mxu0 0.0
          %552 = vmatpush1.msra.mxu0 0.0
          %553 = vmatprep.subr.mxu0 0.0
          %554 = vmatpush1.msra.mxu0 0.0
          %555 = vmatprep.subr.mxu0 0.0
          %556 = vmatpush1.msra.mxu0 0.0
          %557 = vmatprep.subr.mxu0 0.0
          %558 = vmatpush1.msra.mxu0 0.0
          %559 = vmatprep.subr.mxu0 0.0
          %560 = vmatpush1.msra.mxu0 0.0
          %561 = vmatprep.subr.mxu0 0.0
          %562 = vmatpush1.msra.mxu0 0.0
          %563 = vmatprep.subr.mxu0 0.0
          %564 = vmatpush1.msra.mxu0 0.0
          %565 = vmatprep.subr.mxu0 0.0
          %566 = vmatpush1.msra.mxu0 0.0
          %567 = vmatprep.subr.mxu0 0.0
          %568 = vmatpush1.msra.mxu0 0.0
          %569 = vmatprep.subr.mxu0 0.0
          %570 = vmatpush1.msra.mxu0 0.0
          %571 = vmatprep.subr.mxu0 0.0
          %572 = vmatpush1.msra.mxu0 0.0
          %573 = vmatprep.subr.mxu0 0.0
          %574 = vmatpush1.msra.mxu0 0.0
          %575 = vmatprep.subr.mxu0 0.0
          %576 = vmatpush1.msra.mxu0 0.0
          %577 = vmatprep.subr.mxu0 0.0
          %578 = vmatpush1.msra.mxu0 0.0
          %579 = vmatprep.subr.mxu0 0.0
          %580 = vmatpush1.msra.mxu0 0.0
          %581 = vmatprep.subr.mxu0 0.0
          %582 = vmatpush1.msra.mxu0 0.0
          %583 = vmatprep.subr.mxu0 0.0
          %584 = vmatpush1.msra.mxu0 0.0
          %585 = vmatprep.subr.mxu0 0.0
          %586 = vmatpush1.msra.mxu0 0.0
          %587 = vmatprep.subr.mxu0 0.0
          %588 = vmatpush1.msra.mxu0 0.0
          %589 = vmatprep.subr.mxu0 0.0
          %590 = vmatpush1.msra.mxu0 0.0
          %591 = vmatprep.mubr.f32.mxu0 0.0
          %592 = vmatmul.mubr.f32.gmra.mrb[0].mxu0 %v451
          %v593 = vpop.f32.mrb[0].mxu0
          %v594 = vadd.f32 0.0, %v593
          %v595 = vpop.f32.mrb[0].mxu0
          %596 = vdwg.mxu0
          %597 = vst.msk [vmem:[#allocation2] sm:$0xff] %vm449, %v520
          %598 = vst.msk [vmem:[#allocation3] sm:$0xff] %vm449, %v594
        $region80: #{tpu_custom_call.1} parent=51 // pred_fallthru
          _
        %v599 = vld [vmem:[%s379] sm:$0xff]
        %v600 = vld [vmem:[#allocation10] sm:$0xff]
        %v601 = vld [vmem:[#allocation10 + $0x8] sm:$0xff]
        %v602 = vld [vmem:[#allocation10 + $0x10] sm:$0xff]
        %v603 = vld [vmem:[#allocation10 + $0x18] sm:$0xff]
        %vm604 = vcmask 261120
        %v606 = vsel %vm604, %v599, 0
        %608 = vmatprep.subr.mxu0 0.0
        %609 = vmatpush1.msra.mxu0 %v600
        %610 = vmatprep.subr.mxu0 0.0
        %611 = vmatpush1.msra.mxu0 %v601
        %612 = vmatprep.subr.mxu0 0.0
        %613 = vmatpush1.msra.mxu0 %v602
        %614 = vmatprep.subr.mxu0 0.0
        %615 = vmatpush1.msra.mxu0 %v603
        %616 = vmatprep.subr.mxu0 0.0
        %617 = vmatpush1.msra.mxu0 0.0
        %618 = vmatprep.subr.mxu0 0.0
        %619 = vmatpush1.msra.mxu0 0.0
        %620 = vmatprep.subr.mxu0 0.0
        %621 = vmatpush1.msra.mxu0 0.0
        %622 = vmatprep.subr.mxu0 0.0
        %623 = vmatpush1.msra.mxu0 0.0
        %624 = vmatprep.subr.mxu0 0.0
        %625 = vmatpush1.msra.mxu0 0.0
        %626 = vmatprep.subr.mxu0 0.0
        %627 = vmatpush1.msra.mxu0 0.0
        %628 = vmatprep.subr.mxu0 0.0
        %629 = vmatpush1.msra.mxu0 0.0
        %630 = vmatprep.subr.mxu0 0.0
        %631 = vmatpush1.msra.mxu0 0.0
        %632 = vmatprep.subr.mxu0 0.0
        %633 = vmatpush1.msra.mxu0 0.0
        %634 = vmatprep.subr.mxu0 0.0
        %635 = vmatpush1.msra.mxu0 0.0
        %636 = vmatprep.subr.mxu0 0.0
        %637 = vmatpush1.msra.mxu0 0.0
        %638 = vmatprep.subr.mxu0 0.0
        %639 = vmatpush1.msra.mxu0 0.0
        %640 = vmatprep.subr.mxu0 0.0
        %641 = vmatpush1.msra.mxu0 0.0
        %642 = vmatprep.subr.mxu0 0.0
        %643 = vmatpush1.msra.mxu0 0.0
        %644 = vmatprep.subr.mxu0 0.0
        %645 = vmatpush1.msra.mxu0 0.0
        %646 = vmatprep.subr.mxu0 0.0
        %647 = vmatpush1.msra.mxu0 0.0
        %648 = vmatprep.subr.mxu0 0.0
        %649 = vmatpush1.msra.mxu0 0.0
        %650 = vmatprep.subr.mxu0 0.0
        %651 = vmatpush1.msra.mxu0 0.0
        %652 = vmatprep.subr.mxu0 0.0
        %653 = vmatpush1.msra.mxu0 0.0
        %654 = vmatprep.subr.mxu0 0.0
        %655 = vmatpush1.msra.mxu0 0.0
        %656 = vmatprep.subr.mxu0 0.0
        %657 = vmatpush1.msra.mxu0 0.0
        %658 = vmatprep.subr.mxu0 0.0
        %659 = vmatpush1.msra.mxu0 0.0
        %660 = vmatprep.subr.mxu0 0.0
        %661 = vmatpush1.msra.mxu0 0.0
        %662 = vmatprep.subr.mxu0 0.0
        %663 = vmatpush1.msra.mxu0 0.0
        %664 = vmatprep.subr.mxu0 0.0
        %665 = vmatpush1.msra.mxu0 0.0
        %666 = vmatprep.subr.mxu0 0.0
        %667 = vmatpush1.msra.mxu0 0.0
        %668 = vmatprep.subr.mxu0 0.0
        %669 = vmatpush1.msra.mxu0 0.0
        %670 = vmatprep.subr.mxu0 0.0
        %671 = vmatpush1.msra.mxu0 0.0
        %672 = vmatprep.mubr.f32.mxu0 0.0
        %673 = vmatmul.mubr.f32.gmra.mrb[0].mxu0 %v606
        %v674 = vpop.f32.mrb[0].mxu0
        %v675 = vadd.f32 0.0, %v674
        %v676 = vpop.f32.mrb[0].mxu0
        %677 = vdwg.mxu0
        %v678 = vld [vmem:[#allocation2] sm:$0xff]
        %v679 = vld [vmem:[#allocation3] sm:$0xff]
        %vm680 = vcmask 64512
        %v682 = vsel %vm680, %v678, 0
        %v685 = vsel %vm680, %v675, 0
        %687 = vmatprep.subr.mxu0 0.0
        %688 = vmatpush1.xpose.msra.mxu0 %v685
        %689 = vmatprep.subr.mxu0 0.0
        %690 = vmatpush1.xpose.msra.mxu0 0.0
        %691 = vmatprep.subr.mxu0 0.0
        %692 = vmatpush1.xpose.msra.mxu0 0.0
        %693 = vmatprep.subr.mxu0 0.0
        %694 = vmatpush1.xpose.msra.mxu0 0.0
        %695 = vmatprep.subr.mxu0 0.0
        %696 = vmatpush1.xpose.msra.mxu0 0.0
        %697 = vmatprep.subr.mxu0 0.0
        %698 = vmatpush1.xpose.msra.mxu0 0.0
        %699 = vmatprep.subr.mxu0 0.0
        %700 = vmatpush1.xpose.msra.mxu0 0.0
        %701 = vmatprep.subr.mxu0 0.0
        %702 = vmatpush1.xpose.msra.mxu0 0.0
        %703 = vmatprep.subr.mxu0 0.0
        %704 = vmatpush1.xpose.msra.mxu0 0.0
        %705 = vmatprep.subr.mxu0 0.0
        %706 = vmatpush1.xpose.msra.mxu0 0.0
        %707 = vmatprep.subr.mxu0 0.0
        %708 = vmatpush1.xpose.msra.mxu0 0.0
        %709 = vmatprep.subr.mxu0 0.0
        %710 = vmatpush1.xpose.msra.mxu0 0.0
        %711 = vmatprep.subr.mxu0 0.0
        %712 = vmatpush1.xpose.msra.mxu0 0.0
        %713 = vmatprep.subr.mxu0 0.0
        %714 = vmatpush1.xpose.msra.mxu0 0.0
        %715 = vmatprep.subr.mxu0 0.0
        %716 = vmatpush1.xpose.msra.mxu0 0.0
        %717 = vmatprep.subr.mxu0 0.0
        %718 = vmatpush1.xpose.msra.mxu0 0.0
        %719 = vmatprep.subr.mxu0 0.0
        %720 = vmatpush1.xpose.msra.mxu0 0.0
        %721 = vmatprep.subr.mxu0 0.0
        %722 = vmatpush1.xpose.msra.mxu0 0.0
        %723 = vmatprep.subr.mxu0 0.0
        %724 = vmatpush1.xpose.msra.mxu0 0.0
        %725 = vmatprep.subr.mxu0 0.0
        %726 = vmatpush1.xpose.msra.mxu0 0.0
        %727 = vmatprep.subr.mxu0 0.0
        %728 = vmatpush1.xpose.msra.mxu0 0.0
        %729 = vmatprep.subr.mxu0 0.0
        %730 = vmatpush1.xpose.msra.mxu0 0.0
        %731 = vmatprep.subr.mxu0 0.0
        %732 = vmatpush1.xpose.msra.mxu0 0.0
        %733 = vmatprep.subr.mxu0 0.0
        %734 = vmatpush1.xpose.msra.mxu0 0.0
        %735 = vmatprep.subr.mxu0 0.0
        %736 = vmatpush1.xpose.msra.mxu0 0.0
        %737 = vmatprep.subr.mxu0 0.0
        %738 = vmatpush1.xpose.msra.mxu0 0.0
        %739 = vmatprep.subr.mxu0 0.0
        %740 = vmatpush1.xpose.msra.mxu0 0.0
        %741 = vmatprep.subr.mxu0 0.0
        %742 = vmatpush1.xpose.msra.mxu0 0.0
        %743 = vmatprep.subr.mxu0 0.0
        %744 = vmatpush1.xpose.msra.mxu0 0.0
        %745 = vmatprep.subr.mxu0 0.0
        %746 = vmatpush1.xpose.msra.mxu0 0.0
        %747 = vmatprep.subr.mxu0 0.0
        %748 = vmatpush1.xpose.msra.mxu0 0.0
        %749 = vmatprep.subr.mxu0 0.0
        %750 = vmatpush1.xpose.msra.mxu0 0.0
        %751 = vmatprep.mubr.f32.mxu0 0.0
        %752 = vmatmul.mubr.f32.gmra.mrb[0].mxu0 %v682
        %v753 = vpop.f32.mrb[0].mxu0
        %v754 = vadd.f32 0.0, %v753
        %v755 = vpop.f32.mrb[0].mxu0
        %756 = vdwg.mxu0
        %v757 = vsel %vm680, %v754, -inf
        %v758 = vrot.slane %v757, 4
        %v759 = vmax.f32 %v757, %v758
        %v760 = vrot.slane %v759, 2
        %v761 = vmax.f32 %v759, %v760
        %v762 = vrot.slane %v761, 1
        %v763 = vmax.f32 %v761, %v762
        %v764 = vsub.f32 %v754, %v763
        %v765 = vmul.f32 %v764, 1.442695
        %v766 = vpow.pop %v765
        %v767 = vsel %vm680, %v766, 0.0
        %v768 = vrot.slane %v767, 4
        %v769 = vadd.f32 %v767, %v768
        %v770 = vrot.slane %v769, 2
        %v771 = vadd.f32 %v769, %v770
        %v772 = vrot.slane %v771, 1
        %v773 = vadd.f32 %v771, %v772
        %v774 = vrcp.pop %v773
        %v775 = vmul.f32 %v766, %v774
        %776 = vxpose.xlu0.b32.start [1/16] %v775, 128
        %777 = vxpose.xlu0.b32.cont [2/16] 0.0, 128
        %778 = vxpose.xlu0.b32.cont [3/16] 0.0, 128
        %779 = vxpose.xlu0.b32.cont [4/16] 0.0, 128
        %780 = vxpose.xlu0.b32.cont [5/16] 0.0, 128
        %781 = vxpose.xlu0.b32.cont [6/16] 0.0, 128
        %782 = vxpose.xlu0.b32.cont [7/16] 0.0, 128
        %783 = vxpose.xlu0.b32.cont [8/16] 0.0, 128
        %784 = vxpose.xlu0.b32.cont [9/16] 0.0, 128
        %785 = vxpose.xlu0.b32.cont [10/16] 0.0, 128
        %786 = vxpose.xlu0.b32.cont [11/16] 0.0, 128
        %787 = vxpose.xlu0.b32.cont [12/16] 0.0, 128
        %788 = vxpose.xlu0.b32.cont [13/16] 0.0, 128
        %789 = vxpose.xlu0.b32.cont [14/16] 0.0, 128
        %790 = vxpose.xlu0.b32.cont [15/16] 0.0, 128
        %791 = vxpose.xlu0.b32.end [16/16] 0.0, 128
        %v792 = vpop.trf.xlu0
        %v793 = vpop.trf.xlu0
        %v794 = vpop.trf.xlu0
        %v795 = vpop.trf.xlu0
        %v796 = vpop.trf.xlu0
        %v797 = vpop.trf.xlu0
        %v798 = vpop.trf.xlu0
        %v799 = vpop.trf.xlu0
        %v800 = vpop.trf.xlu0
        %v801 = vpop.trf.xlu0
        %v802 = vpop.trf.xlu0
        %v803 = vpop.trf.xlu0
        %v804 = vpop.trf.xlu0
        %v805 = vpop.trf.xlu0
        %v806 = vpop.trf.xlu0
        %v807 = vpop.trf.xlu0
        %v809 = vsel %vm680, %v792, 0
        %811 = vmatprep.subr.mxu0 0.0
        %812 = vmatpush1.msra.mxu0 %v679
        %813 = vmatprep.subr.mxu0 0.0
        %814 = vmatpush1.msra.mxu0 0.0
        %815 = vmatprep.subr.mxu0 0.0
        %816 = vmatpush1.msra.mxu0 0.0
        %817 = vmatprep.subr.mxu0 0.0
        %818 = vmatpush1.msra.mxu0 0.0
        %819 = vmatprep.subr.mxu0 0.0
        %820 = vmatpush1.msra.mxu0 0.0
        %821 = vmatprep.subr.mxu0 0.0
        %822 = vmatpush1.msra.mxu0 0.0
        %823 = vmatprep.subr.mxu0 0.0
        %824 = vmatpush1.msra.mxu0 0.0
        %825 = vmatprep.subr.mxu0 0.0
        %826 = vmatpush1.msra.mxu0 0.0
        %827 = vmatprep.subr.mxu0 0.0
        %828 = vmatpush1.msra.mxu0 0.0
        %829 = vmatprep.subr.mxu0 0.0
        %830 = vmatpush1.msra.mxu0 0.0
        %831 = vmatprep.subr.mxu0 0.0
        %832 = vmatpush1.msra.mxu0 0.0
        %833 = vmatprep.subr.mxu0 0.0
        %834 = vmatpush1.msra.mxu0 0.0
        %835 = vmatprep.subr.mxu0 0.0
        %836 = vmatpush1.msra.mxu0 0.0
        %837 = vmatprep.subr.mxu0 0.0
        %838 = vmatpush1.msra.mxu0 0.0
        %839 = vmatprep.subr.mxu0 0.0
        %840 = vmatpush1.msra.mxu0 0.0
        %841 = vmatprep.subr.mxu0 0.0
        %842 = vmatpush1.msra.mxu0 0.0
        %843 = vmatprep.subr.mxu0 0.0
        %844 = vmatpush1.msra.mxu0 0.0
        %845 = vmatprep.subr.mxu0 0.0
        %846 = vmatpush1.msra.mxu0 0.0
        %847 = vmatprep.subr.mxu0 0.0
        %848 = vmatpush1.msra.mxu0 0.0
        %849 = vmatprep.subr.mxu0 0.0
        %850 = vmatpush1.msra.mxu0 0.0
        %851 = vmatprep.subr.mxu0 0.0
        %852 = vmatpush1.msra.mxu0 0.0
        %853 = vmatprep.subr.mxu0 0.0
        %854 = vmatpush1.msra.mxu0 0.0
        %855 = vmatprep.subr.mxu0 0.0
        %856 = vmatpush1.msra.mxu0 0.0
        %857 = vmatprep.subr.mxu0 0.0
        %858 = vmatpush1.msra.mxu0 0.0
        %859 = vmatprep.subr.mxu0 0.0
        %860 = vmatpush1.msra.mxu0 0.0
        %861 = vmatprep.subr.mxu0 0.0
        %862 = vmatpush1.msra.mxu0 0.0
        %863 = vmatprep.subr.mxu0 0.0
        %864 = vmatpush1.msra.mxu0 0.0
        %865 = vmatprep.subr.mxu0 0.0
        %866 = vmatpush1.msra.mxu0 0.0
        %867 = vmatprep.subr.mxu0 0.0
        %868 = vmatpush1.msra.mxu0 0.0
        %869 = vmatprep.subr.mxu0 0.0
        %870 = vmatpush1.msra.mxu0 0.0
        %871 = vmatprep.subr.mxu0 0.0
        %872 = vmatpush1.msra.mxu0 0.0
        %873 = vmatprep.subr.mxu0 0.0
        %874 = vmatpush1.msra.mxu0 0.0
        %875 = vmatprep.mubr.f32.mxu0 0.0
        %876 = vmatmul.mubr.f32.gmra.mrb[0].mxu0 %v809
        %v877 = vpop.f32.mrb[0].mxu0
        %v878 = vadd.f32 0.0, %v877
        %v879 = vpop.f32.mrb[0].mxu0
        %880 = vdwg.mxu0
        %v881 = vld [vmem:[#allocation13] sm:$0xff]
        %882 = vrot.lane.b32.xlu0 %v678, 120
        %v883 = vpop.permute.xlu0 %882
        %884 = vrot.lane.b32.xlu0 %v675, 120
        %v885 = vpop.permute.xlu0 %884
        %v886 = vsel %vm680, %v883, 0
        %v888 = vsel %vm680, %v885, 0
        %890 = vmatprep.subr.mxu0 0.0
        %891 = vmatpush1.xpose.msra.mxu0 %v888
        %892 = vmatprep.subr.mxu0 0.0
        %893 = vmatpush1.xpose.msra.mxu0 0.0
        %894 = vmatprep.subr.mxu0 0.0
        %895 = vmatpush1.xpose.msra.mxu0 0.0
        %896 = vmatprep.subr.mxu0 0.0
        %897 = vmatpush1.xpose.msra.mxu0 0.0
        %898 = vmatprep.subr.mxu0 0.0
        %899 = vmatpush1.xpose.msra.mxu0 0.0
        %900 = vmatprep.subr.mxu0 0.0
        %901 = vmatpush1.xpose.msra.mxu0 0.0
        %902 = vmatprep.subr.mxu0 0.0
        %903 = vmatpush1.xpose.msra.mxu0 0.0
        %904 = vmatprep.subr.mxu0 0.0
        %905 = vmatpush1.xpose.msra.mxu0 0.0
        %906 = vmatprep.subr.mxu0 0.0
        %907 = vmatpush1.xpose.msra.mxu0 0.0
        %908 = vmatprep.subr.mxu0 0.0
        %909 = vmatpush1.xpose.msra.mxu0 0.0
        %910 = vmatprep.subr.mxu0 0.0
        %911 = vmatpush1.xpose.msra.mxu0 0.0
        %912 = vmatprep.subr.mxu0 0.0
        %913 = vmatpush1.xpose.msra.mxu0 0.0
        %914 = vmatprep.subr.mxu0 0.0
        %915 = vmatpush1.xpose.msra.mxu0 0.0
        %916 = vmatprep.subr.mxu0 0.0
        %917 = vmatpush1.xpose.msra.mxu0 0.0
        %918 = vmatprep.subr.mxu0 0.0
        %919 = vmatpush1.xpose.msra.mxu0 0.0
        %920 = vmatprep.subr.mxu0 0.0
        %921 = vmatpush1.xpose.msra.mxu0 0.0
        %922 = vmatprep.subr.mxu0 0.0
        %923 = vmatpush1.xpose.msra.mxu0 0.0
        %924 = vmatprep.subr.mxu0 0.0
        %925 = vmatpush1.xpose.msra.mxu0 0.0
        %926 = vmatprep.subr.mxu0 0.0
        %927 = vmatpush1.xpose.msra.mxu0 0.0
        %928 = vmatprep.subr.mxu0 0.0
        %929 = vmatpush1.xpose.msra.mxu0 0.0
        %930 = vmatprep.subr.mxu0 0.0
        %931 = vmatpush1.xpose.msra.mxu0 0.0
        %932 = vmatprep.subr.mxu0 0.0
        %933 = vmatpush1.xpose.msra.mxu0 0.0
        %934 = vmatprep.subr.mxu0 0.0
        %935 = vmatpush1.xpose.msra.mxu0 0.0
        %936 = vmatprep.subr.mxu0 0.0
        %937 = vmatpush1.xpose.msra.mxu0 0.0
        %938 = vmatprep.subr.mxu0 0.0
        %939 = vmatpush1.xpose.msra.mxu0 0.0
        %940 = vmatprep.subr.mxu0 0.0
        %941 = vmatpush1.xpose.msra.mxu0 0.0
        %942 = vmatprep.subr.mxu0 0.0
        %943 = vmatpush1.xpose.msra.mxu0 0.0
        %944 = vmatprep.subr.mxu0 0.0
        %945 = vmatpush1.xpose.msra.mxu0 0.0
        %946 = vmatprep.subr.mxu0 0.0
        %947 = vmatpush1.xpose.msra.mxu0 0.0
        %948 = vmatprep.subr.mxu0 0.0
        %949 = vmatpush1.xpose.msra.mxu0 0.0
        %950 = vmatprep.subr.mxu0 0.0
        %951 = vmatpush1.xpose.msra.mxu0 0.0
        %952 = vmatprep.subr.mxu0 0.0
        %953 = vmatpush1.xpose.msra.mxu0 0.0
        %954 = vmatprep.mubr.f32.mxu0 0.0
        %955 = vmatmul.mubr.f32.gmra.mrb[0].mxu0 %v886
        %v956 = vpop.f32.mrb[0].mxu0
        %v957 = vadd.f32 0.0, %v956
        %v958 = vpop.f32.mrb[0].mxu0
        %959 = vdwg.mxu0
        %v960 = vsel %vm680, %v957, -inf
        %v961 = vrot.slane %v960, 4
        %v962 = vmax.f32 %v960, %v961
        %v963 = vrot.slane %v962, 2
        %v964 = vmax.f32 %v962, %v963
        %v965 = vrot.slane %v964, 1
        %v966 = vmax.f32 %v964, %v965
        %v967 = vsub.f32 %v957, %v966
        %v968 = vmul.f32 %v967, 1.442695
        %v969 = vpow.pop %v968
        %v970 = vsel %vm680, %v969, 0.0
        %v971 = vrot.slane %v970, 4
        %v972 = vadd.f32 %v970, %v971
        %v973 = vrot.slane %v972, 2
        %v974 = vadd.f32 %v972, %v973
        %v975 = vrot.slane %v974, 1
        %v976 = vadd.f32 %v974, %v975
        %v977 = vrcp.pop %v976
        %v978 = vmul.f32 %v969, %v977
        %979 = vxpose.xlu0.b32.start [1/16] %v978, 128
        %980 = vxpose.xlu0.b32.cont [2/16] 0.0, 128
        %981 = vxpose.xlu0.b32.cont [3/16] 0.0, 128
        %982 = vxpose.xlu0.b32.cont [4/16] 0.0, 128
        %983 = vxpose.xlu0.b32.cont [5/16] 0.0, 128
        %984 = vxpose.xlu0.b32.cont [6/16] 0.0, 128
        %985 = vxpose.xlu0.b32.cont [7/16] 0.0, 128
        %986 = vxpose.xlu0.b32.cont [8/16] 0.0, 128
        %987 = vxpose.xlu0.b32.cont [9/16] 0.0, 128
        %988 = vxpose.xlu0.b32.cont [10/16] 0.0, 128
        %989 = vxpose.xlu0.b32.cont [11/16] 0.0, 128
        %990 = vxpose.xlu0.b32.cont [12/16] 0.0, 128
        %991 = vxpose.xlu0.b32.cont [13/16] 0.0, 128
        %992 = vxpose.xlu0.b32.cont [14/16] 0.0, 128
        %993 = vxpose.xlu0.b32.cont [15/16] 0.0, 128
        %994 = vxpose.xlu0.b32.end [16/16] 0.0, 128
        %v995 = vpop.trf.xlu0
        %v996 = vpop.trf.xlu0
        %v997 = vpop.trf.xlu0
        %v998 = vpop.trf.xlu0
        %v999 = vpop.trf.xlu0
        %v1000 = vpop.trf.xlu0
        %v1001 = vpop.trf.xlu0
        %v1002 = vpop.trf.xlu0
        %v1003 = vpop.trf.xlu0
        %v1004 = vpop.trf.xlu0
        %v1005 = vpop.trf.xlu0
        %v1006 = vpop.trf.xlu0
        %v1007 = vpop.trf.xlu0
        %v1008 = vpop.trf.xlu0
        %v1009 = vpop.trf.xlu0
        %v1010 = vpop.trf.xlu0
        %1012 = vrot.lane.b32.xlu0 %v679, 120
        %v1013 = vpop.permute.xlu0 %1012
        %v1016 = vsel %vm680, %v995, 0
        %1018 = vmatprep.subr.mxu0 0.0
        %1019 = vmatpush1.msra.mxu0 %v1013
        %1020 = vmatprep.subr.mxu0 0.0
        %1021 = vmatpush1.msra.mxu0 0.0
        %1022 = vmatprep.subr.mxu0 0.0
        %1023 = vmatpush1.msra.mxu0 0.0
        %1024 = vmatprep.subr.mxu0 0.0
        %1025 = vmatpush1.msra.mxu0 0.0
        %1026 = vmatprep.subr.mxu0 0.0
        %1027 = vmatpush1.msra.mxu0 0.0
        %1028 = vmatprep.subr.mxu0 0.0
        %1029 = vmatpush1.msra.mxu0 0.0
        %1030 = vmatprep.subr.mxu0 0.0
        %1031 = vmatpush1.msra.mxu0 0.0
        %1032 = vmatprep.subr.mxu0 0.0
        %1033 = vmatpush1.msra.mxu0 0.0
        %1034 = vmatprep.subr.mxu0 0.0
        %1035 = vmatpush1.msra.mxu0 0.0
        %1036 = vmatprep.subr.mxu0 0.0
        %1037 = vmatpush1.msra.mxu0 0.0
        %1038 = vmatprep.subr.mxu0 0.0
        %1039 = vmatpush1.msra.mxu0 0.0
        %1040 = vmatprep.subr.mxu0 0.0
        %1041 = vmatpush1.msra.mxu0 0.0
        %1042 = vmatprep.subr.mxu0 0.0
        %1043 = vmatpush1.msra.mxu0 0.0
        %1044 = vmatprep.subr.mxu0 0.0
        %1045 = vmatpush1.msra.mxu0 0.0
        %1046 = vmatprep.subr.mxu0 0.0
        %1047 = vmatpush1.msra.mxu0 0.0
        %1048 = vmatprep.subr.mxu0 0.0
        %1049 = vmatpush1.msra.mxu0 0.0
        %1050 = vmatprep.subr.mxu0 0.0
        %1051 = vmatpush1.msra.mxu0 0.0
        %1052 = vmatprep.subr.mxu0 0.0
        %1053 = vmatpush1.msra.mxu0 0.0
        %1054 = vmatprep.subr.mxu0 0.0
        %1055 = vmatpush1.msra.mxu0 0.0
        %1056 = vmatprep.subr.mxu0 0.0
        %1057 = vmatpush1.msra.mxu0 0.0
        %1058 = vmatprep.subr.mxu0 0.0
        %1059 = vmatpush1.msra.mxu0 0.0
        %1060 = vmatprep.subr.mxu0 0.0
        %1061 = vmatpush1.msra.mxu0 0.0
        %1062 = vmatprep.subr.mxu0 0.0
        %1063 = vmatpush1.msra.mxu0 0.0
        %1064 = vmatprep.subr.mxu0 0.0
        %1065 = vmatpush1.msra.mxu0 0.0
        %1066 = vmatprep.subr.mxu0 0.0
        %1067 = vmatpush1.msra.mxu0 0.0
        %1068 = vmatprep.subr.mxu0 0.0
        %1069 = vmatpush1.msra.mxu0 0.0
        %1070 = vmatprep.subr.mxu0 0.0
        %1071 = vmatpush1.msra.mxu0 0.0
        %1072 = vmatprep.subr.mxu0 0.0
        %1073 = vmatpush1.msra.mxu0 0.0
        %1074 = vmatprep.subr.mxu0 0.0
        %1075 = vmatpush1.msra.mxu0 0.0
        %1076 = vmatprep.subr.mxu0 0.0
        %1077 = vmatpush1.msra.mxu0 0.0
        %1078 = vmatprep.subr.mxu0 0.0
        %1079 = vmatpush1.msra.mxu0 0.0
        %1080 = vmatprep.subr.mxu0 0.0
        %1081 = vmatpush1.msra.mxu0 0.0
        %1082 = vmatprep.mubr.f32.mxu0 0.0
        %1083 = vmatmul.mubr.f32.gmra.mrb[0].mxu0 %v1016
        %v1084 = vpop.f32.mrb[0].mxu0
        %v1085 = vadd.f32 0.0, %v1084
        %v1086 = vpop.f32.mrb[0].mxu0
        %1087 = vdwg.mxu0
        %v1088 = vld [vmem:[#allocation13 + $0x8] sm:$0xff]
        %v1090 = vsel %vm680, %v1085, 0
        %1092 = vmatprep.subr.mxu0 0.0
        %1093 = vmatpush1.msra.mxu0 %v1088
        %1094 = vmatprep.subr.mxu0 0.0
        %1095 = vmatpush1.msra.mxu0 0.0
        %1096 = vmatprep.subr.mxu0 0.0
        %1097 = vmatpush1.msra.mxu0 0.0
        %1098 = vmatprep.subr.mxu0 0.0
        %1099 = vmatpush1.msra.mxu0 0.0
        %1100 = vmatprep.subr.mxu0 0.0
        %1101 = vmatpush1.msra.mxu0 0.0
        %1102 = vmatprep.subr.mxu0 0.0
        %1103 = vmatpush1.msra.mxu0 0.0
        %1104 = vmatprep.subr.mxu0 0.0
        %1105 = vmatpush1.msra.mxu0 0.0
        %1106 = vmatprep.subr.mxu0 0.0
        %1107 = vmatpush1.msra.mxu0 0.0
        %1108 = vmatprep.subr.mxu0 0.0
        %1109 = vmatpush1.msra.mxu0 0.0
        %1110 = vmatprep.subr.mxu0 0.0
        %1111 = vmatpush1.msra.mxu0 0.0
        %1112 = vmatprep.subr.mxu0 0.0
        %1113 = vmatpush1.msra.mxu0 0.0
        %1114 = vmatprep.subr.mxu0 0.0
        %1115 = vmatpush1.msra.mxu0 0.0
        %1116 = vmatprep.subr.mxu0 0.0
        %1117 = vmatpush1.msra.mxu0 0.0
        %1118 = vmatprep.subr.mxu0 0.0
        %1119 = vmatpush1.msra.mxu0 0.0
        %1120 = vmatprep.subr.mxu0 0.0
        %1121 = vmatpush1.msra.mxu0 0.0
        %1122 = vmatprep.subr.mxu0 0.0
        %1123 = vmatpush1.msra.mxu0 0.0
        %1124 = vmatprep.subr.mxu0 0.0
        %1125 = vmatpush1.msra.mxu0 0.0
        %1126 = vmatprep.subr.mxu0 0.0
        %1127 = vmatpush1.msra.mxu0 0.0
        %1128 = vmatprep.subr.mxu0 0.0
        %1129 = vmatpush1.msra.mxu0 0.0
        %1130 = vmatprep.subr.mxu0 0.0
        %1131 = vmatpush1.msra.mxu0 0.0
        %1132 = vmatprep.subr.mxu0 0.0
        %1133 = vmatpush1.msra.mxu0 0.0
        %1134 = vmatprep.subr.mxu0 0.0
        %1135 = vmatpush1.msra.mxu0 0.0
        %1136 = vmatprep.subr.mxu0 0.0
        %1137 = vmatpush1.msra.mxu0 0.0
        %1138 = vmatprep.subr.mxu0 0.0
        %1139 = vmatpush1.msra.mxu0 0.0
        %1140 = vmatprep.subr.mxu0 0.0
        %1141 = vmatpush1.msra.mxu0 0.0
        %1142 = vmatprep.subr.mxu0 0.0
        %1143 = vmatpush1.msra.mxu0 0.0
        %1144 = vmatprep.subr.mxu0 0.0
        %1145 = vmatpush1.msra.mxu0 0.0
        %1146 = vmatprep.subr.mxu0 0.0
        %1147 = vmatpush1.msra.mxu0 0.0
        %1148 = vmatprep.subr.mxu0 0.0
        %1149 = vmatpush1.msra.mxu0 0.0
        %1150 = vmatprep.subr.mxu0 0.0
        %1151 = vmatpush1.msra.mxu0 0.0
        %1152 = vmatprep.subr.mxu0 0.0
        %1153 = vmatpush1.msra.mxu0 0.0
        %1154 = vmatprep.subr.mxu0 0.0
        %1155 = vmatpush1.msra.mxu0 0.0
        %1156 = vmatprep.mubr.f32.mxu0 0.0
        %1157 = vmatmul.mubr.f32.gmra.mrb[0].mxu0 %v1090
        %v1158 = vpop.f32.mrb[0].mxu0
        %v1159 = vadd.f32 0.0, %v1158
        %v1160 = vpop.f32.mrb[0].mxu0
        %1161 = vdwg.mxu0
        %v1163 = vsel %vm680, %v878, 0
        %1165 = vmatprep.subr.mxu0 0.0
        %1166 = vmatpush1.msra.mxu0 %v881
        %1167 = vmatprep.subr.mxu0 0.0
        %1168 = vmatpush1.msra.mxu0 0.0
        %1169 = vmatprep.subr.mxu0 0.0
        %1170 = vmatpush1.msra.mxu0 0.0
        %1171 = vmatprep.subr.mxu0 0.0
        %1172 = vmatpush1.msra.mxu0 0.0
        %1173 = vmatprep.subr.mxu0 0.0
        %1174 = vmatpush1.msra.mxu0 0.0
        %1175 = vmatprep.subr.mxu0 0.0
        %1176 = vmatpush1.msra.mxu0 0.0
        %1177 = vmatprep.subr.mxu0 0.0
        %1178 = vmatpush1.msra.mxu0 0.0
        %1179 = vmatprep.subr.mxu0 0.0
        %1180 = vmatpush1.msra.mxu0 0.0
        %1181 = vmatprep.subr.mxu0 0.0
        %1182 = vmatpush1.msra.mxu0 0.0
        %1183 = vmatprep.subr.mxu0 0.0
        %1184 = vmatpush1.msra.mxu0 0.0
        %1185 = vmatprep.subr.mxu0 0.0
        %1186 = vmatpush1.msra.mxu0 0.0
        %1187 = vmatprep.subr.mxu0 0.0
        %1188 = vmatpush1.msra.mxu0 0.0
        %1189 = vmatprep.subr.mxu0 0.0
        %1190 = vmatpush1.msra.mxu0 0.0
        %1191 = vmatprep.subr.mxu0 0.0
        %1192 = vmatpush1.msra.mxu0 0.0
        %1193 = vmatprep.subr.mxu0 0.0
        %1194 = vmatpush1.msra.mxu0 0.0
        %1195 = vmatprep.subr.mxu0 0.0
        %1196 = vmatpush1.msra.mxu0 0.0
        %1197 = vmatprep.subr.mxu0 0.0
        %1198 = vmatpush1.msra.mxu0 0.0
        %1199 = vmatprep.subr.mxu0 0.0
        %1200 = vmatpush1.msra.mxu0 0.0
        %1201 = vmatprep.subr.mxu0 0.0
        %1202 = vmatpush1.msra.mxu0 0.0
        %1203 = vmatprep.subr.mxu0 0.0
        %1204 = vmatpush1.msra.mxu0 0.0
        %1205 = vmatprep.subr.mxu0 0.0
        %1206 = vmatpush1.msra.mxu0 0.0
        %1207 = vmatprep.subr.mxu0 0.0
        %1208 = vmatpush1.msra.mxu0 0.0
        %1209 = vmatprep.subr.mxu0 0.0
        %1210 = vmatpush1.msra.mxu0 0.0
        %1211 = vmatprep.subr.mxu0 0.0
        %1212 = vmatpush1.msra.mxu0 0.0
        %1213 = vmatprep.subr.mxu0 0.0
        %1214 = vmatpush1.msra.mxu0 0.0
        %1215 = vmatprep.subr.mxu0 0.0
        %1216 = vmatpush1.msra.mxu0 0.0
        %1217 = vmatprep.subr.mxu0 0.0
        %1218 = vmatpush1.msra.mxu0 0.0
        %1219 = vmatprep.subr.mxu0 0.0
        %1220 = vmatpush1.msra.mxu0 0.0
        %1221 = vmatprep.subr.mxu0 0.0
        %1222 = vmatpush1.msra.mxu0 0.0
        %1223 = vmatprep.subr.mxu0 0.0
        %1224 = vmatpush1.msra.mxu0 0.0
        %1225 = vmatprep.subr.mxu0 0.0
        %1226 = vmatpush1.msra.mxu0 0.0
        %1227 = vmatprep.subr.mxu0 0.0
        %1228 = vmatpush1.msra.mxu0 0.0
        %1229 = vmatprep.mubr.f32.mxu0 0.0
        %1230 = vmatmul.mubr.f32.gmra.mrb[0].mxu0 %v1163
        %v1231 = vpop.f32.mrb[0].mxu0
        %v1232 = vadd.f32 %v1159, %v1231
        %v1233 = vpop.f32.mrb[0].mxu0
        %1234 = vdwg.mxu0
        %1235 = vrot.lane.b32.xlu0 %v678, 112
        %v1236 = vpop.permute.xlu0 %1235
        %1237 = vrot.lane.b32.xlu0 %v675, 112
        %v1238 = vpop.permute.xlu0 %1237
        %v1239 = vsel %vm680, %v1236, 0
        %v1241 = vsel %vm680, %v1238, 0
        %1243 = vmatprep.subr.mxu0 0.0
        %1244 = vmatpush1.xpose.msra.mxu0 %v1241
        %1245 = vmatprep.subr.mxu0 0.0
        %1246 = vmatpush1.xpose.msra.mxu0 0.0
        %1247 = vmatprep.subr.mxu0 0.0
        %1248 = vmatpush1.xpose.msra.mxu0 0.0
        %1249 = vmatprep.subr.mxu0 0.0
        %1250 = vmatpush1.xpose.msra.mxu0 0.0
        %1251 = vmatprep.subr.mxu0 0.0
        %1252 = vmatpush1.xpose.msra.mxu0 0.0
        %1253 = vmatprep.subr.mxu0 0.0
        %1254 = vmatpush1.xpose.msra.mxu0 0.0
        %1255 = vmatprep.subr.mxu0 0.0
        %1256 = vmatpush1.xpose.msra.mxu0 0.0
        %1257 = vmatprep.subr.mxu0 0.0
        %1258 = vmatpush1.xpose.msra.mxu0 0.0
        %1259 = vmatprep.subr.mxu0 0.0
        %1260 = vmatpush1.xpose.msra.mxu0 0.0
        %1261 = vmatprep.subr.mxu0 0.0
        %1262 = vmatpush1.xpose.msra.mxu0 0.0
        %1263 = vmatprep.subr.mxu0 0.0
        %1264 = vmatpush1.xpose.msra.mxu0 0.0
        %1265 = vmatprep.subr.mxu0 0.0
        %1266 = vmatpush1.xpose.msra.mxu0 0.0
        %1267 = vmatprep.subr.mxu0 0.0
        %1268 = vmatpush1.xpose.msra.mxu0 0.0
        %1269 = vmatprep.subr.mxu0 0.0
        %1270 = vmatpush1.xpose.msra.mxu0 0.0
        %1271 = vmatprep.subr.mxu0 0.0
        %1272 = vmatpush1.xpose.msra.mxu0 0.0
        %1273 = vmatprep.subr.mxu0 0.0
        %1274 = vmatpush1.xpose.msra.mxu0 0.0
        %1275 = vmatprep.subr.mxu0 0.0
        %1276 = vmatpush1.xpose.msra.mxu0 0.0
        %1277 = vmatprep.subr.mxu0 0.0
        %1278 = vmatpush1.xpose.msra.mxu0 0.0
        %1279 = vmatprep.subr.mxu0 0.0
        %1280 = vmatpush1.xpose.msra.mxu0 0.0
        %1281 = vmatprep.subr.mxu0 0.0
        %1282 = vmatpush1.xpose.msra.mxu0 0.0
        %1283 = vmatprep.subr.mxu0 0.0
        %1284 = vmatpush1.xpose.msra.mxu0 0.0
        %1285 = vmatprep.subr.mxu0 0.0
        %1286 = vmatpush1.xpose.msra.mxu0 0.0
        %1287 = vmatprep.subr.mxu0 0.0
        %1288 = vmatpush1.xpose.msra.mxu0 0.0
        %1289 = vmatprep.subr.mxu0 0.0
        %1290 = vmatpush1.xpose.msra.mxu0 0.0
        %1291 = vmatprep.subr.mxu0 0.0
        %1292 = vmatpush1.xpose.msra.mxu0 0.0
        %1293 = vmatprep.subr.mxu0 0.0
        %1294 = vmatpush1.xpose.msra.mxu0 0.0
        %1295 = vmatprep.subr.mxu0 0.0
        %1296 = vmatpush1.xpose.msra.mxu0 0.0
        %1297 = vmatprep.subr.mxu0 0.0
        %1298 = vmatpush1.xpose.msra.mxu0 0.0
        %1299 = vmatprep.subr.mxu0 0.0
        %1300 = vmatpush1.xpose.msra.mxu0 0.0
        %1301 = vmatprep.subr.mxu0 0.0
        %1302 = vmatpush1.xpose.msra.mxu0 0.0
        %1303 = vmatprep.subr.mxu0 0.0
        %1304 = vmatpush1.xpose.msra.mxu0 0.0
        %1305 = vmatprep.subr.mxu0 0.0
        %1306 = vmatpush1.xpose.msra.mxu0 0.0
        %1307 = vmatprep.mubr.f32.mxu0 0.0
        %1308 = vmatmul.mubr.f32.gmra.mrb[0].mxu0 %v1239
        %v1309 = vpop.f32.mrb[0].mxu0
        %v1310 = vadd.f32 0.0, %v1309
        %v1311 = vpop.f32.mrb[0].mxu0
        %1312 = vdwg.mxu0
        %v1313 = vsel %vm680, %v1310, -inf
        %v1314 = vrot.slane %v1313, 4
        %v1315 = vmax.f32 %v1313, %v1314
        %v1316 = vrot.slane %v1315, 2
        %v1317 = vmax.f32 %v1315, %v1316
        %v1318 = vrot.slane %v1317, 1
        %v1319 = vmax.f32 %v1317, %v1318
        %v1320 = vsub.f32 %v1310, %v1319
        %v1321 = vmul.f32 %v1320, 1.442695
        %v1322 = vpow.pop %v1321
        %v1323 = vsel %vm680, %v1322, 0.0
        %v1324 = vrot.slane %v1323, 4
        %v1325 = vadd.f32 %v1323, %v1324
        %v1326 = vrot.slane %v1325, 2
        %v1327 = vadd.f32 %v1325, %v1326
        %v1328 = vrot.slane %v1327, 1
        %v1329 = vadd.f32 %v1327, %v1328
        %v1330 = vrcp.pop %v1329
        %v1331 = vmul.f32 %v1322, %v1330
        %1332 = vxpose.xlu0.b32.start [1/16] %v1331, 128
        %1333 = vxpose.xlu0.b32.cont [2/16] 0.0, 128
        %1334 = vxpose.xlu0.b32.cont [3/16] 0.0, 128
        %1335 = vxpose.xlu0.b32.cont [4/16] 0.0, 128
        %1336 = vxpose.xlu0.b32.cont [5/16] 0.0, 128
        %1337 = vxpose.xlu0.b32.cont [6/16] 0.0, 128
        %1338 = vxpose.xlu0.b32.cont [7/16] 0.0, 128
        %1339 = vxpose.xlu0.b32.cont [8/16] 0.0, 128
        %1340 = vxpose.xlu0.b32.cont [9/16] 0.0, 128
        %1341 = vxpose.xlu0.b32.cont [10/16] 0.0, 128
        %1342 = vxpose.xlu0.b32.cont [11/16] 0.0, 128
        %1343 = vxpose.xlu0.b32.cont [12/16] 0.0, 128
        %1344 = vxpose.xlu0.b32.cont [13/16] 0.0, 128
        %1345 = vxpose.xlu0.b32.cont [14/16] 0.0, 128
        %1346 = vxpose.xlu0.b32.cont [15/16] 0.0, 128
        %1347 = vxpose.xlu0.b32.end [16/16] 0.0, 128
        %v1348 = vpop.trf.xlu0
        %v1349 = vpop.trf.xlu0
        %v1350 = vpop.trf.xlu0
        %v1351 = vpop.trf.xlu0
        %v1352 = vpop.trf.xlu0
        %v1353 = vpop.trf.xlu0
        %v1354 = vpop.trf.xlu0
        %v1355 = vpop.trf.xlu0
        %v1356 = vpop.trf.xlu0
        %v1357 = vpop.trf.xlu0
        %v1358 = vpop.trf.xlu0
        %v1359 = vpop.trf.xlu0
        %v1360 = vpop.trf.xlu0
        %v1361 = vpop.trf.xlu0
        %v1362 = vpop.trf.xlu0
        %v1363 = vpop.trf.xlu0
        %1364 = vrot.lane.b32.xlu0 %v679, 112
        %v1365 = vpop.permute.xlu0 %1364
        %v1368 = vsel %vm680, %v1348, 0
        %1370 = vmatprep.subr.mxu0 0.0
        %1371 = vmatpush1.msra.mxu0 %v1365
        %1372 = vmatprep.subr.mxu0 0.0
        %1373 = vmatpush1.msra.mxu0 0.0
        %1374 = vmatprep.subr.mxu0 0.0
        %1375 = vmatpush1.msra.mxu0 0.0
        %1376 = vmatprep.subr.mxu0 0.0
        %1377 = vmatpush1.msra.mxu0 0.0
        %1378 = vmatprep.subr.mxu0 0.0
        %1379 = vmatpush1.msra.mxu0 0.0
        %1380 = vmatprep.subr.mxu0 0.0
        %1381 = vmatpush1.msra.mxu0 0.0
        %1382 = vmatprep.subr.mxu0 0.0
        %1383 = vmatpush1.msra.mxu0 0.0
        %1384 = vmatprep.subr.mxu0 0.0
        %1385 = vmatpush1.msra.mxu0 0.0
        %1386 = vmatprep.subr.mxu0 0.0
        %1387 = vmatpush1.msra.mxu0 0.0
        %1388 = vmatprep.subr.mxu0 0.0
        %1389 = vmatpush1.msra.mxu0 0.0
        %1390 = vmatprep.subr.mxu0 0.0
        %1391 = vmatpush1.msra.mxu0 0.0
        %1392 = vmatprep.subr.mxu0 0.0
        %1393 = vmatpush1.msra.mxu0 0.0
        %1394 = vmatprep.subr.mxu0 0.0
        %1395 = vmatpush1.msra.mxu0 0.0
        %1396 = vmatprep.subr.mxu0 0.0
        %1397 = vmatpush1.msra.mxu0 0.0
        %1398 = vmatprep.subr.mxu0 0.0
        %1399 = vmatpush1.msra.mxu0 0.0
        %1400 = vmatprep.subr.mxu0 0.0
        %1401 = vmatpush1.msra.mxu0 0.0
        %1402 = vmatprep.subr.mxu0 0.0
        %1403 = vmatpush1.msra.mxu0 0.0
        %1404 = vmatprep.subr.mxu0 0.0
        %1405 = vmatpush1.msra.mxu0 0.0
        %1406 = vmatprep.subr.mxu0 0.0
        %1407 = vmatpush1.msra.mxu0 0.0
        %1408 = vmatprep.subr.mxu0 0.0
        %1409 = vmatpush1.msra.mxu0 0.0
        %1410 = vmatprep.subr.mxu0 0.0
        %1411 = vmatpush1.msra.mxu0 0.0
        %1412 = vmatprep.subr.mxu0 0.0
        %1413 = vmatpush1.msra.mxu0 0.0
        %1414 = vmatprep.subr.mxu0 0.0
        %1415 = vmatpush1.msra.mxu0 0.0
        %1416 = vmatprep.subr.mxu0 0.0
        %1417 = vmatpush1.msra.mxu0 0.0
        %1418 = vmatprep.subr.mxu0 0.0
        %1419 = vmatpush1.msra.mxu0 0.0
        %1420 = vmatprep.subr.mxu0 0.0
        %1421 = vmatpush1.msra.mxu0 0.0
        %1422 = vmatprep.subr.mxu0 0.0
        %1423 = vmatpush1.msra.mxu0 0.0
        %1424 = vmatprep.subr.mxu0 0.0
        %1425 = vmatpush1.msra.mxu0 0.0
        %1426 = vmatprep.subr.mxu0 0.0
        %1427 = vmatpush1.msra.mxu0 0.0
        %1428 = vmatprep.subr.mxu0 0.0
        %1429 = vmatpush1.msra.mxu0 0.0
        %1430 = vmatprep.subr.mxu0 0.0
        %1431 = vmatpush1.msra.mxu0 0.0
        %1432 = vmatprep.subr.mxu0 0.0
        %1433 = vmatpush1.msra.mxu0 0.0
        %1434 = vmatprep.mubr.f32.mxu0 0.0
        %1435 = vmatmul.mubr.f32.gmra.mrb[0].mxu0 %v1368
        %v1436 = vpop.f32.mrb[0].mxu0
        %v1437 = vadd.f32 0.0, %v1436
        %v1438 = vpop.f32.mrb[0].mxu0
        %1439 = vdwg.mxu0
        %v1440 = vld [vmem:[#allocation13 + $0x10] sm:$0xff]
        %v1442 = vsel %vm680, %v1437, 0
        %1444 = vmatprep.subr.mxu0 0.0
        %1445 = vmatpush1.msra.mxu0 %v1440
        %1446 = vmatprep.subr.mxu0 0.0
        %1447 = vmatpush1.msra.mxu0 0.0
        %1448 = vmatprep.subr.mxu0 0.0
        %1449 = vmatpush1.msra.mxu0 0.0
        %1450 = vmatprep.subr.mxu0 0.0
        %1451 = vmatpush1.msra.mxu0 0.0
        %1452 = vmatprep.subr.mxu0 0.0
        %1453 = vmatpush1.msra.mxu0 0.0
        %1454 = vmatprep.subr.mxu0 0.0
        %1455 = vmatpush1.msra.mxu0 0.0
        %1456 = vmatprep.subr.mxu0 0.0
        %1457 = vmatpush1.msra.mxu0 0.0
        %1458 = vmatprep.subr.mxu0 0.0
        %1459 = vmatpush1.msra.mxu0 0.0
        %1460 = vmatprep.subr.mxu0 0.0
        %1461 = vmatpush1.msra.mxu0 0.0
        %1462 = vmatprep.subr.mxu0 0.0
        %1463 = vmatpush1.msra.mxu0 0.0
        %1464 = vmatprep.subr.mxu0 0.0
        %1465 = vmatpush1.msra.mxu0 0.0
        %1466 = vmatprep.subr.mxu0 0.0
        %1467 = vmatpush1.msra.mxu0 0.0
        %1468 = vmatprep.subr.mxu0 0.0
        %1469 = vmatpush1.msra.mxu0 0.0
        %1470 = vmatprep.subr.mxu0 0.0
        %1471 = vmatpush1.msra.mxu0 0.0
        %1472 = vmatprep.subr.mxu0 0.0
        %1473 = vmatpush1.msra.mxu0 0.0
        %1474 = vmatprep.subr.mxu0 0.0
        %1475 = vmatpush1.msra.mxu0 0.0
        %1476 = vmatprep.subr.mxu0 0.0
        %1477 = vmatpush1.msra.mxu0 0.0
        %1478 = vmatprep.subr.mxu0 0.0
        %1479 = vmatpush1.msra.mxu0 0.0
        %1480 = vmatprep.subr.mxu0 0.0
        %1481 = vmatpush1.msra.mxu0 0.0
        %1482 = vmatprep.subr.mxu0 0.0
        %1483 = vmatpush1.msra.mxu0 0.0
        %1484 = vmatprep.subr.mxu0 0.0
        %1485 = vmatpush1.msra.mxu0 0.0
        %1486 = vmatprep.subr.mxu0 0.0
        %1487 = vmatpush1.msra.mxu0 0.0
        %1488 = vmatprep.subr.mxu0 0.0
        %1489 = vmatpush1.msra.mxu0 0.0
        %1490 = vmatprep.subr.mxu0 0.0
        %1491 = vmatpush1.msra.mxu0 0.0
        %1492 = vmatprep.subr.mxu0 0.0
        %1493 = vmatpush1.msra.mxu0 0.0
        %1494 = vmatprep.subr.mxu0 0.0
        %1495 = vmatpush1.msra.mxu0 0.0
        %1496 = vmatprep.subr.mxu0 0.0
        %1497 = vmatpush1.msra.mxu0 0.0
        %1498 = vmatprep.subr.mxu0 0.0
        %1499 = vmatpush1.msra.mxu0 0.0
        %1500 = vmatprep.subr.mxu0 0.0
        %1501 = vmatpush1.msra.mxu0 0.0
        %1502 = vmatprep.subr.mxu0 0.0
        %1503 = vmatpush1.msra.mxu0 0.0
        %1504 = vmatprep.subr.mxu0 0.0
        %1505 = vmatpush1.msra.mxu0 0.0
        %1506 = vmatprep.subr.mxu0 0.0
        %1507 = vmatpush1.msra.mxu0 0.0
        %1508 = vmatprep.mubr.f32.mxu0 0.0
        %1509 = vmatmul.mubr.f32.gmra.mrb[0].mxu0 %v1442
        %v1510 = vpop.f32.mrb[0].mxu0
        %v1511 = vadd.f32 0.0, %v1510
        %v1512 = vpop.f32.mrb[0].mxu0
        %1513 = vdwg.mxu0
        %v1514 = vadd.f32 %v1232, %v1511
        %1515 = vrot.lane.b32.xlu0 %v678, 104
        %v1516 = vpop.permute.xlu0 %1515
        %1517 = vrot.lane.b32.xlu0 %v675, 104
        %v1518 = vpop.permute.xlu0 %1517
        %v1519 = vsel %vm680, %v1516, 0
        %v1521 = vsel %vm680, %v1518, 0
        %1523 = vmatprep.subr.mxu0 0.0
        %1524 = vmatpush1.xpose.msra.mxu0 %v1521
        %1525 = vmatprep.subr.mxu0 0.0
        %1526 = vmatpush1.xpose.msra.mxu0 0.0
        %1527 = vmatprep.subr.mxu0 0.0
        %1528 = vmatpush1.xpose.msra.mxu0 0.0
        %1529 = vmatprep.subr.mxu0 0.0
        %1530 = vmatpush1.xpose.msra.mxu0 0.0
        %1531 = vmatprep.subr.mxu0 0.0
        %1532 = vmatpush1.xpose.msra.mxu0 0.0
        %1533 = vmatprep.subr.mxu0 0.0
        %1534 = vmatpush1.xpose.msra.mxu0 0.0
        %1535 = vmatprep.subr.mxu0 0.0
        %1536 = vmatpush1.xpose.msra.mxu0 0.0
        %1537 = vmatprep.subr.mxu0 0.0
        %1538 = vmatpush1.xpose.msra.mxu0 0.0
        %1539 = vmatprep.subr.mxu0 0.0
        %1540 = vmatpush1.xpose.msra.mxu0 0.0
        %1541 = vmatprep.subr.mxu0 0.0
        %1542 = vmatpush1.xpose.msra.mxu0 0.0
        %1543 = vmatprep.subr.mxu0 0.0
        %1544 = vmatpush1.xpose.msra.mxu0 0.0
        %1545 = vmatprep.subr.mxu0 0.0
        %1546 = vmatpush1.xpose.msra.mxu0 0.0
        %1547 = vmatprep.subr.mxu0 0.0
        %1548 = vmatpush1.xpose.msra.mxu0 0.0
        %1549 = vmatprep.subr.mxu0 0.0
        %1550 = vmatpush1.xpose.msra.mxu0 0.0
        %1551 = vmatprep.subr.mxu0 0.0
        %1552 = vmatpush1.xpose.msra.mxu0 0.0
        %1553 = vmatprep.subr.mxu0 0.0
        %1554 = vmatpush1.xpose.msra.mxu0 0.0
        %1555 = vmatprep.subr.mxu0 0.0
        %1556 = vmatpush1.xpose.msra.mxu0 0.0
        %1557 = vmatprep.subr.mxu0 0.0
        %1558 = vmatpush1.xpose.msra.mxu0 0.0
        %1559 = vmatprep.subr.mxu0 0.0
        %1560 = vmatpush1.xpose.msra.mxu0 0.0
        %1561 = vmatprep.subr.mxu0 0.0
        %1562 = vmatpush1.xpose.msra.mxu0 0.0
        %1563 = vmatprep.subr.mxu0 0.0
        %1564 = vmatpush1.xpose.msra.mxu0 0.0
        %1565 = vmatprep.subr.mxu0 0.0
        %1566 = vmatpush1.xpose.msra.mxu0 0.0
        %1567 = vmatprep.subr.mxu0 0.0
        %1568 = vmatpush1.xpose.msra.mxu0 0.0
        %1569 = vmatprep.subr.mxu0 0.0
        %1570 = vmatpush1.xpose.msra.mxu0 0.0
        %1571 = vmatprep.subr.mxu0 0.0
        %1572 = vmatpush1.xpose.msra.mxu0 0.0
        %1573 = vmatprep.subr.mxu0 0.0
        %1574 = vmatpush1.xpose.msra.mxu0 0.0
        %1575 = vmatprep.subr.mxu0 0.0
        %1576 = vmatpush1.xpose.msra.mxu0 0.0
        %1577 = vmatprep.subr.mxu0 0.0
        %1578 = vmatpush1.xpose.msra.mxu0 0.0
        %1579 = vmatprep.subr.mxu0 0.0
        %1580 = vmatpush1.xpose.msra.mxu0 0.0
        %1581 = vmatprep.subr.mxu0 0.0
        %1582 = vmatpush1.xpose.msra.mxu0 0.0
        %1583 = vmatprep.subr.mxu0 0.0
        %1584 = vmatpush1.xpose.msra.mxu0 0.0
        %1585 = vmatprep.subr.mxu0 0.0
        %1586 = vmatpush1.xpose.msra.mxu0 0.0
        %1587 = vmatprep.mubr.f32.mxu0 0.0
        %1588 = vmatmul.mubr.f32.gmra.mrb[0].mxu0 %v1519
        %v1589 = vpop.f32.mrb[0].mxu0
        %v1590 = vadd.f32 0.0, %v1589
        %v1591 = vpop.f32.mrb[0].mxu0
        %1592 = vdwg.mxu0
        %v1593 = vsel %vm680, %v1590, -inf
        %v1594 = vrot.slane %v1593, 4
        %v1595 = vmax.f32 %v1593, %v1594
        %v1596 = vrot.slane %v1595, 2
        %v1597 = vmax.f32 %v1595, %v1596
        %v1598 = vrot.slane %v1597, 1
        %v1599 = vmax.f32 %v1597, %v1598
        %v1600 = vsub.f32 %v1590, %v1599
        %v1601 = vmul.f32 %v1600, 1.442695
        %v1602 = vpow.pop %v1601
        %v1603 = vsel %vm680, %v1602, 0.0
        %v1604 = vrot.slane %v1603, 4
        %v1605 = vadd.f32 %v1603, %v1604
        %v1606 = vrot.slane %v1605, 2
        %v1607 = vadd.f32 %v1605, %v1606
        %v1608 = vrot.slane %v1607, 1
        %v1609 = vadd.f32 %v1607, %v1608
        %v1610 = vrcp.pop %v1609
        %v1611 = vmul.f32 %v1602, %v1610
        %1612 = vxpose.xlu0.b32.start [1/16] %v1611, 128
        %1613 = vxpose.xlu0.b32.cont [2/16] 0.0, 128
        %1614 = vxpose.xlu0.b32.cont [3/16] 0.0, 128
        %1615 = vxpose.xlu0.b32.cont [4/16] 0.0, 128
        %1616 = vxpose.xlu0.b32.cont [5/16] 0.0, 128
        %1617 = vxpose.xlu0.b32.cont [6/16] 0.0, 128
        %1618 = vxpose.xlu0.b32.cont [7/16] 0.0, 128
        %1619 = vxpose.xlu0.b32.cont [8/16] 0.0, 128
        %1620 = vxpose.xlu0.b32.cont [9/16] 0.0, 128
        %1621 = vxpose.xlu0.b32.cont [10/16] 0.0, 128
        %1622 = vxpose.xlu0.b32.cont [11/16] 0.0, 128
        %1623 = vxpose.xlu0.b32.cont [12/16] 0.0, 128
        %1624 = vxpose.xlu0.b32.cont [13/16] 0.0, 128
        %1625 = vxpose.xlu0.b32.cont [14/16] 0.0, 128
        %1626 = vxpose.xlu0.b32.cont [15/16] 0.0, 128
        %1627 = vxpose.xlu0.b32.end [16/16] 0.0, 128
        %v1628 = vpop.trf.xlu0
        %v1629 = vpop.trf.xlu0
        %v1630 = vpop.trf.xlu0
        %v1631 = vpop.trf.xlu0
        %v1632 = vpop.trf.xlu0
        %v1633 = vpop.trf.xlu0
        %v1634 = vpop.trf.xlu0
        %v1635 = vpop.trf.xlu0
        %v1636 = vpop.trf.xlu0
        %v1637 = vpop.trf.xlu0
        %v1638 = vpop.trf.xlu0
        %v1639 = vpop.trf.xlu0
        %v1640 = vpop.trf.xlu0
        %v1641 = vpop.trf.xlu0
        %v1642 = vpop.trf.xlu0
        %v1643 = vpop.trf.xlu0
        %1644 = vrot.lane.b32.xlu0 %v679, 104
        %v1645 = vpop.permute.xlu0 %1644
        %v1648 = vsel %vm680, %v1628, 0
        %1650 = vmatprep.subr.mxu0 0.0
        %1651 = vmatpush1.msra.mxu0 %v1645
        %1652 = vmatprep.subr.mxu0 0.0
        %1653 = vmatpush1.msra.mxu0 0.0
        %1654 = vmatprep.subr.mxu0 0.0
        %1655 = vmatpush1.msra.mxu0 0.0
        %1656 = vmatprep.subr.mxu0 0.0
        %1657 = vmatpush1.msra.mxu0 0.0
        %1658 = vmatprep.subr.mxu0 0.0
        %1659 = vmatpush1.msra.mxu0 0.0
        %1660 = vmatprep.subr.mxu0 0.0
        %1661 = vmatpush1.msra.mxu0 0.0
        %1662 = vmatprep.subr.mxu0 0.0
        %1663 = vmatpush1.msra.mxu0 0.0
        %1664 = vmatprep.subr.mxu0 0.0
        %1665 = vmatpush1.msra.mxu0 0.0
        %1666 = vmatprep.subr.mxu0 0.0
        %1667 = vmatpush1.msra.mxu0 0.0
        %1668 = vmatprep.subr.mxu0 0.0
        %1669 = vmatpush1.msra.mxu0 0.0
        %1670 = vmatprep.subr.mxu0 0.0
        %1671 = vmatpush1.msra.mxu0 0.0
        %1672 = vmatprep.subr.mxu0 0.0
        %1673 = vmatpush1.msra.mxu0 0.0
        %1674 = vmatprep.subr.mxu0 0.0
        %1675 = vmatpush1.msra.mxu0 0.0
        %1676 = vmatprep.subr.mxu0 0.0
        %1677 = vmatpush1.msra.mxu0 0.0
        %1678 = vmatprep.subr.mxu0 0.0
        %1679 = vmatpush1.msra.mxu0 0.0
        %1680 = vmatprep.subr.mxu0 0.0
        %1681 = vmatpush1.msra.mxu0 0.0
        %1682 = vmatprep.subr.mxu0 0.0
        %1683 = vmatpush1.msra.mxu0 0.0
        %1684 = vmatprep.subr.mxu0 0.0
        %1685 = vmatpush1.msra.mxu0 0.0
        %1686 = vmatprep.subr.mxu0 0.0
        %1687 = vmatpush1.msra.mxu0 0.0
        %1688 = vmatprep.subr.mxu0 0.0
        %1689 = vmatpush1.msra.mxu0 0.0
        %1690 = vmatprep.subr.mxu0 0.0
        %1691 = vmatpush1.msra.mxu0 0.0
        %1692 = vmatprep.subr.mxu0 0.0
        %1693 = vmatpush1.msra.mxu0 0.0
        %1694 = vmatprep.subr.mxu0 0.0
        %1695 = vmatpush1.msra.mxu0 0.0
        %1696 = vmatprep.subr.mxu0 0.0
        %1697 = vmatpush1.msra.mxu0 0.0
        %1698 = vmatprep.subr.mxu0 0.0
        %1699 = vmatpush1.msra.mxu0 0.0
        %1700 = vmatprep.subr.mxu0 0.0
        %1701 = vmatpush1.msra.mxu0 0.0
        %1702 = vmatprep.subr.mxu0 0.0
        %1703 = vmatpush1.msra.mxu0 0.0
        %1704 = vmatprep.subr.mxu0 0.0
        %1705 = vmatpush1.msra.mxu0 0.0
        %1706 = vmatprep.subr.mxu0 0.0
        %1707 = vmatpush1.msra.mxu0 0.0
        %1708 = vmatprep.subr.mxu0 0.0
        %1709 = vmatpush1.msra.mxu0 0.0
        %1710 = vmatprep.subr.mxu0 0.0
        %1711 = vmatpush1.msra.mxu0 0.0
        %1712 = vmatprep.subr.mxu0 0.0
        %1713 = vmatpush1.msra.mxu0 0.0
        %1714 = vmatprep.mubr.f32.mxu0 0.0
        %1715 = vmatmul.mubr.f32.gmra.mrb[0].mxu0 %v1648
        %v1716 = vpop.f32.mrb[0].mxu0
        %v1717 = vadd.f32 0.0, %v1716
        %v1718 = vpop.f32.mrb[0].mxu0
        %1719 = vdwg.mxu0
        %v1720 = vld [vmem:[#allocation13 + $0x18] sm:$0xff]
        %v1722 = vsel %vm680, %v1717, 0
        %1724 = vmatprep.subr.mxu0 0.0
        %1725 = vmatpush1.msra.mxu0 %v1720
        %1726 = vmatprep.subr.mxu0 0.0
        %1727 = vmatpush1.msra.mxu0 0.0
        %1728 = vmatprep.subr.mxu0 0.0
        %1729 = vmatpush1.msra.mxu0 0.0
        %1730 = vmatprep.subr.mxu0 0.0
        %1731 = vmatpush1.msra.mxu0 0.0
        %1732 = vmatprep.subr.mxu0 0.0
        %1733 = vmatpush1.msra.mxu0 0.0
        %1734 = vmatprep.subr.mxu0 0.0
        %1735 = vmatpush1.msra.mxu0 0.0
        %1736 = vmatprep.subr.mxu0 0.0
        %1737 = vmatpush1.msra.mxu0 0.0
        %1738 = vmatprep.subr.mxu0 0.0
        %1739 = vmatpush1.msra.mxu0 0.0
        %1740 = vmatprep.subr.mxu0 0.0
        %1741 = vmatpush1.msra.mxu0 0.0
        %1742 = vmatprep.subr.mxu0 0.0
        %1743 = vmatpush1.msra.mxu0 0.0
        %1744 = vmatprep.subr.mxu0 0.0
        %1745 = vmatpush1.msra.mxu0 0.0
        %1746 = vmatprep.subr.mxu0 0.0
        %1747 = vmatpush1.msra.mxu0 0.0
        %1748 = vmatprep.subr.mxu0 0.0
        %1749 = vmatpush1.msra.mxu0 0.0
        %1750 = vmatprep.subr.mxu0 0.0
        %1751 = vmatpush1.msra.mxu0 0.0
        %1752 = vmatprep.subr.mxu0 0.0
        %1753 = vmatpush1.msra.mxu0 0.0
        %1754 = vmatprep.subr.mxu0 0.0
        %1755 = vmatpush1.msra.mxu0 0.0
        %1756 = vmatprep.subr.mxu0 0.0
        %1757 = vmatpush1.msra.mxu0 0.0
        %1758 = vmatprep.subr.mxu0 0.0
        %1759 = vmatpush1.msra.mxu0 0.0
        %1760 = vmatprep.subr.mxu0 0.0
        %1761 = vmatpush1.msra.mxu0 0.0
        %1762 = vmatprep.subr.mxu0 0.0
        %1763 = vmatpush1.msra.mxu0 0.0
        %1764 = vmatprep.subr.mxu0 0.0
        %1765 = vmatpush1.msra.mxu0 0.0
        %1766 = vmatprep.subr.mxu0 0.0
        %1767 = vmatpush1.msra.mxu0 0.0
        %1768 = vmatprep.subr.mxu0 0.0
        %1769 = vmatpush1.msra.mxu0 0.0
        %1770 = vmatprep.subr.mxu0 0.0
        %1771 = vmatpush1.msra.mxu0 0.0
        %1772 = vmatprep.subr.mxu0 0.0
        %1773 = vmatpush1.msra.mxu0 0.0
        %1774 = vmatprep.subr.mxu0 0.0
        %1775 = vmatpush1.msra.mxu0 0.0
        %1776 = vmatprep.subr.mxu0 0.0
        %1777 = vmatpush1.msra.mxu0 0.0
        %1778 = vmatprep.subr.mxu0 0.0
        %1779 = vmatpush1.msra.mxu0 0.0
        %1780 = vmatprep.subr.mxu0 0.0
        %1781 = vmatpush1.msra.mxu0 0.0
        %1782 = vmatprep.subr.mxu0 0.0
        %1783 = vmatpush1.msra.mxu0 0.0
        %1784 = vmatprep.subr.mxu0 0.0
        %1785 = vmatpush1.msra.mxu0 0.0
        %1786 = vmatprep.subr.mxu0 0.0
        %1787 = vmatpush1.msra.mxu0 0.0
        %1788 = vmatprep.mubr.f32.mxu0 0.0
        %1789 = vmatmul.mubr.f32.gmra.mrb[0].mxu0 %v1722
        %v1790 = vpop.f32.mrb[0].mxu0
        %v1791 = vadd.f32 0.0, %v1790
        %v1792 = vpop.f32.mrb[0].mxu0
        %1793 = vdwg.mxu0
        %v1794 = vadd.f32 %v1514, %v1791
        %v1795 = vld [vmem:[%s7] sm:$0x1]
        %v1797 = vlaneseq
        %v1798 = vshrl.u32 %v1797, 7
        %v1799 = vsub.s32 0, %v1798
        %v1800 = vrot.slane %v1795, %v1799
        %v1802 = vadd.f32 %v1794, %v1800
        %1803 = vst.msk [vmem:[%s432] sm:$0xff] %vm604, %v1802
        %s1804 = sand.u32 %s232, 1
        %s1805 = scalar_lea.sflag [#allocation6], %s1804
        %s1806 = sand.u32 %s232, 1
        %s1807 = smul.addr %s1806, 8
        %s1808 = scalar_lea.vmem [#allocation15], %s1807
        // Predicated region
        $region81: #{tpu_custom_call.1} parent=51 // pred_check
          %p1809 = pneg %p242
        $region82: #{tpu_custom_call.1} parent=51 // pred_check_branch
          %1811 = sbr.rel (%p1809) target = $region84
        $region83: #{tpu_custom_call.1} parent=51 // pred_region
          %s1813 = ssub.s32 128, 128
          %1814 = vsyncadd %s1805, %s1813
          %s1815 = sadd.s32 %s35, %s34
          %s1816 = smul.addr %s1815, 128
          %s1817 = scalar_lea.hbm %s8, %s1816
          %s1819 = sshll.u32 %s1808, 4
          %s1820 = int_to_ptr.vmem [resolvable:$true] %s1819
          %1822 = dma.vmem_to_hbm [thread:$0]  %s1820, 128, %s1817, %s1805
        $region84: #{tpu_custom_call.1} parent=51 // pred_fallthru
          _
      $region52: #{tpu_custom_call.1} parent=5 // pred_fallthru
        _
      %p1823 = scmp.le.s32.totalorder 2, %s25
      // Predicated region
      $region85: #{tpu_custom_call.1} parent=5 // pred_check
        %p1824 = pneg %p1823
      $region86: #{tpu_custom_call.1} parent=5 // pred_check_branch
        %1826 = sbr.rel (%p1824) target = $region88
      $region87: #{tpu_custom_call.1} parent=5 // pred_region
        %s1827 = ssub.s32 %s25, 2
        // Predicated region
        $region89: #{tpu_custom_call.1} parent=87 // pred_check
          %p1828 = pneg %p248
        $region90: #{tpu_custom_call.1} parent=87 // pred_check_branch
          %1830 = sbr.rel (%p1828) target = $region92
        $region91: #{tpu_custom_call.1} parent=87 // pred_region
          %s1831 = sand.u32 %s233, 1
          %s1832 = scalar_lea.sflag [#allocation6], %s1831
          %s1833 = sand.u32 %s233, 1
          %s1834 = smul.addr %s1833, 8
          %s1835 = scalar_lea.vmem [#allocation15], %s1834
          %1836 = dma.done %s1832, 128
        $region92: #{tpu_custom_call.1} parent=87 // pred_fallthru
          _
      $region88: #{tpu_custom_call.1} parent=5 // pred_fallthru
        _
    $region6: #{tpu_custom_call.1} parent=1 // loop_footer
      %s29 = sadd.s32 1, %s25
    $region7: #{tpu_custom_call.1} parent=1 // loop_footer_branch
      %24 = sbr.rel target = $region3
    $region8: #{tpu_custom_call.1} parent=1 // loop_exit
      _
    %1837 = vsyncpa [#allocation5], 1
    %s1838 = scalar_lea.sflag [#allocation5], 1
    %1839 = vsyncpa %s1838, 1
    %1840 = vsyncpa [#allocation8], 1
    %s1841 = scalar_lea.sflag [#allocation8], 1
    %1842 = vsyncpa %s1841, 1
    %1843 = vsyncpa [#allocation11], 1
    %1844 = vsyncpa [#allocation14], 1
    %1845 = vsyncpa [#allocation6], 1
    %s1846 = scalar_lea.sflag [#allocation6], 1
    %1847 = vsyncpa %s1846, 1

</llo_original>
